<compile_context>
chip_gen: v7x
topology: tpu7x:2x2x1
jax: 0.10.0
libtpu: 0.0.40
codegen_flags: <defaults>
</compile_context>

<pallas_src>
import jax
import jax.numpy as jnp
from jax.experimental import pallas as pl
from jax.experimental.pallas import tpu as pltpu


_VMEM_LIMIT = 48 * 1024 * 1024  # headroom for v7x's 64 MiB VMEM; fine on v5e/v6e


# ----------------------------------------------------------------------------
# Kernel 1: synthetic encoder+decoder (VPU FMAs, weights in SMEM) fused with
# the x-direction bilinear interpolation (lane-dense MXU matmul).
#   x_ref  : (C, tm, Wl)  tile of low-res pixels, channels leading
#   rxt_ref: (Wl, W)      pre-transposed interpolation matrix
#   o_ref  : (tm, W)      lane-dense output tile
# ----------------------------------------------------------------------------
def encdec_xinterp_kernel(x_ref, w1_ref, b1_ref, w2_ref, b2_ref, rxt_ref, o_ref):
    C, tm, Wl = x_ref.shape
    F = w1_ref.shape[1]

    x = x_ref[...]                                  # (C, tm, Wl)

    # decoder accumulator, starts at the output bias (scalar from SMEM)
    d = jnp.zeros((tm, Wl), jnp.float32) + b2_ref[0]

    # Two 1x1-conv layers as scalar-broadcast VPU FMAs (K=C, N=1 would leave
    # the MXU idle, so we skip it entirely for these tiny projections).
    for f in range(F):
        h = x[0] * w1_ref[0, f] + b1_ref[f]
        for c in range(1, C):
            h = h + x[c] * w1_ref[c, f]
        h = jnp.maximum(h, 0.0)                     # relu
        d = d + h * w2_ref[f]

    # stable softplus -> strictly positive synthetic "depth" (low-res)
    depth = jnp.log1p(jnp.exp(-jnp.abs(d))) + jnp.maximum(d, 0.0)

    # fused x-direction bilinear interpolation: (tm, Wl) @ (Wl, W) -> (tm, W)
    o_ref[...] = jnp.dot(depth, rxt_ref[...], preferred_element_type=jnp.float32)


def run_encdec_xinterp(x_cmw, w1, b1, w2, b2, rx_t, tm=512):
    C, M, Wl = x_cmw.shape
    W = rx_t.shape[1]
    tm = min(tm, M)
    grid = (pl.cdiv(M, tm),)
    return pl.pallas_call(
        encdec_xinterp_kernel,
        out_shape=jax.ShapeDtypeStruct((M, W), jnp.float32),
        grid=grid,
        in_specs=[
            pl.BlockSpec((C, tm, Wl), lambda i: (0, i, 0)),
            pl.BlockSpec(memory_space=pltpu.MemorySpace.SMEM),   # w1 (C, F)
            pl.BlockSpec(memory_space=pltpu.MemorySpace.SMEM),   # b1 (F,)
            pl.BlockSpec(memory_space=pltpu.MemorySpace.SMEM),   # w2 (F,)
            pl.BlockSpec(memory_space=pltpu.MemorySpace.SMEM),   # b2 (1,)
            pl.BlockSpec((Wl, W), lambda i: (0, 0)),             # rx^T in VMEM
        ],
        out_specs=pl.BlockSpec((tm, W), lambda i: (i, 0)),
        compiler_params=pltpu.CompilerParams(
            dimension_semantics=("parallel",),
            vmem_limit_bytes=_VMEM_LIMIT,
        ),
    )(x_cmw, w1, b1, w2, b2, rx_t)


# ----------------------------------------------------------------------------
# Kernel 2: y-direction bilinear interpolation + fused depth_to_disp epilogue.
#   ry_ref: (tH, Hl)   interpolation rows for this H tile
#   dx_ref: (Hl, W)    x-interpolated depth for this image
#   o_ref : (tH, W)    disparity tile
# ----------------------------------------------------------------------------
def yinterp_disp_kernel(ry_ref, dx_ref, o_ref):
    up = jnp.dot(ry_ref[...], dx_ref[...], preferred_element_type=jnp.float32)

    # depth_to_disp(depth, min_depth=0.1, max_depth=100) -- divides replaced by
    # precomputed multiplies; reciprocal goes to the EUP slot (approx=True).
    inv_scalar = 1.0 / 5.4
    min_depth = 0.1
    max_depth = 100.0
    min_disp = 1.0 / max_depth
    max_disp = 1.0 / min_depth
    inv_range = 1.0 / (max_disp - min_disp)

    clipped = jnp.clip(jnp.clip(up, 0.0, max_depth) * inv_scalar,
                       min_depth, max_depth)
    scaled_disp = pl.reciprocal(clipped, approx=True)
    o_ref[...] = (scaled_disp - min_disp) * inv_range


def run_yinterp_disp(ry, dx, tH=256):
    H, Hl = ry.shape
    N, _, W = dx.shape
    tH = min(tH, H)
    grid = (N, pl.cdiv(H, tH))
    return pl.pallas_call(
        yinterp_disp_kernel,
        out_shape=jax.ShapeDtypeStruct((N, H, W), jnp.float32),
        grid=grid,
        in_specs=[
            pl.BlockSpec((tH, Hl), lambda n, h: (h, 0)),
            pl.BlockSpec((None, Hl, W), lambda n, h: (n, 0, 0)),
        ],
        out_specs=pl.BlockSpec((None, tH, W), lambda n, h: (n, h, 0)),
        compiler_params=pltpu.CompilerParams(
            dimension_semantics=("parallel", "parallel"),
            vmem_limit_bytes=_VMEM_LIMIT,
        ),
    )(ry, dx)


# ----------------------------------------------------------------------------
# Host glue: layout shuffles + interpolation-matrix construction.
# ----------------------------------------------------------------------------
def interp_matrix(out_size, in_size):
    """Bilinear interpolation matrix, align_corners=True (exact in f32)."""
    if out_size == 1 or in_size == 1:
        # in_size == 1 -> all source coords are 0; out_size == 1 -> single row.
        src = jnp.zeros((out_size,), jnp.float32)
    else:
        src = jnp.arange(out_size, dtype=jnp.float32) * (in_size - 1) / (out_size - 1)
    i0 = jnp.clip(jnp.floor(src).astype(jnp.int32), 0, in_size - 1)
    i1 = jnp.clip(i0 + 1, 0, in_size - 1)
    w = src - i0.astype(jnp.float32)
    m = (jax.nn.one_hot(i0, in_size, dtype=jnp.float32) * (1.0 - w)[:, None]
         + jax.nn.one_hot(i1, in_size, dtype=jnp.float32) * w[:, None])
    return m


def sqldepth_forward(input_image, params):
    """input_image: (N, C, H, W) float32 (NCHW). Returns disparity (N, 1, H, W)."""
    w1, b1, w2, b2 = params
    N, C, H, W = input_image.shape

    # synthetic encoder spatial reduction: stride-2 downsample (NCHW kept)
    x_low = input_image[:, :, ::2, ::2]                       # (N, C, Hl, Wl)
    Hl, Wl = x_low.shape[2], x_low.shape[3]
    M = N * Hl

    # channels-leading, rows = N*Hl, lane axis = Wl
    x_cmw = jnp.transpose(x_low, (1, 0, 2, 3)).reshape(C, M, Wl).astype(jnp.float32)

    # host-built interpolation matrices; Rx pre-transposed -> (Wl, W)
    ry = interp_matrix(H, Hl)                                  # (H, Hl)
    rx_t = jnp.transpose(interp_matrix(W, Wl))                 # (Wl, W)

    # kernel 1: encoder+decoder + x-direction interp -> (N*Hl, W) lane-dense
    dx = run_encdec_xinterp(x_cmw, w1, b1, w2, b2, rx_t)
    dx = dx.reshape(N, Hl, W)

    # kernel 2: y-direction interp + depth_to_disp -> (N, H, W)
    disp = run_yinterp_disp(ry, dx)

    return disp[:, None, :, :]                                 # (N, 1, H, W)


if __name__ == "__main__":
    key = jax.random.PRNGKey(0)
    k_img, k_w1, k_b1, k_w2, k_b2 = jax.random.split(key, 5)

    N, C, H, W = 2, 4, 16, 16
    FEAT = 32

    input_image = jax.random.uniform(k_img, (N, C, H, W), jnp.float32)

    # deterministic synthetic encoder/decoder parameters
    w1 = jax.random.normal(k_w1, (C, FEAT), jnp.float32) * 0.5
    b1 = jax.random.normal(k_b1, (FEAT,), jnp.float32) * 0.1
    w2 = jax.random.normal(k_w2, (FEAT,), jnp.float32) * 0.5
    b2 = jax.random.normal(k_b2, (1,), jnp.float32) * 0.1
    params = (w1, b1, w2, b2)

    disp = jax.block_until_ready(sqldepth_forward(input_image, params))

    assert disp.shape == (N, 1, H, W), disp.shape
    assert bool(jnp.all(jnp.isfinite(disp)))
    assert bool(jnp.all(disp >= 0.0)) and bool(jnp.all(disp <= 1.0))
    print("KERNEL_OK")
</pallas_src>

<mosaic_0001>
module attributes {stable_mosaic.version = 11 : i64} {
  func.func @encdec_xinterp_kernel(%arg0: i32, %arg1: memref<4x16x8xf32, #tpu.memory_space<vmem>>, %arg2: memref<4x32xf32, #tpu.memory_space<smem>>, %arg3: memref<32xf32, #tpu.memory_space<smem>>, %arg4: memref<32xf32, #tpu.memory_space<smem>>, %arg5: memref<1xf32, #tpu.memory_space<smem>>, %arg6: memref<8x16xf32, #tpu.memory_space<vmem>>, %arg7: memref<16x16xf32, #tpu.memory_space<vmem>>) attributes {dimension_semantics = [#tpu.dimension_semantics<parallel>], iteration_bounds = array<i64: 1>, scalar_prefetch = 0 : i64, scratch_operands = 0 : i64, tpu.core_type = #tpu.core_type<tc>, window_params = [{transform_indices = @transform_0, window_bounds = array<i64: 4, 16, 8>}, {transform_indices = @transform_1, window_bounds = array<i64: 4, 32>}, {transform_indices = @transform_2, window_bounds = array<i64: 32>}, {transform_indices = @transform_3, window_bounds = array<i64: 32>}, {transform_indices = @transform_4, window_bounds = array<i64: 1>}, {pipeline_mode = #tpu.pipeline_mode<synchronous>, transform_indices = @transform_5, window_bounds = array<i64: 8, 16>}, {transform_indices = @transform_6, window_bounds = array<i64: 16, 16>}]} {
    %c0 = arith.constant 0 : index
    %c0_0 = arith.constant 0 : index
    %c0_1 = arith.constant 0 : index
    %0 = vector.load %arg1[%c0, %c0_0, %c0_1] : memref<4x16x8xf32, #tpu.memory_space<vmem>>, vector<4x16x8xf32>
    %cst = arith.constant 0.000000e+00 : f32
    %1 = vector.broadcast %cst : f32 to vector<16x8xf32>
    %c0_2 = arith.constant 0 : index
    %2 = memref.load %arg5[%c0_2] : memref<1xf32, #tpu.memory_space<smem>>
    %3 = vector.broadcast %2 : f32 to vector<16x8xf32>
    %4 = arith.addf %1, %3 : vector<16x8xf32>
    %5 = vector.extract_strided_slice %0 {offsets = [0, 0, 0], sizes = [1, 16, 8], strides = [1, 1, 1]} : vector<4x16x8xf32> to vector<1x16x8xf32>
    %6 = vector.shape_cast %5 : vector<1x16x8xf32> to vector<16x8xf32>
    %c0_3 = arith.constant 0 : index
    %c0_4 = arith.constant 0 : index
    %7 = memref.load %arg2[%c0_3, %c0_4] : memref<4x32xf32, #tpu.memory_space<smem>>
    %8 = vector.broadcast %7 : f32 to vector<16x8xf32>
    %9 = arith.mulf %6, %8 : vector<16x8xf32>
    %c0_5 = arith.constant 0 : index
    %10 = memref.load %arg3[%c0_5] : memref<32xf32, #tpu.memory_space<smem>>
    %11 = vector.broadcast %10 : f32 to vector<16x8xf32>
    %12 = arith.addf %9, %11 : vector<16x8xf32>
    %13 = vector.extract_strided_slice %0 {offsets = [1, 0, 0], sizes = [1, 16, 8], strides = [1, 1, 1]} : vector<4x16x8xf32> to vector<1x16x8xf32>
    %14 = vector.shape_cast %13 : vector<1x16x8xf32> to vector<16x8xf32>
    %c1 = arith.constant 1 : index
    %c0_6 = arith.constant 0 : index
    %15 = memref.load %arg2[%c1, %c0_6] : memref<4x32xf32, #tpu.memory_space<smem>>
    %16 = vector.broadcast %15 : f32 to vector<16x8xf32>
    %17 = arith.mulf %14, %16 : vector<16x8xf32>
    %18 = arith.addf %12, %17 : vector<16x8xf32>
    %19 = vector.extract_strided_slice %0 {offsets = [2, 0, 0], sizes = [1, 16, 8], strides = [1, 1, 1]} : vector<4x16x8xf32> to vector<1x16x8xf32>
    %20 = vector.shape_cast %19 : vector<1x16x8xf32> to vector<16x8xf32>
    %c2 = arith.constant 2 : index
    %c0_7 = arith.constant 0 : index
    %21 = memref.load %arg2[%c2, %c0_7] : memref<4x32xf32, #tpu.memory_space<smem>>
    %22 = vector.broadcast %21 : f32 to vector<16x8xf32>
    %23 = arith.mulf %20, %22 : vector<16x8xf32>
    %24 = arith.addf %18, %23 : vector<16x8xf32>
    %25 = vector.extract_strided_slice %0 {offsets = [3, 0, 0], sizes = [1, 16, 8], strides = [1, 1, 1]} : vector<4x16x8xf32> to vector<1x16x8xf32>
    %26 = vector.shape_cast %25 : vector<1x16x8xf32> to vector<16x8xf32>
    %c3 = arith.constant 3 : index
    %c0_8 = arith.constant 0 : index
    %27 = memref.load %arg2[%c3, %c0_8] : memref<4x32xf32, #tpu.memory_space<smem>>
    %28 = vector.broadcast %27 : f32 to vector<16x8xf32>
    %29 = arith.mulf %26, %28 : vector<16x8xf32>
    %30 = arith.addf %24, %29 : vector<16x8xf32>
    %cst_9 = arith.constant 0.000000e+00 : f32
    %31 = vector.broadcast %cst_9 : f32 to vector<16x8xf32>
    %32 = arith.maximumf %30, %31 : vector<16x8xf32>
    %c0_10 = arith.constant 0 : index
    %33 = memref.load %arg4[%c0_10] : memref<32xf32, #tpu.memory_space<smem>>
    %34 = vector.broadcast %33 : f32 to vector<16x8xf32>
    %35 = arith.mulf %32, %34 : vector<16x8xf32>
    %36 = arith.addf %4, %35 : vector<16x8xf32>
    %37 = vector.extract_strided_slice %0 {offsets = [0, 0, 0], sizes = [1, 16, 8], strides = [1, 1, 1]} : vector<4x16x8xf32> to vector<1x16x8xf32>
    %38 = vector.shape_cast %37 : vector<1x16x8xf32> to vector<16x8xf32>
    %c0_11 = arith.constant 0 : index
    %c1_12 = arith.constant 1 : index
    %39 = memref.load %arg2[%c0_11, %c1_12] : memref<4x32xf32, #tpu.memory_space<smem>>
    %40 = vector.broadcast %39 : f32 to vector<16x8xf32>
    %41 = arith.mulf %38, %40 : vector<16x8xf32>
    %c1_13 = arith.constant 1 : index
    %42 = memref.load %arg3[%c1_13] : memref<32xf32, #tpu.memory_space<smem>>
    %43 = vector.broadcast %42 : f32 to vector<16x8xf32>
    %44 = arith.addf %41, %43 : vector<16x8xf32>
    %45 = vector.extract_strided_slice %0 {offsets = [1, 0, 0], sizes = [1, 16, 8], strides = [1, 1, 1]} : vector<4x16x8xf32> to vector<1x16x8xf32>
    %46 = vector.shape_cast %45 : vector<1x16x8xf32> to vector<16x8xf32>
    %c1_14 = arith.constant 1 : index
    %c1_15 = arith.constant 1 : index
    %47 = memref.load %arg2[%c1_14, %c1_15] : memref<4x32xf32, #tpu.memory_space<smem>>
    %48 = vector.broadcast %47 : f32 to vector<16x8xf32>
    %49 = arith.mulf %46, %48 : vector<16x8xf32>
    %50 = arith.addf %44, %49 : vector<16x8xf32>
    %51 = vector.extract_strided_slice %0 {offsets = [2, 0, 0], sizes = [1, 16, 8], strides = [1, 1, 1]} : vector<4x16x8xf32> to vector<1x16x8xf32>
    %52 = vector.shape_cast %51 : vector<1x16x8xf32> to vector<16x8xf32>
    %c2_16 = arith.constant 2 : index
    %c1_17 = arith.constant 1 : index
    %53 = memref.load %arg2[%c2_16, %c1_17] : memref<4x32xf32, #tpu.memory_space<smem>>
    %54 = vector.broadcast %53 : f32 to vector<16x8xf32>
    %55 = arith.mulf %52, %54 : vector<16x8xf32>
    %56 = arith.addf %50, %55 : vector<16x8xf32>
    %57 = vector.extract_strided_slice %0 {offsets = [3, 0, 0], sizes = [1, 16, 8], strides = [1, 1, 1]} : vector<4x16x8xf32> to vector<1x16x8xf32>
    %58 = vector.shape_cast %57 : vector<1x16x8xf32> to vector<16x8xf32>
    %c3_18 = arith.constant 3 : index
    %c1_19 = arith.constant 1 : index
    %59 = memref.load %arg2[%c3_18, %c1_19] : memref<4x32xf32, #tpu.memory_space<smem>>
    %60 = vector.broadcast %59 : f32 to vector<16x8xf32>
    %61 = arith.mulf %58, %60 : vector<16x8xf32>
    %62 = arith.addf %56, %61 : vector<16x8xf32>
    %cst_20 = arith.constant 0.000000e+00 : f32
    %63 = vector.broadcast %cst_20 : f32 to vector<16x8xf32>
    %64 = arith.maximumf %62, %63 : vector<16x8xf32>
    %c1_21 = arith.constant 1 : index
    %65 = memref.load %arg4[%c1_21] : memref<32xf32, #tpu.memory_space<smem>>
    %66 = vector.broadcast %65 : f32 to vector<16x8xf32>
    %67 = arith.mulf %64, %66 : vector<16x8xf32>
    %68 = arith.addf %36, %67 : vector<16x8xf32>
    %69 = vector.extract_strided_slice %0 {offsets = [0, 0, 0], sizes = [1, 16, 8], strides = [1, 1, 1]} : vector<4x16x8xf32> to vector<1x16x8xf32>
    %70 = vector.shape_cast %69 : vector<1x16x8xf32> to vector<16x8xf32>
    %c0_22 = arith.constant 0 : index
    %c2_23 = arith.constant 2 : index
    %71 = memref.load %arg2[%c0_22, %c2_23] : memref<4x32xf32, #tpu.memory_space<smem>>
    %72 = vector.broadcast %71 : f32 to vector<16x8xf32>
    %73 = arith.mulf %70, %72 : vector<16x8xf32>
    %c2_24 = arith.constant 2 : index
    %74 = memref.load %arg3[%c2_24] : memref<32xf32, #tpu.memory_space<smem>>
    %75 = vector.broadcast %74 : f32 to vector<16x8xf32>
    %76 = arith.addf %73, %75 : vector<16x8xf32>
    %77 = vector.extract_strided_slice %0 {offsets = [1, 0, 0], sizes = [1, 16, 8], strides = [1, 1, 1]} : vector<4x16x8xf32> to vector<1x16x8xf32>
    %78 = vector.shape_cast %77 : vector<1x16x8xf32> to vector<16x8xf32>
    %c1_25 = arith.constant 1 : index
    %c2_26 = arith.constant 2 : index
    %79 = memref.load %arg2[%c1_25, %c2_26] : memref<4x32xf32, #tpu.memory_space<smem>>
    %80 = vector.broadcast %79 : f32 to vector<16x8xf32>
    %81 = arith.mulf %78, %80 : vector<16x8xf32>
    %82 = arith.addf %76, %81 : vector<16x8xf32>
    %83 = vector.extract_strided_slice %0 {offsets = [2, 0, 0], sizes = [1, 16, 8], strides = [1, 1, 1]} : vector<4x16x8xf32> to vector<1x16x8xf32>
    %84 = vector.shape_cast %83 : vector<1x16x8xf32> to vector<16x8xf32>
    %c2_27 = arith.constant 2 : index
    %c2_28 = arith.constant 2 : index
    %85 = memref.load %arg2[%c2_27, %c2_28] : memref<4x32xf32, #tpu.memory_space<smem>>
    %86 = vector.broadcast %85 : f32 to vector<16x8xf32>
    %87 = arith.mulf %84, %86 : vector<16x8xf32>
    %88 = arith.addf %82, %87 : vector<16x8xf32>
    %89 = vector.extract_strided_slice %0 {offsets = [3, 0, 0], sizes = [1, 16, 8], strides = [1, 1, 1]} : vector<4x16x8xf32> to vector<1x16x8xf32>
    %90 = vector.shape_cast %89 : vector<1x16x8xf32> to vector<16x8xf32>
    %c3_29 = arith.constant 3 : index
    %c2_30 = arith.constant 2 : index
    %91 = memref.load %arg2[%c3_29, %c2_30] : memref<4x32xf32, #tpu.memory_space<smem>>
    %92 = vector.broadcast %91 : f32 to vector<16x8xf32>
    %93 = arith.mulf %90, %92 : vector<16x8xf32>
    %94 = arith.addf %88, %93 : vector<16x8xf32>
    %cst_31 = arith.constant 0.000000e+00 : f32
    %95 = vector.broadcast %cst_31 : f32 to vector<16x8xf32>
    %96 = arith.maximumf %94, %95 : vector<16x8xf32>
    %c2_32 = arith.constant 2 : index
    %97 = memref.load %arg4[%c2_32] : memref<32xf32, #tpu.memory_space<smem>>
    %98 = vector.broadcast %97 : f32 to vector<16x8xf32>
    %99 = arith.mulf %96, %98 : vector<16x8xf32>
    %100 = arith.addf %68, %99 : vector<16x8xf32>
    %101 = vector.extract_strided_slice %0 {offsets = [0, 0, 0], sizes = [1, 16, 8], strides = [1, 1, 1]} : vector<4x16x8xf32> to vector<1x16x8xf32>
    %102 = vector.shape_cast %101 : vector<1x16x8xf32> to vector<16x8xf32>
    %c0_33 = arith.constant 0 : index
    %c3_34 = arith.constant 3 : index
    %103 = memref.load %arg2[%c0_33, %c3_34] : memref<4x32xf32, #tpu.memory_space<smem>>
    %104 = vector.broadcast %103 : f32 to vector<16x8xf32>
    %105 = arith.mulf %102, %104 : vector<16x8xf32>
    %c3_35 = arith.constant 3 : index
    %106 = memref.load %arg3[%c3_35] : memref<32xf32, #tpu.memory_space<smem>>
    %107 = vector.broadcast %106 : f32 to vector<16x8xf32>
    %108 = arith.addf %105, %107 : vector<16x8xf32>
    %109 = vector.extract_strided_slice %0 {offsets = [1, 0, 0], sizes = [1, 16, 8], strides = [1, 1, 1]} : vector<4x16x8xf32> to vector<1x16x8xf32>
    %110 = vector.shape_cast %109 : vector<1x16x8xf32> to vector<16x8xf32>
    %c1_36 = arith.constant 1 : index
    %c3_37 = arith.constant 3 : index
    %111 = memref.load %arg2[%c1_36, %c3_37] : memref<4x32xf32, #tpu.memory_space<smem>>
    %112 = vector.broadcast %111 : f32 to vector<16x8xf32>
    %113 = arith.mulf %110, %112 : vector<16x8xf32>
    %114 = arith.addf %108, %113 : vector<16x8xf32>
    %115 = vector.extract_strided_slice %0 {offsets = [2, 0, 0], sizes = [1, 16, 8], strides = [1, 1, 1]} : vector<4x16x8xf32> to vector<1x16x8xf32>
    %116 = vector.shape_cast %115 : vector<1x16x8xf32> to vector<16x8xf32>
    %c2_38 = arith.constant 2 : index
    %c3_39 = arith.constant 3 : index
    %117 = memref.load %arg2[%c2_38, %c3_39] : memref<4x32xf32, #tpu.memory_space<smem>>
    %118 = vector.broadcast %117 : f32 to vector<16x8xf32>
    %119 = arith.mulf %116, %118 : vector<16x8xf32>
    %120 = arith.addf %114, %119 : vector<16x8xf32>
    %121 = vector.extract_strided_slice %0 {offsets = [3, 0, 0], sizes = [1, 16, 8], strides = [1, 1, 1]} : vector<4x16x8xf32> to vector<1x16x8xf32>
    %122 = vector.shape_cast %121 : vector<1x16x8xf32> to vector<16x8xf32>
    %c3_40 = arith.constant 3 : index
    %c3_41 = arith.constant 3 : index
    %123 = memref.load %arg2[%c3_40, %c3_41] : memref<4x32xf32, #tpu.memory_space<smem>>
    %124 = vector.broadcast %123 : f32 to vector<16x8xf32>
    %125 = arith.mulf %122, %124 : vector<16x8xf32>
    %126 = arith.addf %120, %125 : vector<16x8xf32>
    %cst_42 = arith.constant 0.000000e+00 : f32
    %127 = vector.broadcast %cst_42 : f32 to vector<16x8xf32>
    %128 = arith.maximumf %126, %127 : vector<16x8xf32>
    %c3_43 = arith.constant 3 : index
    %129 = memref.load %arg4[%c3_43] : memref<32xf32, #tpu.memory_space<smem>>
    %130 = vector.broadcast %129 : f32 to vector<16x8xf32>
    %131 = arith.mulf %128, %130 : vector<16x8xf32>
    %132 = arith.addf %100, %131 : vector<16x8xf32>
    %133 = vector.extract_strided_slice %0 {offsets = [0, 0, 0], sizes = [1, 16, 8], strides = [1, 1, 1]} : vector<4x16x8xf32> to vector<1x16x8xf32>
    %134 = vector.shape_cast %133 : vector<1x16x8xf32> to vector<16x8xf32>
    %c0_44 = arith.constant 0 : index
    %c4 = arith.constant 4 : index
    %135 = memref.load %arg2[%c0_44, %c4] : memref<4x32xf32, #tpu.memory_space<smem>>
    %136 = vector.broadcast %135 : f32 to vector<16x8xf32>
    %137 = arith.mulf %134, %136 : vector<16x8xf32>
    %c4_45 = arith.constant 4 : index
    %138 = memref.load %arg3[%c4_45] : memref<32xf32, #tpu.memory_space<smem>>
    %139 = vector.broadcast %138 : f32 to vector<16x8xf32>
    %140 = arith.addf %137, %139 : vector<16x8xf32>
    %141 = vector.extract_strided_slice %0 {offsets = [1, 0, 0], sizes = [1, 16, 8], strides = [1, 1, 1]} : vector<4x16x8xf32> to vector<1x16x8xf32>
    %142 = vector.shape_cast %141 : vector<1x16x8xf32> to vector<16x8xf32>
    %c1_46 = arith.constant 1 : index
    %c4_47 = arith.constant 4 : index
    %143 = memref.load %arg2[%c1_46, %c4_47] : memref<4x32xf32, #tpu.memory_space<smem>>
    %144 = vector.broadcast %143 : f32 to vector<16x8xf32>
    %145 = arith.mulf %142, %144 : vector<16x8xf32>
    %146 = arith.addf %140, %145 : vector<16x8xf32>
    %147 = vector.extract_strided_slice %0 {offsets = [2, 0, 0], sizes = [1, 16, 8], strides = [1, 1, 1]} : vector<4x16x8xf32> to vector<1x16x8xf32>
    %148 = vector.shape_cast %147 : vector<1x16x8xf32> to vector<16x8xf32>
    %c2_48 = arith.constant 2 : index
    %c4_49 = arith.constant 4 : index
    %149 = memref.load %arg2[%c2_48, %c4_49] : memref<4x32xf32, #tpu.memory_space<smem>>
    %150 = vector.broadcast %149 : f32 to vector<16x8xf32>
    %151 = arith.mulf %148, %150 : vector<16x8xf32>
    %152 = arith.addf %146, %151 : vector<16x8xf32>
    %153 = vector.extract_strided_slice %0 {offsets = [3, 0, 0], sizes = [1, 16, 8], strides = [1, 1, 1]} : vector<4x16x8xf32> to vector<1x16x8xf32>
    %154 = vector.shape_cast %153 : vector<1x16x8xf32> to vector<16x8xf32>
    %c3_50 = arith.constant 3 : index
    %c4_51 = arith.constant 4 : index
    %155 = memref.load %arg2[%c3_50, %c4_51] : memref<4x32xf32, #tpu.memory_space<smem>>
    %156 = vector.broadcast %155 : f32 to vector<16x8xf32>
    %157 = arith.mulf %154, %156 : vector<16x8xf32>
    %158 = arith.addf %152, %157 : vector<16x8xf32>
    %cst_52 = arith.constant 0.000000e+00 : f32
    %159 = vector.broadcast %cst_52 : f32 to vector<16x8xf32>
    %160 = arith.maximumf %158, %159 : vector<16x8xf32>
    %c4_53 = arith.constant 4 : index
    %161 = memref.load %arg4[%c4_53] : memref<32xf32, #tpu.memory_space<smem>>
    %162 = vector.broadcast %161 : f32 to vector<16x8xf32>
    %163 = arith.mulf %160, %162 : vector<16x8xf32>
    %164 = arith.addf %132, %163 : vector<16x8xf32>
    %165 = vector.extract_strided_slice %0 {offsets = [0, 0, 0], sizes = [1, 16, 8], strides = [1, 1, 1]} : vector<4x16x8xf32> to vector<1x16x8xf32>
    %166 = vector.shape_cast %165 : vector<1x16x8xf32> to vector<16x8xf32>
    %c0_54 = arith.constant 0 : index
    %c5 = arith.constant 5 : index
    %167 = memref.load %arg2[%c0_54, %c5] : memref<4x32xf32, #tpu.memory_space<smem>>
    %168 = vector.broadcast %167 : f32 to vector<16x8xf32>
    %169 = arith.mulf %166, %168 : vector<16x8xf32>
    %c5_55 = arith.constant 5 : index
    %170 = memref.load %arg3[%c5_55] : memref<32xf32, #tpu.memory_space<smem>>
    %171 = vector.broadcast %170 : f32 to vector<16x8xf32>
    %172 = arith.addf %169, %171 : vector<16x8xf32>
    %173 = vector.extract_strided_slice %0 {offsets = [1, 0, 0], sizes = [1, 16, 8], strides = [1, 1, 1]} : vector<4x16x8xf32> to vector<1x16x8xf32>
    %174 = vector.shape_cast %173 : vector<1x16x8xf32> to vector<16x8xf32>
    %c1_56 = arith.constant 1 : index
    %c5_57 = arith.constant 5 : index
    %175 = memref.load %arg2[%c1_56, %c5_57] : memref<4x32xf32, #tpu.memory_space<smem>>
    %176 = vector.broadcast %175 : f32 to vector<16x8xf32>
    %177 = arith.mulf %174, %176 : vector<16x8xf32>
    %178 = arith.addf %172, %177 : vector<16x8xf32>
    %179 = vector.extract_strided_slice %0 {offsets = [2, 0, 0], sizes = [1, 16, 8], strides = [1, 1, 1]} : vector<4x16x8xf32> to vector<1x16x8xf32>
    %180 = vector.shape_cast %179 : vector<1x16x8xf32> to vector<16x8xf32>
    %c2_58 = arith.constant 2 : index
    %c5_59 = arith.constant 5 : index
    %181 = memref.load %arg2[%c2_58, %c5_59] : memref<4x32xf32, #tpu.memory_space<smem>>
    %182 = vector.broadcast %181 : f32 to vector<16x8xf32>
    %183 = arith.mulf %180, %182 : vector<16x8xf32>
    %184 = arith.addf %178, %183 : vector<16x8xf32>
    %185 = vector.extract_strided_slice %0 {offsets = [3, 0, 0], sizes = [1, 16, 8], strides = [1, 1, 1]} : vector<4x16x8xf32> to vector<1x16x8xf32>
    %186 = vector.shape_cast %185 : vector<1x16x8xf32> to vector<16x8xf32>
    %c3_60 = arith.constant 3 : index
    %c5_61 = arith.constant 5 : index
    %187 = memref.load %arg2[%c3_60, %c5_61] : memref<4x32xf32, #tpu.memory_space<smem>>
    %188 = vector.broadcast %187 : f32 to vector<16x8xf32>
    %189 = arith.mulf %186, %188 : vector<16x8xf32>
    %190 = arith.addf %184, %189 : vector<16x8xf32>
    %cst_62 = arith.constant 0.000000e+00 : f32
    %191 = vector.broadcast %cst_62 : f32 to vector<16x8xf32>
    %192 = arith.maximumf %190, %191 : vector<16x8xf32>
    %c5_63 = arith.constant 5 : index
    %193 = memref.load %arg4[%c5_63] : memref<32xf32, #tpu.memory_space<smem>>
    %194 = vector.broadcast %193 : f32 to vector<16x8xf32>
    %195 = arith.mulf %192, %194 : vector<16x8xf32>
    %196 = arith.addf %164, %195 : vector<16x8xf32>
    %197 = vector.extract_strided_slice %0 {offsets = [0, 0, 0], sizes = [1, 16, 8], strides = [1, 1, 1]} : vector<4x16x8xf32> to vector<1x16x8xf32>
    %198 = vector.shape_cast %197 : vector<1x16x8xf32> to vector<16x8xf32>
    %c0_64 = arith.constant 0 : index
    %c6 = arith.constant 6 : index
    %199 = memref.load %arg2[%c0_64, %c6] : memref<4x32xf32, #tpu.memory_space<smem>>
    %200 = vector.broadcast %199 : f32 to vector<16x8xf32>
    %201 = arith.mulf %198, %200 : vector<16x8xf32>
    %c6_65 = arith.constant 6 : index
    %202 = memref.load %arg3[%c6_65] : memref<32xf32, #tpu.memory_space<smem>>
    %203 = vector.broadcast %202 : f32 to vector<16x8xf32>
    %204 = arith.addf %201, %203 : vector<16x8xf32>
    %205 = vector.extract_strided_slice %0 {offsets = [1, 0, 0], sizes = [1, 16, 8], strides = [1, 1, 1]} : vector<4x16x8xf32> to vector<1x16x8xf32>
    %206 = vector.shape_cast %205 : vector<1x16x8xf32> to vector<16x8xf32>
    %c1_66 = arith.constant 1 : index
    %c6_67 = arith.constant 6 : index
    %207 = memref.load %arg2[%c1_66, %c6_67] : memref<4x32xf32, #tpu.memory_space<smem>>
    %208 = vector.broadcast %207 : f32 to vector<16x8xf32>
    %209 = arith.mulf %206, %208 : vector<16x8xf32>
    %210 = arith.addf %204, %209 : vector<16x8xf32>
    %211 = vector.extract_strided_slice %0 {offsets = [2, 0, 0], sizes = [1, 16, 8], strides = [1, 1, 1]} : vector<4x16x8xf32> to vector<1x16x8xf32>
    %212 = vector.shape_cast %211 : vector<1x16x8xf32> to vector<16x8xf32>
    %c2_68 = arith.constant 2 : index
    %c6_69 = arith.constant 6 : index
    %213 = memref.load %arg2[%c2_68, %c6_69] : memref<4x32xf32, #tpu.memory_space<smem>>
    %214 = vector.broadcast %213 : f32 to vector<16x8xf32>
    %215 = arith.mulf %212, %214 : vector<16x8xf32>
    %216 = arith.addf %210, %215 : vector<16x8xf32>
    %217 = vector.extract_strided_slice %0 {offsets = [3, 0, 0], sizes = [1, 16, 8], strides = [1, 1, 1]} : vector<4x16x8xf32> to vector<1x16x8xf32>
    %218 = vector.shape_cast %217 : vector<1x16x8xf32> to vector<16x8xf32>
    %c3_70 = arith.constant 3 : index
    %c6_71 = arith.constant 6 : index
    %219 = memref.load %arg2[%c3_70, %c6_71] : memref<4x32xf32, #tpu.memory_space<smem>>
    %220 = vector.broadcast %219 : f32 to vector<16x8xf32>
    %221 = arith.mulf %218, %220 : vector<16x8xf32>
    %222 = arith.addf %216, %221 : vector<16x8xf32>
    %cst_72 = arith.constant 0.000000e+00 : f32
    %223 = vector.broadcast %cst_72 : f32 to vector<16x8xf32>
    %224 = arith.maximumf %222, %223 : vector<16x8xf32>
    %c6_73 = arith.constant 6 : index
    %225 = memref.load %arg4[%c6_73] : memref<32xf32, #tpu.memory_space<smem>>
    %226 = vector.broadcast %225 : f32 to vector<16x8xf32>
    %227 = arith.mulf %224, %226 : vector<16x8xf32>
    %228 = arith.addf %196, %227 : vector<16x8xf32>
    %229 = vector.extract_strided_slice %0 {offsets = [0, 0, 0], sizes = [1, 16, 8], strides = [1, 1, 1]} : vector<4x16x8xf32> to vector<1x16x8xf32>
    %230 = vector.shape_cast %229 : vector<1x16x8xf32> to vector<16x8xf32>
    %c0_74 = arith.constant 0 : index
    %c7 = arith.constant 7 : index
    %231 = memref.load %arg2[%c0_74, %c7] : memref<4x32xf32, #tpu.memory_space<smem>>
    %232 = vector.broadcast %231 : f32 to vector<16x8xf32>
    %233 = arith.mulf %230, %232 : vector<16x8xf32>
    %c7_75 = arith.constant 7 : index
    %234 = memref.load %arg3[%c7_75] : memref<32xf32, #tpu.memory_space<smem>>
    %235 = vector.broadcast %234 : f32 to vector<16x8xf32>
    %236 = arith.addf %233, %235 : vector<16x8xf32>
    %237 = vector.extract_strided_slice %0 {offsets = [1, 0, 0], sizes = [1, 16, 8], strides = [1, 1, 1]} : vector<4x16x8xf32> to vector<1x16x8xf32>
    %238 = vector.shape_cast %237 : vector<1x16x8xf32> to vector<16x8xf32>
    %c1_76 = arith.constant 1 : index
    %c7_77 = arith.constant 7 : index
    %239 = memref.load %arg2[%c1_76, %c7_77] : memref<4x32xf32, #tpu.memory_space<smem>>
    %240 = vector.broadcast %239 : f32 to vector<16x8xf32>
    %241 = arith.mulf %238, %240 : vector<16x8xf32>
    %242 = arith.addf %236, %241 : vector<16x8xf32>
    %243 = vector.extract_strided_slice %0 {offsets = [2, 0, 0], sizes = [1, 16, 8], strides = [1, 1, 1]} : vector<4x16x8xf32> to vector<1x16x8xf32>
    %244 = vector.shape_cast %243 : vector<1x16x8xf32> to vector<16x8xf32>
    %c2_78 = arith.constant 2 : index
    %c7_79 = arith.constant 7 : index
    %245 = memref.load %arg2[%c2_78, %c7_79] : memref<4x32xf32, #tpu.memory_space<smem>>
    %246 = vector.broadcast %245 : f32 to vector<16x8xf32>
    %247 = arith.mulf %244, %246 : vector<16x8xf32>
    %248 = arith.addf %242, %247 : vector<16x8xf32>
    %249 = vector.extract_strided_slice %0 {offsets = [3, 0, 0], sizes = [1, 16, 8], strides = [1, 1, 1]} : vector<4x16x8xf32> to vector<1x16x8xf32>
    %250 = vector.shape_cast %249 : vector<1x16x8xf32> to vector<16x8xf32>
    %c3_80 = arith.constant 3 : index
    %c7_81 = arith.constant 7 : index
    %251 = memref.load %arg2[%c3_80, %c7_81] : memref<4x32xf32, #tpu.memory_space<smem>>
    %252 = vector.broadcast %251 : f32 to vector<16x8xf32>
    %253 = arith.mulf %250, %252 : vector<16x8xf32>
    %254 = arith.addf %248, %253 : vector<16x8xf32>
    %cst_82 = arith.constant 0.000000e+00 : f32
    %255 = vector.broadcast %cst_82 : f32 to vector<16x8xf32>
    %256 = arith.maximumf %254, %255 : vector<16x8xf32>
    %c7_83 = arith.constant 7 : index
    %257 = memref.load %arg4[%c7_83] : memref<32xf32, #tpu.memory_space<smem>>
    %258 = vector.broadcast %257 : f32 to vector<16x8xf32>
    %259 = arith.mulf %256, %258 : vector<16x8xf32>
    %260 = arith.addf %228, %259 : vector<16x8xf32>
    %261 = vector.extract_strided_slice %0 {offsets = [0, 0, 0], sizes = [1, 16, 8], strides = [1, 1, 1]} : vector<4x16x8xf32> to vector<1x16x8xf32>
    %262 = vector.shape_cast %261 : vector<1x16x8xf32> to vector<16x8xf32>
    %c0_84 = arith.constant 0 : index
    %c8 = arith.constant 8 : index
    %263 = memref.load %arg2[%c0_84, %c8] : memref<4x32xf32, #tpu.memory_space<smem>>
    %264 = vector.broadcast %263 : f32 to vector<16x8xf32>
    %265 = arith.mulf %262, %264 : vector<16x8xf32>
    %c8_85 = arith.constant 8 : index
    %266 = memref.load %arg3[%c8_85] : memref<32xf32, #tpu.memory_space<smem>>
    %267 = vector.broadcast %266 : f32 to vector<16x8xf32>
    %268 = arith.addf %265, %267 : vector<16x8xf32>
    %269 = vector.extract_strided_slice %0 {offsets = [1, 0, 0], sizes = [1, 16, 8], strides = [1, 1, 1]} : vector<4x16x8xf32> to vector<1x16x8xf32>
    %270 = vector.shape_cast %269 : vector<1x16x8xf32> to vector<16x8xf32>
    %c1_86 = arith.constant 1 : index
    %c8_87 = arith.constant 8 : index
    %271 = memref.load %arg2[%c1_86, %c8_87] : memref<4x32xf32, #tpu.memory_space<smem>>
    %272 = vector.broadcast %271 : f32 to vector<16x8xf32>
    %273 = arith.mulf %270, %272 : vector<16x8xf32>
    %274 = arith.addf %268, %273 : vector<16x8xf32>
    %275 = vector.extract_strided_slice %0 {offsets = [2, 0, 0], sizes = [1, 16, 8], strides = [1, 1, 1]} : vector<4x16x8xf32> to vector<1x16x8xf32>
    %276 = vector.shape_cast %275 : vector<1x16x8xf32> to vector<16x8xf32>
    %c2_88 = arith.constant 2 : index
    %c8_89 = arith.constant 8 : index
    %277 = memref.load %arg2[%c2_88, %c8_89] : memref<4x32xf32, #tpu.memory_space<smem>>
    %278 = vector.broadcast %277 : f32 to vector<16x8xf32>
    %279 = arith.mulf %276, %278 : vector<16x8xf32>
    %280 = arith.addf %274, %279 : vector<16x8xf32>
    %281 = vector.extract_strided_slice %0 {offsets = [3, 0, 0], sizes = [1, 16, 8], strides = [1, 1, 1]} : vector<4x16x8xf32> to vector<1x16x8xf32>
    %282 = vector.shape_cast %281 : vector<1x16x8xf32> to vector<16x8xf32>
    %c3_90 = arith.constant 3 : index
    %c8_91 = arith.constant 8 : index
    %283 = memref.load %arg2[%c3_90, %c8_91] : memref<4x32xf32, #tpu.memory_space<smem>>
    %284 = vector.broadcast %283 : f32 to vector<16x8xf32>
    %285 = arith.mulf %282, %284 : vector<16x8xf32>
    %286 = arith.addf %280, %285 : vector<16x8xf32>
    %cst_92 = arith.constant 0.000000e+00 : f32
    %287 = vector.broadcast %cst_92 : f32 to vector<16x8xf32>
    %288 = arith.maximumf %286, %287 : vector<16x8xf32>
    %c8_93 = arith.constant 8 : index
    %289 = memref.load %arg4[%c8_93] : memref<32xf32, #tpu.memory_space<smem>>
    %290 = vector.broadcast %289 : f32 to vector<16x8xf32>
    %291 = arith.mulf %288, %290 : vector<16x8xf32>
    %292 = arith.addf %260, %291 : vector<16x8xf32>
    %293 = vector.extract_strided_slice %0 {offsets = [0, 0, 0], sizes = [1, 16, 8], strides = [1, 1, 1]} : vector<4x16x8xf32> to vector<1x16x8xf32>
    %294 = vector.shape_cast %293 : vector<1x16x8xf32> to vector<16x8xf32>
    %c0_94 = arith.constant 0 : index
    %c9 = arith.constant 9 : index
    %295 = memref.load %arg2[%c0_94, %c9] : memref<4x32xf32, #tpu.memory_space<smem>>
    %296 = vector.broadcast %295 : f32 to vector<16x8xf32>
    %297 = arith.mulf %294, %296 : vector<16x8xf32>
    %c9_95 = arith.constant 9 : index
    %298 = memref.load %arg3[%c9_95] : memref<32xf32, #tpu.memory_space<smem>>
    %299 = vector.broadcast %298 : f32 to vector<16x8xf32>
    %300 = arith.addf %297, %299 : vector<16x8xf32>
    %301 = vector.extract_strided_slice %0 {offsets = [1, 0, 0], sizes = [1, 16, 8], strides = [1, 1, 1]} : vector<4x16x8xf32> to vector<1x16x8xf32>
    %302 = vector.shape_cast %301 : vector<1x16x8xf32> to vector<16x8xf32>
    %c1_96 = arith.constant 1 : index
    %c9_97 = arith.constant 9 : index
    %303 = memref.load %arg2[%c1_96, %c9_97] : memref<4x32xf32, #tpu.memory_space<smem>>
    %304 = vector.broadcast %303 : f32 to vector<16x8xf32>
    %305 = arith.mulf %302, %304 : vector<16x8xf32>
    %306 = arith.addf %300, %305 : vector<16x8xf32>
    %307 = vector.extract_strided_slice %0 {offsets = [2, 0, 0], sizes = [1, 16, 8], strides = [1, 1, 1]} : vector<4x16x8xf32> to vector<1x16x8xf32>
    %308 = vector.shape_cast %307 : vector<1x16x8xf32> to vector<16x8xf32>
    %c2_98 = arith.constant 2 : index
    %c9_99 = arith.constant 9 : index
    %309 = memref.load %arg2[%c2_98, %c9_99] : memref<4x32xf32, #tpu.memory_space<smem>>
    %310 = vector.broadcast %309 : f32 to vector<16x8xf32>
    %311 = arith.mulf %308, %310 : vector<16x8xf32>
    %312 = arith.addf %306, %311 : vector<16x8xf32>
    %313 = vector.extract_strided_slice %0 {offsets = [3, 0, 0], sizes = [1, 16, 8], strides = [1, 1, 1]} : vector<4x16x8xf32> to vector<1x16x8xf32>
    %314 = vector.shape_cast %313 : vector<1x16x8xf32> to vector<16x8xf32>
    %c3_100 = arith.constant 3 : index
    %c9_101 = arith.constant 9 : index
    %315 = memref.load %arg2[%c3_100, %c9_101] : memref<4x32xf32, #tpu.memory_space<smem>>
    %316 = vector.broadcast %315 : f32 to vector<16x8xf32>
    %317 = arith.mulf %314, %316 : vector<16x8xf32>
    %318 = arith.addf %312, %317 : vector<16x8xf32>
    %cst_102 = arith.constant 0.000000e+00 : f32
    %319 = vector.broadcast %cst_102 : f32 to vector<16x8xf32>
    %320 = arith.maximumf %318, %319 : vector<16x8xf32>
    %c9_103 = arith.constant 9 : index
    %321 = memref.load %arg4[%c9_103] : memref<32xf32, #tpu.memory_space<smem>>
    %322 = vector.broadcast %321 : f32 to vector<16x8xf32>
    %323 = arith.mulf %320, %322 : vector<16x8xf32>
    %324 = arith.addf %292, %323 : vector<16x8xf32>
    %325 = vector.extract_strided_slice %0 {offsets = [0, 0, 0], sizes = [1, 16, 8], strides = [1, 1, 1]} : vector<4x16x8xf32> to vector<1x16x8xf32>
    %326 = vector.shape_cast %325 : vector<1x16x8xf32> to vector<16x8xf32>
    %c0_104 = arith.constant 0 : index
    %c10 = arith.constant 10 : index
    %327 = memref.load %arg2[%c0_104, %c10] : memref<4x32xf32, #tpu.memory_space<smem>>
    %328 = vector.broadcast %327 : f32 to vector<16x8xf32>
    %329 = arith.mulf %326, %328 : vector<16x8xf32>
    %c10_105 = arith.constant 10 : index
    %330 = memref.load %arg3[%c10_105] : memref<32xf32, #tpu.memory_space<smem>>
    %331 = vector.broadcast %330 : f32 to vector<16x8xf32>
    %332 = arith.addf %329, %331 : vector<16x8xf32>
    %333 = vector.extract_strided_slice %0 {offsets = [1, 0, 0], sizes = [1, 16, 8], strides = [1, 1, 1]} : vector<4x16x8xf32> to vector<1x16x8xf32>
    %334 = vector.shape_cast %333 : vector<1x16x8xf32> to vector<16x8xf32>
    %c1_106 = arith.constant 1 : index
    %c10_107 = arith.constant 10 : index
    %335 = memref.load %arg2[%c1_106, %c10_107] : memref<4x32xf32, #tpu.memory_space<smem>>
    %336 = vector.broadcast %335 : f32 to vector<16x8xf32>
    %337 = arith.mulf %334, %336 : vector<16x8xf32>
    %338 = arith.addf %332, %337 : vector<16x8xf32>
    %339 = vector.extract_strided_slice %0 {offsets = [2, 0, 0], sizes = [1, 16, 8], strides = [1, 1, 1]} : vector<4x16x8xf32> to vector<1x16x8xf32>
    %340 = vector.shape_cast %339 : vector<1x16x8xf32> to vector<16x8xf32>
    %c2_108 = arith.constant 2 : index
    %c10_109 = arith.constant 10 : index
    %341 = memref.load %arg2[%c2_108, %c10_109] : memref<4x32xf32, #tpu.memory_space<smem>>
    %342 = vector.broadcast %341 : f32 to vector<16x8xf32>
    %343 = arith.mulf %340, %342 : vector<16x8xf32>
    %344 = arith.addf %338, %343 : vector<16x8xf32>
    %345 = vector.extract_strided_slice %0 {offsets = [3, 0, 0], sizes = [1, 16, 8], strides = [1, 1, 1]} : vector<4x16x8xf32> to vector<1x16x8xf32>
    %346 = vector.shape_cast %345 : vector<1x16x8xf32> to vector<16x8xf32>
    %c3_110 = arith.constant 3 : index
    %c10_111 = arith.constant 10 : index
    %347 = memref.load %arg2[%c3_110, %c10_111] : memref<4x32xf32, #tpu.memory_space<smem>>
    %348 = vector.broadcast %347 : f32 to vector<16x8xf32>
    %349 = arith.mulf %346, %348 : vector<16x8xf32>
    %350 = arith.addf %344, %349 : vector<16x8xf32>
    %cst_112 = arith.constant 0.000000e+00 : f32
    %351 = vector.broadcast %cst_112 : f32 to vector<16x8xf32>
    %352 = arith.maximumf %350, %351 : vector<16x8xf32>
    %c10_113 = arith.constant 10 : index
    %353 = memref.load %arg4[%c10_113] : memref<32xf32, #tpu.memory_space<smem>>
    %354 = vector.broadcast %353 : f32 to vector<16x8xf32>
    %355 = arith.mulf %352, %354 : vector<16x8xf32>
    %356 = arith.addf %324, %355 : vector<16x8xf32>
    %357 = vector.extract_strided_slice %0 {offsets = [0, 0, 0], sizes = [1, 16, 8], strides = [1, 1, 1]} : vector<4x16x8xf32> to vector<1x16x8xf32>
    %358 = vector.shape_cast %357 : vector<1x16x8xf32> to vector<16x8xf32>
    %c0_114 = arith.constant 0 : index
    %c11 = arith.constant 11 : index
    %359 = memref.load %arg2[%c0_114, %c11] : memref<4x32xf32, #tpu.memory_space<smem>>
    %360 = vector.broadcast %359 : f32 to vector<16x8xf32>
    %361 = arith.mulf %358, %360 : vector<16x8xf32>
    %c11_115 = arith.constant 11 : index
    %362 = memref.load %arg3[%c11_115] : memref<32xf32, #tpu.memory_space<smem>>
    %363 = vector.broadcast %362 : f32 to vector<16x8xf32>
    %364 = arith.addf %361, %363 : vector<16x8xf32>
    %365 = vector.extract_strided_slice %0 {offsets = [1, 0, 0], sizes = [1, 16, 8], strides = [1, 1, 1]} : vector<4x16x8xf32> to vector<1x16x8xf32>
    %366 = vector.shape_cast %365 : vector<1x16x8xf32> to vector<16x8xf32>
    %c1_116 = arith.constant 1 : index
    %c11_117 = arith.constant 11 : index
    %367 = memref.load %arg2[%c1_116, %c11_117] : memref<4x32xf32, #tpu.memory_space<smem>>
    %368 = vector.broadcast %367 : f32 to vector<16x8xf32>
    %369 = arith.mulf %366, %368 : vector<16x8xf32>
    %370 = arith.addf %364, %369 : vector<16x8xf32>
    %371 = vector.extract_strided_slice %0 {offsets = [2, 0, 0], sizes = [1, 16, 8], strides = [1, 1, 1]} : vector<4x16x8xf32> to vector<1x16x8xf32>
    %372 = vector.shape_cast %371 : vector<1x16x8xf32> to vector<16x8xf32>
    %c2_118 = arith.constant 2 : index
    %c11_119 = arith.constant 11 : index
    %373 = memref.load %arg2[%c2_118, %c11_119] : memref<4x32xf32, #tpu.memory_space<smem>>
    %374 = vector.broadcast %373 : f32 to vector<16x8xf32>
    %375 = arith.mulf %372, %374 : vector<16x8xf32>
    %376 = arith.addf %370, %375 : vector<16x8xf32>
    %377 = vector.extract_strided_slice %0 {offsets = [3, 0, 0], sizes = [1, 16, 8], strides = [1, 1, 1]} : vector<4x16x8xf32> to vector<1x16x8xf32>
    %378 = vector.shape_cast %377 : vector<1x16x8xf32> to vector<16x8xf32>
    %c3_120 = arith.constant 3 : index
    %c11_121 = arith.constant 11 : index
    %379 = memref.load %arg2[%c3_120, %c11_121] : memref<4x32xf32, #tpu.memory_space<smem>>
    %380 = vector.broadcast %379 : f32 to vector<16x8xf32>
    %381 = arith.mulf %378, %380 : vector<16x8xf32>
    %382 = arith.addf %376, %381 : vector<16x8xf32>
    %cst_122 = arith.constant 0.000000e+00 : f32
    %383 = vector.broadcast %cst_122 : f32 to vector<16x8xf32>
    %384 = arith.maximumf %382, %383 : vector<16x8xf32>
    %c11_123 = arith.constant 11 : index
    %385 = memref.load %arg4[%c11_123] : memref<32xf32, #tpu.memory_space<smem>>
    %386 = vector.broadcast %385 : f32 to vector<16x8xf32>
    %387 = arith.mulf %384, %386 : vector<16x8xf32>
    %388 = arith.addf %356, %387 : vector<16x8xf32>
    %389 = vector.extract_strided_slice %0 {offsets = [0, 0, 0], sizes = [1, 16, 8], strides = [1, 1, 1]} : vector<4x16x8xf32> to vector<1x16x8xf32>
    %390 = vector.shape_cast %389 : vector<1x16x8xf32> to vector<16x8xf32>
    %c0_124 = arith.constant 0 : index
    %c12 = arith.constant 12 : index
    %391 = memref.load %arg2[%c0_124, %c12] : memref<4x32xf32, #tpu.memory_space<smem>>
    %392 = vector.broadcast %391 : f32 to vector<16x8xf32>
    %393 = arith.mulf %390, %392 : vector<16x8xf32>
    %c12_125 = arith.constant 12 : index
    %394 = memref.load %arg3[%c12_125] : memref<32xf32, #tpu.memory_space<smem>>
    %395 = vector.broadcast %394 : f32 to vector<16x8xf32>
    %396 = arith.addf %393, %395 : vector<16x8xf32>
    %397 = vector.extract_strided_slice %0 {offsets = [1, 0, 0], sizes = [1, 16, 8], strides = [1, 1, 1]} : vector<4x16x8xf32> to vector<1x16x8xf32>
    %398 = vector.shape_cast %397 : vector<1x16x8xf32> to vector<16x8xf32>
    %c1_126 = arith.constant 1 : index
    %c12_127 = arith.constant 12 : index
    %399 = memref.load %arg2[%c1_126, %c12_127] : memref<4x32xf32, #tpu.memory_space<smem>>
    %400 = vector.broadcast %399 : f32 to vector<16x8xf32>
    %401 = arith.mulf %398, %400 : vector<16x8xf32>
    %402 = arith.addf %396, %401 : vector<16x8xf32>
    %403 = vector.extract_strided_slice %0 {offsets = [2, 0, 0], sizes = [1, 16, 8], strides = [1, 1, 1]} : vector<4x16x8xf32> to vector<1x16x8xf32>
    %404 = vector.shape_cast %403 : vector<1x16x8xf32> to vector<16x8xf32>
    %c2_128 = arith.constant 2 : index
    %c12_129 = arith.constant 12 : index
    %405 = memref.load %arg2[%c2_128, %c12_129] : memref<4x32xf32, #tpu.memory_space<smem>>
    %406 = vector.broadcast %405 : f32 to vector<16x8xf32>
    %407 = arith.mulf %404, %406 : vector<16x8xf32>
    %408 = arith.addf %402, %407 : vector<16x8xf32>
    %409 = vector.extract_strided_slice %0 {offsets = [3, 0, 0], sizes = [1, 16, 8], strides = [1, 1, 1]} : vector<4x16x8xf32> to vector<1x16x8xf32>
    %410 = vector.shape_cast %409 : vector<1x16x8xf32> to vector<16x8xf32>
    %c3_130 = arith.constant 3 : index
    %c12_131 = arith.constant 12 : index
    %411 = memref.load %arg2[%c3_130, %c12_131] : memref<4x32xf32, #tpu.memory_space<smem>>
    %412 = vector.broadcast %411 : f32 to vector<16x8xf32>
    %413 = arith.mulf %410, %412 : vector<16x8xf32>
    %414 = arith.addf %408, %413 : vector<16x8xf32>
    %cst_132 = arith.constant 0.000000e+00 : f32
    %415 = vector.broadcast %cst_132 : f32 to vector<16x8xf32>
    %416 = arith.maximumf %414, %415 : vector<16x8xf32>
    %c12_133 = arith.constant 12 : index
    %417 = memref.load %arg4[%c12_133] : memref<32xf32, #tpu.memory_space<smem>>
    %418 = vector.broadcast %417 : f32 to vector<16x8xf32>
    %419 = arith.mulf %416, %418 : vector<16x8xf32>
    %420 = arith.addf %388, %419 : vector<16x8xf32>
    %421 = vector.extract_strided_slice %0 {offsets = [0, 0, 0], sizes = [1, 16, 8], strides = [1, 1, 1]} : vector<4x16x8xf32> to vector<1x16x8xf32>
    %422 = vector.shape_cast %421 : vector<1x16x8xf32> to vector<16x8xf32>
    %c0_134 = arith.constant 0 : index
    %c13 = arith.constant 13 : index
    %423 = memref.load %arg2[%c0_134, %c13] : memref<4x32xf32, #tpu.memory_space<smem>>
    %424 = vector.broadcast %423 : f32 to vector<16x8xf32>
    %425 = arith.mulf %422, %424 : vector<16x8xf32>
    %c13_135 = arith.constant 13 : index
    %426 = memref.load %arg3[%c13_135] : memref<32xf32, #tpu.memory_space<smem>>
    %427 = vector.broadcast %426 : f32 to vector<16x8xf32>
    %428 = arith.addf %425, %427 : vector<16x8xf32>
    %429 = vector.extract_strided_slice %0 {offsets = [1, 0, 0], sizes = [1, 16, 8], strides = [1, 1, 1]} : vector<4x16x8xf32> to vector<1x16x8xf32>
    %430 = vector.shape_cast %429 : vector<1x16x8xf32> to vector<16x8xf32>
    %c1_136 = arith.constant 1 : index
    %c13_137 = arith.constant 13 : index
    %431 = memref.load %arg2[%c1_136, %c13_137] : memref<4x32xf32, #tpu.memory_space<smem>>
    %432 = vector.broadcast %431 : f32 to vector<16x8xf32>
    %433 = arith.mulf %430, %432 : vector<16x8xf32>
    %434 = arith.addf %428, %433 : vector<16x8xf32>
    %435 = vector.extract_strided_slice %0 {offsets = [2, 0, 0], sizes = [1, 16, 8], strides = [1, 1, 1]} : vector<4x16x8xf32> to vector<1x16x8xf32>
    %436 = vector.shape_cast %435 : vector<1x16x8xf32> to vector<16x8xf32>
    %c2_138 = arith.constant 2 : index
    %c13_139 = arith.constant 13 : index
    %437 = memref.load %arg2[%c2_138, %c13_139] : memref<4x32xf32, #tpu.memory_space<smem>>
    %438 = vector.broadcast %437 : f32 to vector<16x8xf32>
    %439 = arith.mulf %436, %438 : vector<16x8xf32>
    %440 = arith.addf %434, %439 : vector<16x8xf32>
    %441 = vector.extract_strided_slice %0 {offsets = [3, 0, 0], sizes = [1, 16, 8], strides = [1, 1, 1]} : vector<4x16x8xf32> to vector<1x16x8xf32>
    %442 = vector.shape_cast %441 : vector<1x16x8xf32> to vector<16x8xf32>
    %c3_140 = arith.constant 3 : index
    %c13_141 = arith.constant 13 : index
    %443 = memref.load %arg2[%c3_140, %c13_141] : memref<4x32xf32, #tpu.memory_space<smem>>
    %444 = vector.broadcast %443 : f32 to vector<16x8xf32>
    %445 = arith.mulf %442, %444 : vector<16x8xf32>
    %446 = arith.addf %440, %445 : vector<16x8xf32>
    %cst_142 = arith.constant 0.000000e+00 : f32
    %447 = vector.broadcast %cst_142 : f32 to vector<16x8xf32>
    %448 = arith.maximumf %446, %447 : vector<16x8xf32>
    %c13_143 = arith.constant 13 : index
    %449 = memref.load %arg4[%c13_143] : memref<32xf32, #tpu.memory_space<smem>>
    %450 = vector.broadcast %449 : f32 to vector<16x8xf32>
    %451 = arith.mulf %448, %450 : vector<16x8xf32>
    %452 = arith.addf %420, %451 : vector<16x8xf32>
    %453 = vector.extract_strided_slice %0 {offsets = [0, 0, 0], sizes = [1, 16, 8], strides = [1, 1, 1]} : vector<4x16x8xf32> to vector<1x16x8xf32>
    %454 = vector.shape_cast %453 : vector<1x16x8xf32> to vector<16x8xf32>
    %c0_144 = arith.constant 0 : index
    %c14 = arith.constant 14 : index
    %455 = memref.load %arg2[%c0_144, %c14] : memref<4x32xf32, #tpu.memory_space<smem>>
    %456 = vector.broadcast %455 : f32 to vector<16x8xf32>
    %457 = arith.mulf %454, %456 : vector<16x8xf32>
    %c14_145 = arith.constant 14 : index
    %458 = memref.load %arg3[%c14_145] : memref<32xf32, #tpu.memory_space<smem>>
    %459 = vector.broadcast %458 : f32 to vector<16x8xf32>
    %460 = arith.addf %457, %459 : vector<16x8xf32>
    %461 = vector.extract_strided_slice %0 {offsets = [1, 0, 0], sizes = [1, 16, 8], strides = [1, 1, 1]} : vector<4x16x8xf32> to vector<1x16x8xf32>
    %462 = vector.shape_cast %461 : vector<1x16x8xf32> to vector<16x8xf32>
    %c1_146 = arith.constant 1 : index
    %c14_147 = arith.constant 14 : index
    %463 = memref.load %arg2[%c1_146, %c14_147] : memref<4x32xf32, #tpu.memory_space<smem>>
    %464 = vector.broadcast %463 : f32 to vector<16x8xf32>
    %465 = arith.mulf %462, %464 : vector<16x8xf32>
    %466 = arith.addf %460, %465 : vector<16x8xf32>
    %467 = vector.extract_strided_slice %0 {offsets = [2, 0, 0], sizes = [1, 16, 8], strides = [1, 1, 1]} : vector<4x16x8xf32> to vector<1x16x8xf32>
    %468 = vector.shape_cast %467 : vector<1x16x8xf32> to vector<16x8xf32>
    %c2_148 = arith.constant 2 : index
    %c14_149 = arith.constant 14 : index
    %469 = memref.load %arg2[%c2_148, %c14_149] : memref<4x32xf32, #tpu.memory_space<smem>>
    %470 = vector.broadcast %469 : f32 to vector<16x8xf32>
    %471 = arith.mulf %468, %470 : vector<16x8xf32>
    %472 = arith.addf %466, %471 : vector<16x8xf32>
    %473 = vector.extract_strided_slice %0 {offsets = [3, 0, 0], sizes = [1, 16, 8], strides = [1, 1, 1]} : vector<4x16x8xf32> to vector<1x16x8xf32>
    %474 = vector.shape_cast %473 : vector<1x16x8xf32> to vector<16x8xf32>
    %c3_150 = arith.constant 3 : index
    %c14_151 = arith.constant 14 : index
    %475 = memref.load %arg2[%c3_150, %c14_151] : memref<4x32xf32, #tpu.memory_space<smem>>
    %476 = vector.broadcast %475 : f32 to vector<16x8xf32>
    %477 = arith.mulf %474, %476 : vector<16x8xf32>
    %478 = arith.addf %472, %477 : vector<16x8xf32>
    %cst_152 = arith.constant 0.000000e+00 : f32
    %479 = vector.broadcast %cst_152 : f32 to vector<16x8xf32>
    %480 = arith.maximumf %478, %479 : vector<16x8xf32>
    %c14_153 = arith.constant 14 : index
    %481 = memref.load %arg4[%c14_153] : memref<32xf32, #tpu.memory_space<smem>>
    %482 = vector.broadcast %481 : f32 to vector<16x8xf32>
    %483 = arith.mulf %480, %482 : vector<16x8xf32>
    %484 = arith.addf %452, %483 : vector<16x8xf32>
    %485 = vector.extract_strided_slice %0 {offsets = [0, 0, 0], sizes = [1, 16, 8], strides = [1, 1, 1]} : vector<4x16x8xf32> to vector<1x16x8xf32>
    %486 = vector.shape_cast %485 : vector<1x16x8xf32> to vector<16x8xf32>
    %c0_154 = arith.constant 0 : index
    %c15 = arith.constant 15 : index
    %487 = memref.load %arg2[%c0_154, %c15] : memref<4x32xf32, #tpu.memory_space<smem>>
    %488 = vector.broadcast %487 : f32 to vector<16x8xf32>
    %489 = arith.mulf %486, %488 : vector<16x8xf32>
    %c15_155 = arith.constant 15 : index
    %490 = memref.load %arg3[%c15_155] : memref<32xf32, #tpu.memory_space<smem>>
    %491 = vector.broadcast %490 : f32 to vector<16x8xf32>
    %492 = arith.addf %489, %491 : vector<16x8xf32>
    %493 = vector.extract_strided_slice %0 {offsets = [1, 0, 0], sizes = [1, 16, 8], strides = [1, 1, 1]} : vector<4x16x8xf32> to vector<1x16x8xf32>
    %494 = vector.shape_cast %493 : vector<1x16x8xf32> to vector<16x8xf32>
    %c1_156 = arith.constant 1 : index
    %c15_157 = arith.constant 15 : index
    %495 = memref.load %arg2[%c1_156, %c15_157] : memref<4x32xf32, #tpu.memory_space<smem>>
    %496 = vector.broadcast %495 : f32 to vector<16x8xf32>
    %497 = arith.mulf %494, %496 : vector<16x8xf32>
    %498 = arith.addf %492, %497 : vector<16x8xf32>
    %499 = vector.extract_strided_slice %0 {offsets = [2, 0, 0], sizes = [1, 16, 8], strides = [1, 1, 1]} : vector<4x16x8xf32> to vector<1x16x8xf32>
    %500 = vector.shape_cast %499 : vector<1x16x8xf32> to vector<16x8xf32>
    %c2_158 = arith.constant 2 : index
    %c15_159 = arith.constant 15 : index
    %501 = memref.load %arg2[%c2_158, %c15_159] : memref<4x32xf32, #tpu.memory_space<smem>>
    %502 = vector.broadcast %501 : f32 to vector<16x8xf32>
    %503 = arith.mulf %500, %502 : vector<16x8xf32>
    %504 = arith.addf %498, %503 : vector<16x8xf32>
    %505 = vector.extract_strided_slice %0 {offsets = [3, 0, 0], sizes = [1, 16, 8], strides = [1, 1, 1]} : vector<4x16x8xf32> to vector<1x16x8xf32>
    %506 = vector.shape_cast %505 : vector<1x16x8xf32> to vector<16x8xf32>
    %c3_160 = arith.constant 3 : index
    %c15_161 = arith.constant 15 : index
    %507 = memref.load %arg2[%c3_160, %c15_161] : memref<4x32xf32, #tpu.memory_space<smem>>
    %508 = vector.broadcast %507 : f32 to vector<16x8xf32>
    %509 = arith.mulf %506, %508 : vector<16x8xf32>
    %510 = arith.addf %504, %509 : vector<16x8xf32>
    %cst_162 = arith.constant 0.000000e+00 : f32
    %511 = vector.broadcast %cst_162 : f32 to vector<16x8xf32>
    %512 = arith.maximumf %510, %511 : vector<16x8xf32>
    %c15_163 = arith.constant 15 : index
    %513 = memref.load %arg4[%c15_163] : memref<32xf32, #tpu.memory_space<smem>>
    %514 = vector.broadcast %513 : f32 to vector<16x8xf32>
    %515 = arith.mulf %512, %514 : vector<16x8xf32>
    %516 = arith.addf %484, %515 : vector<16x8xf32>
    %517 = vector.extract_strided_slice %0 {offsets = [0, 0, 0], sizes = [1, 16, 8], strides = [1, 1, 1]} : vector<4x16x8xf32> to vector<1x16x8xf32>
    %518 = vector.shape_cast %517 : vector<1x16x8xf32> to vector<16x8xf32>
    %c0_164 = arith.constant 0 : index
    %c16 = arith.constant 16 : index
    %519 = memref.load %arg2[%c0_164, %c16] : memref<4x32xf32, #tpu.memory_space<smem>>
    %520 = vector.broadcast %519 : f32 to vector<16x8xf32>
    %521 = arith.mulf %518, %520 : vector<16x8xf32>
    %c16_165 = arith.constant 16 : index
    %522 = memref.load %arg3[%c16_165] : memref<32xf32, #tpu.memory_space<smem>>
    %523 = vector.broadcast %522 : f32 to vector<16x8xf32>
    %524 = arith.addf %521, %523 : vector<16x8xf32>
    %525 = vector.extract_strided_slice %0 {offsets = [1, 0, 0], sizes = [1, 16, 8], strides = [1, 1, 1]} : vector<4x16x8xf32> to vector<1x16x8xf32>
    %526 = vector.shape_cast %525 : vector<1x16x8xf32> to vector<16x8xf32>
    %c1_166 = arith.constant 1 : index
    %c16_167 = arith.constant 16 : index
    %527 = memref.load %arg2[%c1_166, %c16_167] : memref<4x32xf32, #tpu.memory_space<smem>>
    %528 = vector.broadcast %527 : f32 to vector<16x8xf32>
    %529 = arith.mulf %526, %528 : vector<16x8xf32>
    %530 = arith.addf %524, %529 : vector<16x8xf32>
    %531 = vector.extract_strided_slice %0 {offsets = [2, 0, 0], sizes = [1, 16, 8], strides = [1, 1, 1]} : vector<4x16x8xf32> to vector<1x16x8xf32>
    %532 = vector.shape_cast %531 : vector<1x16x8xf32> to vector<16x8xf32>
    %c2_168 = arith.constant 2 : index
    %c16_169 = arith.constant 16 : index
    %533 = memref.load %arg2[%c2_168, %c16_169] : memref<4x32xf32, #tpu.memory_space<smem>>
    %534 = vector.broadcast %533 : f32 to vector<16x8xf32>
    %535 = arith.mulf %532, %534 : vector<16x8xf32>
    %536 = arith.addf %530, %535 : vector<16x8xf32>
    %537 = vector.extract_strided_slice %0 {offsets = [3, 0, 0], sizes = [1, 16, 8], strides = [1, 1, 1]} : vector<4x16x8xf32> to vector<1x16x8xf32>
    %538 = vector.shape_cast %537 : vector<1x16x8xf32> to vector<16x8xf32>
    %c3_170 = arith.constant 3 : index
    %c16_171 = arith.constant 16 : index
    %539 = memref.load %arg2[%c3_170, %c16_171] : memref<4x32xf32, #tpu.memory_space<smem>>
    %540 = vector.broadcast %539 : f32 to vector<16x8xf32>
    %541 = arith.mulf %538, %540 : vector<16x8xf32>
    %542 = arith.addf %536, %541 : vector<16x8xf32>
    %cst_172 = arith.constant 0.000000e+00 : f32
    %543 = vector.broadcast %cst_172 : f32 to vector<16x8xf32>
    %544 = arith.maximumf %542, %543 : vector<16x8xf32>
    %c16_173 = arith.constant 16 : index
    %545 = memref.load %arg4[%c16_173] : memref<32xf32, #tpu.memory_space<smem>>
    %546 = vector.broadcast %545 : f32 to vector<16x8xf32>
    %547 = arith.mulf %544, %546 : vector<16x8xf32>
    %548 = arith.addf %516, %547 : vector<16x8xf32>
    %549 = vector.extract_strided_slice %0 {offsets = [0, 0, 0], sizes = [1, 16, 8], strides = [1, 1, 1]} : vector<4x16x8xf32> to vector<1x16x8xf32>
    %550 = vector.shape_cast %549 : vector<1x16x8xf32> to vector<16x8xf32>
    %c0_174 = arith.constant 0 : index
    %c17 = arith.constant 17 : index
    %551 = memref.load %arg2[%c0_174, %c17] : memref<4x32xf32, #tpu.memory_space<smem>>
    %552 = vector.broadcast %551 : f32 to vector<16x8xf32>
    %553 = arith.mulf %550, %552 : vector<16x8xf32>
    %c17_175 = arith.constant 17 : index
    %554 = memref.load %arg3[%c17_175] : memref<32xf32, #tpu.memory_space<smem>>
    %555 = vector.broadcast %554 : f32 to vector<16x8xf32>
    %556 = arith.addf %553, %555 : vector<16x8xf32>
    %557 = vector.extract_strided_slice %0 {offsets = [1, 0, 0], sizes = [1, 16, 8], strides = [1, 1, 1]} : vector<4x16x8xf32> to vector<1x16x8xf32>
    %558 = vector.shape_cast %557 : vector<1x16x8xf32> to vector<16x8xf32>
    %c1_176 = arith.constant 1 : index
    %c17_177 = arith.constant 17 : index
    %559 = memref.load %arg2[%c1_176, %c17_177] : memref<4x32xf32, #tpu.memory_space<smem>>
    %560 = vector.broadcast %559 : f32 to vector<16x8xf32>
    %561 = arith.mulf %558, %560 : vector<16x8xf32>
    %562 = arith.addf %556, %561 : vector<16x8xf32>
    %563 = vector.extract_strided_slice %0 {offsets = [2, 0, 0], sizes = [1, 16, 8], strides = [1, 1, 1]} : vector<4x16x8xf32> to vector<1x16x8xf32>
    %564 = vector.shape_cast %563 : vector<1x16x8xf32> to vector<16x8xf32>
    %c2_178 = arith.constant 2 : index
    %c17_179 = arith.constant 17 : index
    %565 = memref.load %arg2[%c2_178, %c17_179] : memref<4x32xf32, #tpu.memory_space<smem>>
    %566 = vector.broadcast %565 : f32 to vector<16x8xf32>
    %567 = arith.mulf %564, %566 : vector<16x8xf32>
    %568 = arith.addf %562, %567 : vector<16x8xf32>
    %569 = vector.extract_strided_slice %0 {offsets = [3, 0, 0], sizes = [1, 16, 8], strides = [1, 1, 1]} : vector<4x16x8xf32> to vector<1x16x8xf32>
    %570 = vector.shape_cast %569 : vector<1x16x8xf32> to vector<16x8xf32>
    %c3_180 = arith.constant 3 : index
    %c17_181 = arith.constant 17 : index
    %571 = memref.load %arg2[%c3_180, %c17_181] : memref<4x32xf32, #tpu.memory_space<smem>>
    %572 = vector.broadcast %571 : f32 to vector<16x8xf32>
    %573 = arith.mulf %570, %572 : vector<16x8xf32>
    %574 = arith.addf %568, %573 : vector<16x8xf32>
    %cst_182 = arith.constant 0.000000e+00 : f32
    %575 = vector.broadcast %cst_182 : f32 to vector<16x8xf32>
    %576 = arith.maximumf %574, %575 : vector<16x8xf32>
    %c17_183 = arith.constant 17 : index
    %577 = memref.load %arg4[%c17_183] : memref<32xf32, #tpu.memory_space<smem>>
    %578 = vector.broadcast %577 : f32 to vector<16x8xf32>
    %579 = arith.mulf %576, %578 : vector<16x8xf32>
    %580 = arith.addf %548, %579 : vector<16x8xf32>
    %581 = vector.extract_strided_slice %0 {offsets = [0, 0, 0], sizes = [1, 16, 8], strides = [1, 1, 1]} : vector<4x16x8xf32> to vector<1x16x8xf32>
    %582 = vector.shape_cast %581 : vector<1x16x8xf32> to vector<16x8xf32>
    %c0_184 = arith.constant 0 : index
    %c18 = arith.constant 18 : index
    %583 = memref.load %arg2[%c0_184, %c18] : memref<4x32xf32, #tpu.memory_space<smem>>
    %584 = vector.broadcast %583 : f32 to vector<16x8xf32>
    %585 = arith.mulf %582, %584 : vector<16x8xf32>
    %c18_185 = arith.constant 18 : index
    %586 = memref.load %arg3[%c18_185] : memref<32xf32, #tpu.memory_space<smem>>
    %587 = vector.broadcast %586 : f32 to vector<16x8xf32>
    %588 = arith.addf %585, %587 : vector<16x8xf32>
    %589 = vector.extract_strided_slice %0 {offsets = [1, 0, 0], sizes = [1, 16, 8], strides = [1, 1, 1]} : vector<4x16x8xf32> to vector<1x16x8xf32>
    %590 = vector.shape_cast %589 : vector<1x16x8xf32> to vector<16x8xf32>
    %c1_186 = arith.constant 1 : index
    %c18_187 = arith.constant 18 : index
    %591 = memref.load %arg2[%c1_186, %c18_187] : memref<4x32xf32, #tpu.memory_space<smem>>
    %592 = vector.broadcast %591 : f32 to vector<16x8xf32>
    %593 = arith.mulf %590, %592 : vector<16x8xf32>
    %594 = arith.addf %588, %593 : vector<16x8xf32>
    %595 = vector.extract_strided_slice %0 {offsets = [2, 0, 0], sizes = [1, 16, 8], strides = [1, 1, 1]} : vector<4x16x8xf32> to vector<1x16x8xf32>
    %596 = vector.shape_cast %595 : vector<1x16x8xf32> to vector<16x8xf32>
    %c2_188 = arith.constant 2 : index
    %c18_189 = arith.constant 18 : index
    %597 = memref.load %arg2[%c2_188, %c18_189] : memref<4x32xf32, #tpu.memory_space<smem>>
    %598 = vector.broadcast %597 : f32 to vector<16x8xf32>
    %599 = arith.mulf %596, %598 : vector<16x8xf32>
    %600 = arith.addf %594, %599 : vector<16x8xf32>
    %601 = vector.extract_strided_slice %0 {offsets = [3, 0, 0], sizes = [1, 16, 8], strides = [1, 1, 1]} : vector<4x16x8xf32> to vector<1x16x8xf32>
    %602 = vector.shape_cast %601 : vector<1x16x8xf32> to vector<16x8xf32>
    %c3_190 = arith.constant 3 : index
    %c18_191 = arith.constant 18 : index
    %603 = memref.load %arg2[%c3_190, %c18_191] : memref<4x32xf32, #tpu.memory_space<smem>>
    %604 = vector.broadcast %603 : f32 to vector<16x8xf32>
    %605 = arith.mulf %602, %604 : vector<16x8xf32>
    %606 = arith.addf %600, %605 : vector<16x8xf32>
    %cst_192 = arith.constant 0.000000e+00 : f32
    %607 = vector.broadcast %cst_192 : f32 to vector<16x8xf32>
    %608 = arith.maximumf %606, %607 : vector<16x8xf32>
    %c18_193 = arith.constant 18 : index
    %609 = memref.load %arg4[%c18_193] : memref<32xf32, #tpu.memory_space<smem>>
    %610 = vector.broadcast %609 : f32 to vector<16x8xf32>
    %611 = arith.mulf %608, %610 : vector<16x8xf32>
    %612 = arith.addf %580, %611 : vector<16x8xf32>
    %613 = vector.extract_strided_slice %0 {offsets = [0, 0, 0], sizes = [1, 16, 8], strides = [1, 1, 1]} : vector<4x16x8xf32> to vector<1x16x8xf32>
    %614 = vector.shape_cast %613 : vector<1x16x8xf32> to vector<16x8xf32>
    %c0_194 = arith.constant 0 : index
    %c19 = arith.constant 19 : index
    %615 = memref.load %arg2[%c0_194, %c19] : memref<4x32xf32, #tpu.memory_space<smem>>
    %616 = vector.broadcast %615 : f32 to vector<16x8xf32>
    %617 = arith.mulf %614, %616 : vector<16x8xf32>
    %c19_195 = arith.constant 19 : index
    %618 = memref.load %arg3[%c19_195] : memref<32xf32, #tpu.memory_space<smem>>
    %619 = vector.broadcast %618 : f32 to vector<16x8xf32>
    %620 = arith.addf %617, %619 : vector<16x8xf32>
    %621 = vector.extract_strided_slice %0 {offsets = [1, 0, 0], sizes = [1, 16, 8], strides = [1, 1, 1]} : vector<4x16x8xf32> to vector<1x16x8xf32>
    %622 = vector.shape_cast %621 : vector<1x16x8xf32> to vector<16x8xf32>
    %c1_196 = arith.constant 1 : index
    %c19_197 = arith.constant 19 : index
    %623 = memref.load %arg2[%c1_196, %c19_197] : memref<4x32xf32, #tpu.memory_space<smem>>
    %624 = vector.broadcast %623 : f32 to vector<16x8xf32>
    %625 = arith.mulf %622, %624 : vector<16x8xf32>
    %626 = arith.addf %620, %625 : vector<16x8xf32>
    %627 = vector.extract_strided_slice %0 {offsets = [2, 0, 0], sizes = [1, 16, 8], strides = [1, 1, 1]} : vector<4x16x8xf32> to vector<1x16x8xf32>
    %628 = vector.shape_cast %627 : vector<1x16x8xf32> to vector<16x8xf32>
    %c2_198 = arith.constant 2 : index
    %c19_199 = arith.constant 19 : index
    %629 = memref.load %arg2[%c2_198, %c19_199] : memref<4x32xf32, #tpu.memory_space<smem>>
    %630 = vector.broadcast %629 : f32 to vector<16x8xf32>
    %631 = arith.mulf %628, %630 : vector<16x8xf32>
    %632 = arith.addf %626, %631 : vector<16x8xf32>
    %633 = vector.extract_strided_slice %0 {offsets = [3, 0, 0], sizes = [1, 16, 8], strides = [1, 1, 1]} : vector<4x16x8xf32> to vector<1x16x8xf32>
    %634 = vector.shape_cast %633 : vector<1x16x8xf32> to vector<16x8xf32>
    %c3_200 = arith.constant 3 : index
    %c19_201 = arith.constant 19 : index
    %635 = memref.load %arg2[%c3_200, %c19_201] : memref<4x32xf32, #tpu.memory_space<smem>>
    %636 = vector.broadcast %635 : f32 to vector<16x8xf32>
    %637 = arith.mulf %634, %636 : vector<16x8xf32>
    %638 = arith.addf %632, %637 : vector<16x8xf32>
    %cst_202 = arith.constant 0.000000e+00 : f32
    %639 = vector.broadcast %cst_202 : f32 to vector<16x8xf32>
    %640 = arith.maximumf %638, %639 : vector<16x8xf32>
    %c19_203 = arith.constant 19 : index
    %641 = memref.load %arg4[%c19_203] : memref<32xf32, #tpu.memory_space<smem>>
    %642 = vector.broadcast %641 : f32 to vector<16x8xf32>
    %643 = arith.mulf %640, %642 : vector<16x8xf32>
    %644 = arith.addf %612, %643 : vector<16x8xf32>
    %645 = vector.extract_strided_slice %0 {offsets = [0, 0, 0], sizes = [1, 16, 8], strides = [1, 1, 1]} : vector<4x16x8xf32> to vector<1x16x8xf32>
    %646 = vector.shape_cast %645 : vector<1x16x8xf32> to vector<16x8xf32>
    %c0_204 = arith.constant 0 : index
    %c20 = arith.constant 20 : index
    %647 = memref.load %arg2[%c0_204, %c20] : memref<4x32xf32, #tpu.memory_space<smem>>
    %648 = vector.broadcast %647 : f32 to vector<16x8xf32>
    %649 = arith.mulf %646, %648 : vector<16x8xf32>
    %c20_205 = arith.constant 20 : index
    %650 = memref.load %arg3[%c20_205] : memref<32xf32, #tpu.memory_space<smem>>
    %651 = vector.broadcast %650 : f32 to vector<16x8xf32>
    %652 = arith.addf %649, %651 : vector<16x8xf32>
    %653 = vector.extract_strided_slice %0 {offsets = [1, 0, 0], sizes = [1, 16, 8], strides = [1, 1, 1]} : vector<4x16x8xf32> to vector<1x16x8xf32>
    %654 = vector.shape_cast %653 : vector<1x16x8xf32> to vector<16x8xf32>
    %c1_206 = arith.constant 1 : index
    %c20_207 = arith.constant 20 : index
    %655 = memref.load %arg2[%c1_206, %c20_207] : memref<4x32xf32, #tpu.memory_space<smem>>
    %656 = vector.broadcast %655 : f32 to vector<16x8xf32>
    %657 = arith.mulf %654, %656 : vector<16x8xf32>
    %658 = arith.addf %652, %657 : vector<16x8xf32>
    %659 = vector.extract_strided_slice %0 {offsets = [2, 0, 0], sizes = [1, 16, 8], strides = [1, 1, 1]} : vector<4x16x8xf32> to vector<1x16x8xf32>
    %660 = vector.shape_cast %659 : vector<1x16x8xf32> to vector<16x8xf32>
    %c2_208 = arith.constant 2 : index
    %c20_209 = arith.constant 20 : index
    %661 = memref.load %arg2[%c2_208, %c20_209] : memref<4x32xf32, #tpu.memory_space<smem>>
    %662 = vector.broadcast %661 : f32 to vector<16x8xf32>
    %663 = arith.mulf %660, %662 : vector<16x8xf32>
    %664 = arith.addf %658, %663 : vector<16x8xf32>
    %665 = vector.extract_strided_slice %0 {offsets = [3, 0, 0], sizes = [1, 16, 8], strides = [1, 1, 1]} : vector<4x16x8xf32> to vector<1x16x8xf32>
    %666 = vector.shape_cast %665 : vector<1x16x8xf32> to vector<16x8xf32>
    %c3_210 = arith.constant 3 : index
    %c20_211 = arith.constant 20 : index
    %667 = memref.load %arg2[%c3_210, %c20_211] : memref<4x32xf32, #tpu.memory_space<smem>>
    %668 = vector.broadcast %667 : f32 to vector<16x8xf32>
    %669 = arith.mulf %666, %668 : vector<16x8xf32>
    %670 = arith.addf %664, %669 : vector<16x8xf32>
    %cst_212 = arith.constant 0.000000e+00 : f32
    %671 = vector.broadcast %cst_212 : f32 to vector<16x8xf32>
    %672 = arith.maximumf %670, %671 : vector<16x8xf32>
    %c20_213 = arith.constant 20 : index
    %673 = memref.load %arg4[%c20_213] : memref<32xf32, #tpu.memory_space<smem>>
    %674 = vector.broadcast %673 : f32 to vector<16x8xf32>
    %675 = arith.mulf %672, %674 : vector<16x8xf32>
    %676 = arith.addf %644, %675 : vector<16x8xf32>
    %677 = vector.extract_strided_slice %0 {offsets = [0, 0, 0], sizes = [1, 16, 8], strides = [1, 1, 1]} : vector<4x16x8xf32> to vector<1x16x8xf32>
    %678 = vector.shape_cast %677 : vector<1x16x8xf32> to vector<16x8xf32>
    %c0_214 = arith.constant 0 : index
    %c21 = arith.constant 21 : index
    %679 = memref.load %arg2[%c0_214, %c21] : memref<4x32xf32, #tpu.memory_space<smem>>
    %680 = vector.broadcast %679 : f32 to vector<16x8xf32>
    %681 = arith.mulf %678, %680 : vector<16x8xf32>
    %c21_215 = arith.constant 21 : index
    %682 = memref.load %arg3[%c21_215] : memref<32xf32, #tpu.memory_space<smem>>
    %683 = vector.broadcast %682 : f32 to vector<16x8xf32>
    %684 = arith.addf %681, %683 : vector<16x8xf32>
    %685 = vector.extract_strided_slice %0 {offsets = [1, 0, 0], sizes = [1, 16, 8], strides = [1, 1, 1]} : vector<4x16x8xf32> to vector<1x16x8xf32>
    %686 = vector.shape_cast %685 : vector<1x16x8xf32> to vector<16x8xf32>
    %c1_216 = arith.constant 1 : index
    %c21_217 = arith.constant 21 : index
    %687 = memref.load %arg2[%c1_216, %c21_217] : memref<4x32xf32, #tpu.memory_space<smem>>
    %688 = vector.broadcast %687 : f32 to vector<16x8xf32>
    %689 = arith.mulf %686, %688 : vector<16x8xf32>
    %690 = arith.addf %684, %689 : vector<16x8xf32>
    %691 = vector.extract_strided_slice %0 {offsets = [2, 0, 0], sizes = [1, 16, 8], strides = [1, 1, 1]} : vector<4x16x8xf32> to vector<1x16x8xf32>
    %692 = vector.shape_cast %691 : vector<1x16x8xf32> to vector<16x8xf32>
    %c2_218 = arith.constant 2 : index
    %c21_219 = arith.constant 21 : index
    %693 = memref.load %arg2[%c2_218, %c21_219] : memref<4x32xf32, #tpu.memory_space<smem>>
    %694 = vector.broadcast %693 : f32 to vector<16x8xf32>
    %695 = arith.mulf %692, %694 : vector<16x8xf32>
    %696 = arith.addf %690, %695 : vector<16x8xf32>
    %697 = vector.extract_strided_slice %0 {offsets = [3, 0, 0], sizes = [1, 16, 8], strides = [1, 1, 1]} : vector<4x16x8xf32> to vector<1x16x8xf32>
    %698 = vector.shape_cast %697 : vector<1x16x8xf32> to vector<16x8xf32>
    %c3_220 = arith.constant 3 : index
    %c21_221 = arith.constant 21 : index
    %699 = memref.load %arg2[%c3_220, %c21_221] : memref<4x32xf32, #tpu.memory_space<smem>>
    %700 = vector.broadcast %699 : f32 to vector<16x8xf32>
    %701 = arith.mulf %698, %700 : vector<16x8xf32>
    %702 = arith.addf %696, %701 : vector<16x8xf32>
    %cst_222 = arith.constant 0.000000e+00 : f32
    %703 = vector.broadcast %cst_222 : f32 to vector<16x8xf32>
    %704 = arith.maximumf %702, %703 : vector<16x8xf32>
    %c21_223 = arith.constant 21 : index
    %705 = memref.load %arg4[%c21_223] : memref<32xf32, #tpu.memory_space<smem>>
    %706 = vector.broadcast %705 : f32 to vector<16x8xf32>
    %707 = arith.mulf %704, %706 : vector<16x8xf32>
    %708 = arith.addf %676, %707 : vector<16x8xf32>
    %709 = vector.extract_strided_slice %0 {offsets = [0, 0, 0], sizes = [1, 16, 8], strides = [1, 1, 1]} : vector<4x16x8xf32> to vector<1x16x8xf32>
    %710 = vector.shape_cast %709 : vector<1x16x8xf32> to vector<16x8xf32>
    %c0_224 = arith.constant 0 : index
    %c22 = arith.constant 22 : index
    %711 = memref.load %arg2[%c0_224, %c22] : memref<4x32xf32, #tpu.memory_space<smem>>
    %712 = vector.broadcast %711 : f32 to vector<16x8xf32>
    %713 = arith.mulf %710, %712 : vector<16x8xf32>
    %c22_225 = arith.constant 22 : index
    %714 = memref.load %arg3[%c22_225] : memref<32xf32, #tpu.memory_space<smem>>
    %715 = vector.broadcast %714 : f32 to vector<16x8xf32>
    %716 = arith.addf %713, %715 : vector<16x8xf32>
    %717 = vector.extract_strided_slice %0 {offsets = [1, 0, 0], sizes = [1, 16, 8], strides = [1, 1, 1]} : vector<4x16x8xf32> to vector<1x16x8xf32>
    %718 = vector.shape_cast %717 : vector<1x16x8xf32> to vector<16x8xf32>
    %c1_226 = arith.constant 1 : index
    %c22_227 = arith.constant 22 : index
    %719 = memref.load %arg2[%c1_226, %c22_227] : memref<4x32xf32, #tpu.memory_space<smem>>
    %720 = vector.broadcast %719 : f32 to vector<16x8xf32>
    %721 = arith.mulf %718, %720 : vector<16x8xf32>
    %722 = arith.addf %716, %721 : vector<16x8xf32>
    %723 = vector.extract_strided_slice %0 {offsets = [2, 0, 0], sizes = [1, 16, 8], strides = [1, 1, 1]} : vector<4x16x8xf32> to vector<1x16x8xf32>
    %724 = vector.shape_cast %723 : vector<1x16x8xf32> to vector<16x8xf32>
    %c2_228 = arith.constant 2 : index
    %c22_229 = arith.constant 22 : index
    %725 = memref.load %arg2[%c2_228, %c22_229] : memref<4x32xf32, #tpu.memory_space<smem>>
    %726 = vector.broadcast %725 : f32 to vector<16x8xf32>
    %727 = arith.mulf %724, %726 : vector<16x8xf32>
    %728 = arith.addf %722, %727 : vector<16x8xf32>
    %729 = vector.extract_strided_slice %0 {offsets = [3, 0, 0], sizes = [1, 16, 8], strides = [1, 1, 1]} : vector<4x16x8xf32> to vector<1x16x8xf32>
    %730 = vector.shape_cast %729 : vector<1x16x8xf32> to vector<16x8xf32>
    %c3_230 = arith.constant 3 : index
    %c22_231 = arith.constant 22 : index
    %731 = memref.load %arg2[%c3_230, %c22_231] : memref<4x32xf32, #tpu.memory_space<smem>>
    %732 = vector.broadcast %731 : f32 to vector<16x8xf32>
    %733 = arith.mulf %730, %732 : vector<16x8xf32>
    %734 = arith.addf %728, %733 : vector<16x8xf32>
    %cst_232 = arith.constant 0.000000e+00 : f32
    %735 = vector.broadcast %cst_232 : f32 to vector<16x8xf32>
    %736 = arith.maximumf %734, %735 : vector<16x8xf32>
    %c22_233 = arith.constant 22 : index
    %737 = memref.load %arg4[%c22_233] : memref<32xf32, #tpu.memory_space<smem>>
    %738 = vector.broadcast %737 : f32 to vector<16x8xf32>
    %739 = arith.mulf %736, %738 : vector<16x8xf32>
    %740 = arith.addf %708, %739 : vector<16x8xf32>
    %741 = vector.extract_strided_slice %0 {offsets = [0, 0, 0], sizes = [1, 16, 8], strides = [1, 1, 1]} : vector<4x16x8xf32> to vector<1x16x8xf32>
    %742 = vector.shape_cast %741 : vector<1x16x8xf32> to vector<16x8xf32>
    %c0_234 = arith.constant 0 : index
    %c23 = arith.constant 23 : index
    %743 = memref.load %arg2[%c0_234, %c23] : memref<4x32xf32, #tpu.memory_space<smem>>
    %744 = vector.broadcast %743 : f32 to vector<16x8xf32>
    %745 = arith.mulf %742, %744 : vector<16x8xf32>
    %c23_235 = arith.constant 23 : index
    %746 = memref.load %arg3[%c23_235] : memref<32xf32, #tpu.memory_space<smem>>
    %747 = vector.broadcast %746 : f32 to vector<16x8xf32>
    %748 = arith.addf %745, %747 : vector<16x8xf32>
    %749 = vector.extract_strided_slice %0 {offsets = [1, 0, 0], sizes = [1, 16, 8], strides = [1, 1, 1]} : vector<4x16x8xf32> to vector<1x16x8xf32>
    %750 = vector.shape_cast %749 : vector<1x16x8xf32> to vector<16x8xf32>
    %c1_236 = arith.constant 1 : index
    %c23_237 = arith.constant 23 : index
    %751 = memref.load %arg2[%c1_236, %c23_237] : memref<4x32xf32, #tpu.memory_space<smem>>
    %752 = vector.broadcast %751 : f32 to vector<16x8xf32>
    %753 = arith.mulf %750, %752 : vector<16x8xf32>
    %754 = arith.addf %748, %753 : vector<16x8xf32>
    %755 = vector.extract_strided_slice %0 {offsets = [2, 0, 0], sizes = [1, 16, 8], strides = [1, 1, 1]} : vector<4x16x8xf32> to vector<1x16x8xf32>
    %756 = vector.shape_cast %755 : vector<1x16x8xf32> to vector<16x8xf32>
    %c2_238 = arith.constant 2 : index
    %c23_239 = arith.constant 23 : index
    %757 = memref.load %arg2[%c2_238, %c23_239] : memref<4x32xf32, #tpu.memory_space<smem>>
    %758 = vector.broadcast %757 : f32 to vector<16x8xf32>
    %759 = arith.mulf %756, %758 : vector<16x8xf32>
    %760 = arith.addf %754, %759 : vector<16x8xf32>
    %761 = vector.extract_strided_slice %0 {offsets = [3, 0, 0], sizes = [1, 16, 8], strides = [1, 1, 1]} : vector<4x16x8xf32> to vector<1x16x8xf32>
    %762 = vector.shape_cast %761 : vector<1x16x8xf32> to vector<16x8xf32>
    %c3_240 = arith.constant 3 : index
    %c23_241 = arith.constant 23 : index
    %763 = memref.load %arg2[%c3_240, %c23_241] : memref<4x32xf32, #tpu.memory_space<smem>>
    %764 = vector.broadcast %763 : f32 to vector<16x8xf32>
    %765 = arith.mulf %762, %764 : vector<16x8xf32>
    %766 = arith.addf %760, %765 : vector<16x8xf32>
    %cst_242 = arith.constant 0.000000e+00 : f32
    %767 = vector.broadcast %cst_242 : f32 to vector<16x8xf32>
    %768 = arith.maximumf %766, %767 : vector<16x8xf32>
    %c23_243 = arith.constant 23 : index
    %769 = memref.load %arg4[%c23_243] : memref<32xf32, #tpu.memory_space<smem>>
    %770 = vector.broadcast %769 : f32 to vector<16x8xf32>
    %771 = arith.mulf %768, %770 : vector<16x8xf32>
    %772 = arith.addf %740, %771 : vector<16x8xf32>
    %773 = vector.extract_strided_slice %0 {offsets = [0, 0, 0], sizes = [1, 16, 8], strides = [1, 1, 1]} : vector<4x16x8xf32> to vector<1x16x8xf32>
    %774 = vector.shape_cast %773 : vector<1x16x8xf32> to vector<16x8xf32>
    %c0_244 = arith.constant 0 : index
    %c24 = arith.constant 24 : index
    %775 = memref.load %arg2[%c0_244, %c24] : memref<4x32xf32, #tpu.memory_space<smem>>
    %776 = vector.broadcast %775 : f32 to vector<16x8xf32>
    %777 = arith.mulf %774, %776 : vector<16x8xf32>
    %c24_245 = arith.constant 24 : index
    %778 = memref.load %arg3[%c24_245] : memref<32xf32, #tpu.memory_space<smem>>
    %779 = vector.broadcast %778 : f32 to vector<16x8xf32>
    %780 = arith.addf %777, %779 : vector<16x8xf32>
    %781 = vector.extract_strided_slice %0 {offsets = [1, 0, 0], sizes = [1, 16, 8], strides = [1, 1, 1]} : vector<4x16x8xf32> to vector<1x16x8xf32>
    %782 = vector.shape_cast %781 : vector<1x16x8xf32> to vector<16x8xf32>
    %c1_246 = arith.constant 1 : index
    %c24_247 = arith.constant 24 : index
    %783 = memref.load %arg2[%c1_246, %c24_247] : memref<4x32xf32, #tpu.memory_space<smem>>
    %784 = vector.broadcast %783 : f32 to vector<16x8xf32>
    %785 = arith.mulf %782, %784 : vector<16x8xf32>
    %786 = arith.addf %780, %785 : vector<16x8xf32>
    %787 = vector.extract_strided_slice %0 {offsets = [2, 0, 0], sizes = [1, 16, 8], strides = [1, 1, 1]} : vector<4x16x8xf32> to vector<1x16x8xf32>
    %788 = vector.shape_cast %787 : vector<1x16x8xf32> to vector<16x8xf32>
    %c2_248 = arith.constant 2 : index
    %c24_249 = arith.constant 24 : index
    %789 = memref.load %arg2[%c2_248, %c24_249] : memref<4x32xf32, #tpu.memory_space<smem>>
    %790 = vector.broadcast %789 : f32 to vector<16x8xf32>
    %791 = arith.mulf %788, %790 : vector<16x8xf32>
    %792 = arith.addf %786, %791 : vector<16x8xf32>
    %793 = vector.extract_strided_slice %0 {offsets = [3, 0, 0], sizes = [1, 16, 8], strides = [1, 1, 1]} : vector<4x16x8xf32> to vector<1x16x8xf32>
    %794 = vector.shape_cast %793 : vector<1x16x8xf32> to vector<16x8xf32>
    %c3_250 = arith.constant 3 : index
    %c24_251 = arith.constant 24 : index
    %795 = memref.load %arg2[%c3_250, %c24_251] : memref<4x32xf32, #tpu.memory_space<smem>>
    %796 = vector.broadcast %795 : f32 to vector<16x8xf32>
    %797 = arith.mulf %794, %796 : vector<16x8xf32>
    %798 = arith.addf %792, %797 : vector<16x8xf32>
    %cst_252 = arith.constant 0.000000e+00 : f32
    %799 = vector.broadcast %cst_252 : f32 to vector<16x8xf32>
    %800 = arith.maximumf %798, %799 : vector<16x8xf32>
    %c24_253 = arith.constant 24 : index
    %801 = memref.load %arg4[%c24_253] : memref<32xf32, #tpu.memory_space<smem>>
    %802 = vector.broadcast %801 : f32 to vector<16x8xf32>
    %803 = arith.mulf %800, %802 : vector<16x8xf32>
    %804 = arith.addf %772, %803 : vector<16x8xf32>
    %805 = vector.extract_strided_slice %0 {offsets = [0, 0, 0], sizes = [1, 16, 8], strides = [1, 1, 1]} : vector<4x16x8xf32> to vector<1x16x8xf32>
    %806 = vector.shape_cast %805 : vector<1x16x8xf32> to vector<16x8xf32>
    %c0_254 = arith.constant 0 : index
    %c25 = arith.constant 25 : index
    %807 = memref.load %arg2[%c0_254, %c25] : memref<4x32xf32, #tpu.memory_space<smem>>
    %808 = vector.broadcast %807 : f32 to vector<16x8xf32>
    %809 = arith.mulf %806, %808 : vector<16x8xf32>
    %c25_255 = arith.constant 25 : index
    %810 = memref.load %arg3[%c25_255] : memref<32xf32, #tpu.memory_space<smem>>
    %811 = vector.broadcast %810 : f32 to vector<16x8xf32>
    %812 = arith.addf %809, %811 : vector<16x8xf32>
    %813 = vector.extract_strided_slice %0 {offsets = [1, 0, 0], sizes = [1, 16, 8], strides = [1, 1, 1]} : vector<4x16x8xf32> to vector<1x16x8xf32>
    %814 = vector.shape_cast %813 : vector<1x16x8xf32> to vector<16x8xf32>
    %c1_256 = arith.constant 1 : index
    %c25_257 = arith.constant 25 : index
    %815 = memref.load %arg2[%c1_256, %c25_257] : memref<4x32xf32, #tpu.memory_space<smem>>
    %816 = vector.broadcast %815 : f32 to vector<16x8xf32>
    %817 = arith.mulf %814, %816 : vector<16x8xf32>
    %818 = arith.addf %812, %817 : vector<16x8xf32>
    %819 = vector.extract_strided_slice %0 {offsets = [2, 0, 0], sizes = [1, 16, 8], strides = [1, 1, 1]} : vector<4x16x8xf32> to vector<1x16x8xf32>
    %820 = vector.shape_cast %819 : vector<1x16x8xf32> to vector<16x8xf32>
    %c2_258 = arith.constant 2 : index
    %c25_259 = arith.constant 25 : index
    %821 = memref.load %arg2[%c2_258, %c25_259] : memref<4x32xf32, #tpu.memory_space<smem>>
    %822 = vector.broadcast %821 : f32 to vector<16x8xf32>
    %823 = arith.mulf %820, %822 : vector<16x8xf32>
    %824 = arith.addf %818, %823 : vector<16x8xf32>
    %825 = vector.extract_strided_slice %0 {offsets = [3, 0, 0], sizes = [1, 16, 8], strides = [1, 1, 1]} : vector<4x16x8xf32> to vector<1x16x8xf32>
    %826 = vector.shape_cast %825 : vector<1x16x8xf32> to vector<16x8xf32>
    %c3_260 = arith.constant 3 : index
    %c25_261 = arith.constant 25 : index
    %827 = memref.load %arg2[%c3_260, %c25_261] : memref<4x32xf32, #tpu.memory_space<smem>>
    %828 = vector.broadcast %827 : f32 to vector<16x8xf32>
    %829 = arith.mulf %826, %828 : vector<16x8xf32>
    %830 = arith.addf %824, %829 : vector<16x8xf32>
    %cst_262 = arith.constant 0.000000e+00 : f32
    %831 = vector.broadcast %cst_262 : f32 to vector<16x8xf32>
    %832 = arith.maximumf %830, %831 : vector<16x8xf32>
    %c25_263 = arith.constant 25 : index
    %833 = memref.load %arg4[%c25_263] : memref<32xf32, #tpu.memory_space<smem>>
    %834 = vector.broadcast %833 : f32 to vector<16x8xf32>
    %835 = arith.mulf %832, %834 : vector<16x8xf32>
    %836 = arith.addf %804, %835 : vector<16x8xf32>
    %837 = vector.extract_strided_slice %0 {offsets = [0, 0, 0], sizes = [1, 16, 8], strides = [1, 1, 1]} : vector<4x16x8xf32> to vector<1x16x8xf32>
    %838 = vector.shape_cast %837 : vector<1x16x8xf32> to vector<16x8xf32>
    %c0_264 = arith.constant 0 : index
    %c26 = arith.constant 26 : index
    %839 = memref.load %arg2[%c0_264, %c26] : memref<4x32xf32, #tpu.memory_space<smem>>
    %840 = vector.broadcast %839 : f32 to vector<16x8xf32>
    %841 = arith.mulf %838, %840 : vector<16x8xf32>
    %c26_265 = arith.constant 26 : index
    %842 = memref.load %arg3[%c26_265] : memref<32xf32, #tpu.memory_space<smem>>
    %843 = vector.broadcast %842 : f32 to vector<16x8xf32>
    %844 = arith.addf %841, %843 : vector<16x8xf32>
    %845 = vector.extract_strided_slice %0 {offsets = [1, 0, 0], sizes = [1, 16, 8], strides = [1, 1, 1]} : vector<4x16x8xf32> to vector<1x16x8xf32>
    %846 = vector.shape_cast %845 : vector<1x16x8xf32> to vector<16x8xf32>
    %c1_266 = arith.constant 1 : index
    %c26_267 = arith.constant 26 : index
    %847 = memref.load %arg2[%c1_266, %c26_267] : memref<4x32xf32, #tpu.memory_space<smem>>
    %848 = vector.broadcast %847 : f32 to vector<16x8xf32>
    %849 = arith.mulf %846, %848 : vector<16x8xf32>
    %850 = arith.addf %844, %849 : vector<16x8xf32>
    %851 = vector.extract_strided_slice %0 {offsets = [2, 0, 0], sizes = [1, 16, 8], strides = [1, 1, 1]} : vector<4x16x8xf32> to vector<1x16x8xf32>
    %852 = vector.shape_cast %851 : vector<1x16x8xf32> to vector<16x8xf32>
    %c2_268 = arith.constant 2 : index
    %c26_269 = arith.constant 26 : index
    %853 = memref.load %arg2[%c2_268, %c26_269] : memref<4x32xf32, #tpu.memory_space<smem>>
    %854 = vector.broadcast %853 : f32 to vector<16x8xf32>
    %855 = arith.mulf %852, %854 : vector<16x8xf32>
    %856 = arith.addf %850, %855 : vector<16x8xf32>
    %857 = vector.extract_strided_slice %0 {offsets = [3, 0, 0], sizes = [1, 16, 8], strides = [1, 1, 1]} : vector<4x16x8xf32> to vector<1x16x8xf32>
    %858 = vector.shape_cast %857 : vector<1x16x8xf32> to vector<16x8xf32>
    %c3_270 = arith.constant 3 : index
    %c26_271 = arith.constant 26 : index
    %859 = memref.load %arg2[%c3_270, %c26_271] : memref<4x32xf32, #tpu.memory_space<smem>>
    %860 = vector.broadcast %859 : f32 to vector<16x8xf32>
    %861 = arith.mulf %858, %860 : vector<16x8xf32>
    %862 = arith.addf %856, %861 : vector<16x8xf32>
    %cst_272 = arith.constant 0.000000e+00 : f32
    %863 = vector.broadcast %cst_272 : f32 to vector<16x8xf32>
    %864 = arith.maximumf %862, %863 : vector<16x8xf32>
    %c26_273 = arith.constant 26 : index
    %865 = memref.load %arg4[%c26_273] : memref<32xf32, #tpu.memory_space<smem>>
    %866 = vector.broadcast %865 : f32 to vector<16x8xf32>
    %867 = arith.mulf %864, %866 : vector<16x8xf32>
    %868 = arith.addf %836, %867 : vector<16x8xf32>
    %869 = vector.extract_strided_slice %0 {offsets = [0, 0, 0], sizes = [1, 16, 8], strides = [1, 1, 1]} : vector<4x16x8xf32> to vector<1x16x8xf32>
    %870 = vector.shape_cast %869 : vector<1x16x8xf32> to vector<16x8xf32>
    %c0_274 = arith.constant 0 : index
    %c27 = arith.constant 27 : index
    %871 = memref.load %arg2[%c0_274, %c27] : memref<4x32xf32, #tpu.memory_space<smem>>
    %872 = vector.broadcast %871 : f32 to vector<16x8xf32>
    %873 = arith.mulf %870, %872 : vector<16x8xf32>
    %c27_275 = arith.constant 27 : index
    %874 = memref.load %arg3[%c27_275] : memref<32xf32, #tpu.memory_space<smem>>
    %875 = vector.broadcast %874 : f32 to vector<16x8xf32>
    %876 = arith.addf %873, %875 : vector<16x8xf32>
    %877 = vector.extract_strided_slice %0 {offsets = [1, 0, 0], sizes = [1, 16, 8], strides = [1, 1, 1]} : vector<4x16x8xf32> to vector<1x16x8xf32>
    %878 = vector.shape_cast %877 : vector<1x16x8xf32> to vector<16x8xf32>
    %c1_276 = arith.constant 1 : index
    %c27_277 = arith.constant 27 : index
    %879 = memref.load %arg2[%c1_276, %c27_277] : memref<4x32xf32, #tpu.memory_space<smem>>
    %880 = vector.broadcast %879 : f32 to vector<16x8xf32>
    %881 = arith.mulf %878, %880 : vector<16x8xf32>
    %882 = arith.addf %876, %881 : vector<16x8xf32>
    %883 = vector.extract_strided_slice %0 {offsets = [2, 0, 0], sizes = [1, 16, 8], strides = [1, 1, 1]} : vector<4x16x8xf32> to vector<1x16x8xf32>
    %884 = vector.shape_cast %883 : vector<1x16x8xf32> to vector<16x8xf32>
    %c2_278 = arith.constant 2 : index
    %c27_279 = arith.constant 27 : index
    %885 = memref.load %arg2[%c2_278, %c27_279] : memref<4x32xf32, #tpu.memory_space<smem>>
    %886 = vector.broadcast %885 : f32 to vector<16x8xf32>
    %887 = arith.mulf %884, %886 : vector<16x8xf32>
    %888 = arith.addf %882, %887 : vector<16x8xf32>
    %889 = vector.extract_strided_slice %0 {offsets = [3, 0, 0], sizes = [1, 16, 8], strides = [1, 1, 1]} : vector<4x16x8xf32> to vector<1x16x8xf32>
    %890 = vector.shape_cast %889 : vector<1x16x8xf32> to vector<16x8xf32>
    %c3_280 = arith.constant 3 : index
    %c27_281 = arith.constant 27 : index
    %891 = memref.load %arg2[%c3_280, %c27_281] : memref<4x32xf32, #tpu.memory_space<smem>>
    %892 = vector.broadcast %891 : f32 to vector<16x8xf32>
    %893 = arith.mulf %890, %892 : vector<16x8xf32>
    %894 = arith.addf %888, %893 : vector<16x8xf32>
    %cst_282 = arith.constant 0.000000e+00 : f32
    %895 = vector.broadcast %cst_282 : f32 to vector<16x8xf32>
    %896 = arith.maximumf %894, %895 : vector<16x8xf32>
    %c27_283 = arith.constant 27 : index
    %897 = memref.load %arg4[%c27_283] : memref<32xf32, #tpu.memory_space<smem>>
    %898 = vector.broadcast %897 : f32 to vector<16x8xf32>
    %899 = arith.mulf %896, %898 : vector<16x8xf32>
    %900 = arith.addf %868, %899 : vector<16x8xf32>
    %901 = vector.extract_strided_slice %0 {offsets = [0, 0, 0], sizes = [1, 16, 8], strides = [1, 1, 1]} : vector<4x16x8xf32> to vector<1x16x8xf32>
    %902 = vector.shape_cast %901 : vector<1x16x8xf32> to vector<16x8xf32>
    %c0_284 = arith.constant 0 : index
    %c28 = arith.constant 28 : index
    %903 = memref.load %arg2[%c0_284, %c28] : memref<4x32xf32, #tpu.memory_space<smem>>
    %904 = vector.broadcast %903 : f32 to vector<16x8xf32>
    %905 = arith.mulf %902, %904 : vector<16x8xf32>
    %c28_285 = arith.constant 28 : index
    %906 = memref.load %arg3[%c28_285] : memref<32xf32, #tpu.memory_space<smem>>
    %907 = vector.broadcast %906 : f32 to vector<16x8xf32>
    %908 = arith.addf %905, %907 : vector<16x8xf32>
    %909 = vector.extract_strided_slice %0 {offsets = [1, 0, 0], sizes = [1, 16, 8], strides = [1, 1, 1]} : vector<4x16x8xf32> to vector<1x16x8xf32>
    %910 = vector.shape_cast %909 : vector<1x16x8xf32> to vector<16x8xf32>
    %c1_286 = arith.constant 1 : index
    %c28_287 = arith.constant 28 : index
    %911 = memref.load %arg2[%c1_286, %c28_287] : memref<4x32xf32, #tpu.memory_space<smem>>
    %912 = vector.broadcast %911 : f32 to vector<16x8xf32>
    %913 = arith.mulf %910, %912 : vector<16x8xf32>
    %914 = arith.addf %908, %913 : vector<16x8xf32>
    %915 = vector.extract_strided_slice %0 {offsets = [2, 0, 0], sizes = [1, 16, 8], strides = [1, 1, 1]} : vector<4x16x8xf32> to vector<1x16x8xf32>
    %916 = vector.shape_cast %915 : vector<1x16x8xf32> to vector<16x8xf32>
    %c2_288 = arith.constant 2 : index
    %c28_289 = arith.constant 28 : index
    %917 = memref.load %arg2[%c2_288, %c28_289] : memref<4x32xf32, #tpu.memory_space<smem>>
    %918 = vector.broadcast %917 : f32 to vector<16x8xf32>
    %919 = arith.mulf %916, %918 : vector<16x8xf32>
    %920 = arith.addf %914, %919 : vector<16x8xf32>
    %921 = vector.extract_strided_slice %0 {offsets = [3, 0, 0], sizes = [1, 16, 8], strides = [1, 1, 1]} : vector<4x16x8xf32> to vector<1x16x8xf32>
    %922 = vector.shape_cast %921 : vector<1x16x8xf32> to vector<16x8xf32>
    %c3_290 = arith.constant 3 : index
    %c28_291 = arith.constant 28 : index
    %923 = memref.load %arg2[%c3_290, %c28_291] : memref<4x32xf32, #tpu.memory_space<smem>>
    %924 = vector.broadcast %923 : f32 to vector<16x8xf32>
    %925 = arith.mulf %922, %924 : vector<16x8xf32>
    %926 = arith.addf %920, %925 : vector<16x8xf32>
    %cst_292 = arith.constant 0.000000e+00 : f32
    %927 = vector.broadcast %cst_292 : f32 to vector<16x8xf32>
    %928 = arith.maximumf %926, %927 : vector<16x8xf32>
    %c28_293 = arith.constant 28 : index
    %929 = memref.load %arg4[%c28_293] : memref<32xf32, #tpu.memory_space<smem>>
    %930 = vector.broadcast %929 : f32 to vector<16x8xf32>
    %931 = arith.mulf %928, %930 : vector<16x8xf32>
    %932 = arith.addf %900, %931 : vector<16x8xf32>
    %933 = vector.extract_strided_slice %0 {offsets = [0, 0, 0], sizes = [1, 16, 8], strides = [1, 1, 1]} : vector<4x16x8xf32> to vector<1x16x8xf32>
    %934 = vector.shape_cast %933 : vector<1x16x8xf32> to vector<16x8xf32>
    %c0_294 = arith.constant 0 : index
    %c29 = arith.constant 29 : index
    %935 = memref.load %arg2[%c0_294, %c29] : memref<4x32xf32, #tpu.memory_space<smem>>
    %936 = vector.broadcast %935 : f32 to vector<16x8xf32>
    %937 = arith.mulf %934, %936 : vector<16x8xf32>
    %c29_295 = arith.constant 29 : index
    %938 = memref.load %arg3[%c29_295] : memref<32xf32, #tpu.memory_space<smem>>
    %939 = vector.broadcast %938 : f32 to vector<16x8xf32>
    %940 = arith.addf %937, %939 : vector<16x8xf32>
    %941 = vector.extract_strided_slice %0 {offsets = [1, 0, 0], sizes = [1, 16, 8], strides = [1, 1, 1]} : vector<4x16x8xf32> to vector<1x16x8xf32>
    %942 = vector.shape_cast %941 : vector<1x16x8xf32> to vector<16x8xf32>
    %c1_296 = arith.constant 1 : index
    %c29_297 = arith.constant 29 : index
    %943 = memref.load %arg2[%c1_296, %c29_297] : memref<4x32xf32, #tpu.memory_space<smem>>
    %944 = vector.broadcast %943 : f32 to vector<16x8xf32>
    %945 = arith.mulf %942, %944 : vector<16x8xf32>
    %946 = arith.addf %940, %945 : vector<16x8xf32>
    %947 = vector.extract_strided_slice %0 {offsets = [2, 0, 0], sizes = [1, 16, 8], strides = [1, 1, 1]} : vector<4x16x8xf32> to vector<1x16x8xf32>
    %948 = vector.shape_cast %947 : vector<1x16x8xf32> to vector<16x8xf32>
    %c2_298 = arith.constant 2 : index
    %c29_299 = arith.constant 29 : index
    %949 = memref.load %arg2[%c2_298, %c29_299] : memref<4x32xf32, #tpu.memory_space<smem>>
    %950 = vector.broadcast %949 : f32 to vector<16x8xf32>
    %951 = arith.mulf %948, %950 : vector<16x8xf32>
    %952 = arith.addf %946, %951 : vector<16x8xf32>
    %953 = vector.extract_strided_slice %0 {offsets = [3, 0, 0], sizes = [1, 16, 8], strides = [1, 1, 1]} : vector<4x16x8xf32> to vector<1x16x8xf32>
    %954 = vector.shape_cast %953 : vector<1x16x8xf32> to vector<16x8xf32>
    %c3_300 = arith.constant 3 : index
    %c29_301 = arith.constant 29 : index
    %955 = memref.load %arg2[%c3_300, %c29_301] : memref<4x32xf32, #tpu.memory_space<smem>>
    %956 = vector.broadcast %955 : f32 to vector<16x8xf32>
    %957 = arith.mulf %954, %956 : vector<16x8xf32>
    %958 = arith.addf %952, %957 : vector<16x8xf32>
    %cst_302 = arith.constant 0.000000e+00 : f32
    %959 = vector.broadcast %cst_302 : f32 to vector<16x8xf32>
    %960 = arith.maximumf %958, %959 : vector<16x8xf32>
    %c29_303 = arith.constant 29 : index
    %961 = memref.load %arg4[%c29_303] : memref<32xf32, #tpu.memory_space<smem>>
    %962 = vector.broadcast %961 : f32 to vector<16x8xf32>
    %963 = arith.mulf %960, %962 : vector<16x8xf32>
    %964 = arith.addf %932, %963 : vector<16x8xf32>
    %965 = vector.extract_strided_slice %0 {offsets = [0, 0, 0], sizes = [1, 16, 8], strides = [1, 1, 1]} : vector<4x16x8xf32> to vector<1x16x8xf32>
    %966 = vector.shape_cast %965 : vector<1x16x8xf32> to vector<16x8xf32>
    %c0_304 = arith.constant 0 : index
    %c30 = arith.constant 30 : index
    %967 = memref.load %arg2[%c0_304, %c30] : memref<4x32xf32, #tpu.memory_space<smem>>
    %968 = vector.broadcast %967 : f32 to vector<16x8xf32>
    %969 = arith.mulf %966, %968 : vector<16x8xf32>
    %c30_305 = arith.constant 30 : index
    %970 = memref.load %arg3[%c30_305] : memref<32xf32, #tpu.memory_space<smem>>
    %971 = vector.broadcast %970 : f32 to vector<16x8xf32>
    %972 = arith.addf %969, %971 : vector<16x8xf32>
    %973 = vector.extract_strided_slice %0 {offsets = [1, 0, 0], sizes = [1, 16, 8], strides = [1, 1, 1]} : vector<4x16x8xf32> to vector<1x16x8xf32>
    %974 = vector.shape_cast %973 : vector<1x16x8xf32> to vector<16x8xf32>
    %c1_306 = arith.constant 1 : index
    %c30_307 = arith.constant 30 : index
    %975 = memref.load %arg2[%c1_306, %c30_307] : memref<4x32xf32, #tpu.memory_space<smem>>
    %976 = vector.broadcast %975 : f32 to vector<16x8xf32>
    %977 = arith.mulf %974, %976 : vector<16x8xf32>
    %978 = arith.addf %972, %977 : vector<16x8xf32>
    %979 = vector.extract_strided_slice %0 {offsets = [2, 0, 0], sizes = [1, 16, 8], strides = [1, 1, 1]} : vector<4x16x8xf32> to vector<1x16x8xf32>
    %980 = vector.shape_cast %979 : vector<1x16x8xf32> to vector<16x8xf32>
    %c2_308 = arith.constant 2 : index
    %c30_309 = arith.constant 30 : index
    %981 = memref.load %arg2[%c2_308, %c30_309] : memref<4x32xf32, #tpu.memory_space<smem>>
    %982 = vector.broadcast %981 : f32 to vector<16x8xf32>
    %983 = arith.mulf %980, %982 : vector<16x8xf32>
    %984 = arith.addf %978, %983 : vector<16x8xf32>
    %985 = vector.extract_strided_slice %0 {offsets = [3, 0, 0], sizes = [1, 16, 8], strides = [1, 1, 1]} : vector<4x16x8xf32> to vector<1x16x8xf32>
    %986 = vector.shape_cast %985 : vector<1x16x8xf32> to vector<16x8xf32>
    %c3_310 = arith.constant 3 : index
    %c30_311 = arith.constant 30 : index
    %987 = memref.load %arg2[%c3_310, %c30_311] : memref<4x32xf32, #tpu.memory_space<smem>>
    %988 = vector.broadcast %987 : f32 to vector<16x8xf32>
    %989 = arith.mulf %986, %988 : vector<16x8xf32>
    %990 = arith.addf %984, %989 : vector<16x8xf32>
    %cst_312 = arith.constant 0.000000e+00 : f32
    %991 = vector.broadcast %cst_312 : f32 to vector<16x8xf32>
    %992 = arith.maximumf %990, %991 : vector<16x8xf32>
    %c30_313 = arith.constant 30 : index
    %993 = memref.load %arg4[%c30_313] : memref<32xf32, #tpu.memory_space<smem>>
    %994 = vector.broadcast %993 : f32 to vector<16x8xf32>
    %995 = arith.mulf %992, %994 : vector<16x8xf32>
    %996 = arith.addf %964, %995 : vector<16x8xf32>
    %997 = vector.extract_strided_slice %0 {offsets = [0, 0, 0], sizes = [1, 16, 8], strides = [1, 1, 1]} : vector<4x16x8xf32> to vector<1x16x8xf32>
    %998 = vector.shape_cast %997 : vector<1x16x8xf32> to vector<16x8xf32>
    %c0_314 = arith.constant 0 : index
    %c31 = arith.constant 31 : index
    %999 = memref.load %arg2[%c0_314, %c31] : memref<4x32xf32, #tpu.memory_space<smem>>
    %1000 = vector.broadcast %999 : f32 to vector<16x8xf32>
    %1001 = arith.mulf %998, %1000 : vector<16x8xf32>
    %c31_315 = arith.constant 31 : index
    %1002 = memref.load %arg3[%c31_315] : memref<32xf32, #tpu.memory_space<smem>>
    %1003 = vector.broadcast %1002 : f32 to vector<16x8xf32>
    %1004 = arith.addf %1001, %1003 : vector<16x8xf32>
    %1005 = vector.extract_strided_slice %0 {offsets = [1, 0, 0], sizes = [1, 16, 8], strides = [1, 1, 1]} : vector<4x16x8xf32> to vector<1x16x8xf32>
    %1006 = vector.shape_cast %1005 : vector<1x16x8xf32> to vector<16x8xf32>
    %c1_316 = arith.constant 1 : index
    %c31_317 = arith.constant 31 : index
    %1007 = memref.load %arg2[%c1_316, %c31_317] : memref<4x32xf32, #tpu.memory_space<smem>>
    %1008 = vector.broadcast %1007 : f32 to vector<16x8xf32>
    %1009 = arith.mulf %1006, %1008 : vector<16x8xf32>
    %1010 = arith.addf %1004, %1009 : vector<16x8xf32>
    %1011 = vector.extract_strided_slice %0 {offsets = [2, 0, 0], sizes = [1, 16, 8], strides = [1, 1, 1]} : vector<4x16x8xf32> to vector<1x16x8xf32>
    %1012 = vector.shape_cast %1011 : vector<1x16x8xf32> to vector<16x8xf32>
    %c2_318 = arith.constant 2 : index
    %c31_319 = arith.constant 31 : index
    %1013 = memref.load %arg2[%c2_318, %c31_319] : memref<4x32xf32, #tpu.memory_space<smem>>
    %1014 = vector.broadcast %1013 : f32 to vector<16x8xf32>
    %1015 = arith.mulf %1012, %1014 : vector<16x8xf32>
    %1016 = arith.addf %1010, %1015 : vector<16x8xf32>
    %1017 = vector.extract_strided_slice %0 {offsets = [3, 0, 0], sizes = [1, 16, 8], strides = [1, 1, 1]} : vector<4x16x8xf32> to vector<1x16x8xf32>
    %1018 = vector.shape_cast %1017 : vector<1x16x8xf32> to vector<16x8xf32>
    %c3_320 = arith.constant 3 : index
    %c31_321 = arith.constant 31 : index
    %1019 = memref.load %arg2[%c3_320, %c31_321] : memref<4x32xf32, #tpu.memory_space<smem>>
    %1020 = vector.broadcast %1019 : f32 to vector<16x8xf32>
    %1021 = arith.mulf %1018, %1020 : vector<16x8xf32>
    %1022 = arith.addf %1016, %1021 : vector<16x8xf32>
    %cst_322 = arith.constant 0.000000e+00 : f32
    %1023 = vector.broadcast %cst_322 : f32 to vector<16x8xf32>
    %1024 = arith.maximumf %1022, %1023 : vector<16x8xf32>
    %c31_323 = arith.constant 31 : index
    %1025 = memref.load %arg4[%c31_323] : memref<32xf32, #tpu.memory_space<smem>>
    %1026 = vector.broadcast %1025 : f32 to vector<16x8xf32>
    %1027 = arith.mulf %1024, %1026 : vector<16x8xf32>
    %1028 = arith.addf %996, %1027 : vector<16x8xf32>
    %1029 = math.absf %1028 : vector<16x8xf32>
    %cst_324 = arith.constant 0.000000e+00 : f32
    %1030 = vector.broadcast %cst_324 : f32 to vector<16x8xf32>
    %1031 = arith.subf %1030, %1029 : vector<16x8xf32>
    %1032 = math.exp %1031 : vector<16x8xf32>
    %1033 = math.log1p %1032 : vector<16x8xf32>
    %cst_325 = arith.constant 0.000000e+00 : f32
    %1034 = vector.broadcast %cst_325 : f32 to vector<16x8xf32>
    %1035 = arith.maximumf %1028, %1034 : vector<16x8xf32>
    %1036 = arith.addf %1033, %1035 : vector<16x8xf32>
    %c0_326 = arith.constant 0 : index
    %c0_327 = arith.constant 0 : index
    %1037 = vector.load %arg6[%c0_326, %c0_327] : memref<8x16xf32, #tpu.memory_space<vmem>>, vector<8x16xf32>
    %cst_328 = arith.constant dense<0.000000e+00> : vector<16x16xf32>
    %1038 = tpu.matmul %1036, %1037, %cst_328 {dimension_numbers = #tpu.dot_dimension_numbers<[1], [0], [0], [1], [0, 0, 1, 1], [], []>} : vector<16x8xf32>, vector<8x16xf32>, vector<16x16xf32> -> vector<16x16xf32>
    %c0_329 = arith.constant 0 : index
    %c0_330 = arith.constant 0 : index
    %1039 = vector.load %arg7[%c0_329, %c0_330] : memref<16x16xf32, #tpu.memory_space<vmem>>, vector<16x16xf32>
    tpu.vector_store %arg7[%c0_329, %c0_330], %1038 {strides = array<i32>} : memref<16x16xf32, #tpu.memory_space<vmem>>, vector<16x16xf32>,
    return
  }
  func.func @transform_0(%arg0: i32) -> (i32, i32, i32) {
    %c0_i32 = arith.constant 0 : i32
    %c0_i32_0 = arith.constant 0 : i32
    %c0_i32_1 = arith.constant 0 : i32
    return %c0_i32, %arg0, %c0_i32_0 : i32, i32, i32
  }
  func.func @transform_1(%arg0: i32) -> (i32, i32) {
    %c0_i32 = arith.constant 0 : i32
    %c0_i32_0 = arith.constant 0 : i32
    %c0_i32_1 = arith.constant 0 : i32
    return %c0_i32, %c0_i32_0 : i32, i32
  }
  func.func @transform_2(%arg0: i32) -> i32 {
    %c0_i32 = arith.constant 0 : i32
    %c0_i32_0 = arith.constant 0 : i32
    return %c0_i32 : i32
  }
  func.func @transform_3(%arg0: i32) -> i32 {
    %c0_i32 = arith.constant 0 : i32
    %c0_i32_0 = arith.constant 0 : i32
    return %c0_i32 : i32
  }
  func.func @transform_4(%arg0: i32) -> i32 {
    %c0_i32 = arith.constant 0 : i32
    %c0_i32_0 = arith.constant 0 : i32
    return %c0_i32 : i32
  }
  func.func @transform_5(%arg0: i32) -> (i32, i32) {
    %c0_i32 = arith.constant 0 : i32
    %c0_i32_0 = arith.constant 0 : i32
    %c0_i32_1 = arith.constant 0 : i32
    return %c0_i32, %c0_i32_0 : i32, i32
  }
  func.func @transform_6(%arg0: i32) -> (i32, i32) {
    %c0_i32 = arith.constant 0 : i32
    %c0_i32_0 = arith.constant 0 : i32
    return %arg0, %c0_i32 : i32, i32
  }
}

</mosaic_0001>

<llo_original>
// kernel: tpu_custom_call.1
$region0: #{tpu_custom_call.1}
  #allocation0 [shape = 'u32[]', space=smem, size = 0x4, offset = 0x4, fixed_abs, tag = 'smem constant byte address 0x4 - core index']
  #allocation1 [shape = 'u32[144,128]{1,0:T(1,128)}', space=vmem, size = 0x12000, scoped, tag = 'internal scratch']
  #allocation2 [shape = 'f32[1]{0:T(128)S(6)}', space=smem, size = 0x200, scoped, tag = 'scoped memory for tpu_custom_call.1']
  %s0 = inlined_call_operand.vmem [shape: f32[4,16,8], index: 0, kind: input, shape index: {}]
  %s1 = inlined_call_operand.vmem [shape: f32[4,32], index: 1, kind: input, shape index: {}]
  %s2 = inlined_call_operand.vmem [shape: f32[32], index: 2, kind: input, shape index: {}]
  %s3 = inlined_call_operand.vmem [shape: f32[32], index: 3, kind: input, shape index: {}]
  %s4 = inlined_call_operand.<no memory space> [shape: f32[1], index: 4, kind: input, shape index: {}]
  %s5 = inlined_call_operand.vmem [shape: f32[8,16], index: 5, kind: input, shape index: {}]
  %s6 = inlined_call_operand.hbm [shape: f32[16,16], index: 6, kind: output, shape index: {}]
  %s7 = sld [smem:[#allocation0]]
  $region46: #{tpu_custom_call.1} parent=0
    _
  %s9 = ssub.s32 1, %s7
  %s10 = scalar_select 0, %s9, %s7
  %11 = sst [smem:[#allocation2]] %s4
  $region1: #{tpu_custom_call.1} parent=0
    #allocation3 [shape = 'u8[2048]{0}', space=smem, size = 0x800, scoped, tag = 'input window, operand 1, single buffered']
    #allocation4 [shape = 's32[1]{0}', space=sflag, size = 0x4, scoped, tag = 'scoped memory for tpu_custom_call.1']
    #allocation5 [shape = 's32[1]{0}', space=sflag, size = 0x4, scoped, tag = 'scoped memory for tpu_custom_call.1']
    #allocation6 [shape = 'u8[512]{0}', space=smem, size = 0x200, scoped, tag = 'input window, operand 2, single buffered']
    #allocation7 [shape = 's32[1]{0}', space=sflag, size = 0x4, scoped, tag = 'scoped memory for tpu_custom_call.1']
    #allocation8 [shape = 'u8[512]{0}', space=smem, size = 0x200, scoped, tag = 'input window, operand 3, single buffered']
    #allocation9 [shape = 'u8[8192]{0}', space=vmem, size = 0x2000, scoped, tag = 'output window, operand 0, single buffered']
    %12 = vsyncpa [#allocation5], 0
    %13 = vsyncpa [#allocation7], 0
    %14 = vsyncpa [#allocation4], 0
    // Predicated region
    $region2: #{tpu_custom_call.1} parent=1 // pred_check
      _
    $region3: #{tpu_custom_call.1} parent=1 // pred_check_branch
      %16 = sbr.rel (0) target = $region5
    $region4: #{tpu_custom_call.1} parent=1 // pred_region
      _
    $region5: #{tpu_custom_call.1} parent=1 // pred_fallthru
      _
    // Predicated region
    $region6: #{tpu_custom_call.1} parent=1 // pred_check
      _
    $region7: #{tpu_custom_call.1} parent=1 // pred_check_branch
      %18 = sbr.rel (0) target = $region9
    $region8: #{tpu_custom_call.1} parent=1 // pred_region
      %s20 = ssub.s32 64, 64
      %21 = vsyncadd [#allocation5], %s20
      %s23 = sshll.u32 %s1, 4
      %s24 = int_to_ptr.vmem [resolvable:$true] %s23
      %26 = dma.vmem_to_smem %s24, 64, [#allocation3], [#allocation5]
    $region9: #{tpu_custom_call.1} parent=1 // pred_fallthru
      _
    // Predicated region
    $region10: #{tpu_custom_call.1} parent=1 // pred_check
      _
    $region11: #{tpu_custom_call.1} parent=1 // pred_check_branch
      %28 = sbr.rel (0) target = $region13
    $region12: #{tpu_custom_call.1} parent=1 // pred_region
      %s30 = ssub.s32 16, 16
      %31 = vsyncadd [#allocation7], %s30
      %s33 = sshll.u32 %s2, 4
      %s34 = int_to_ptr.vmem [resolvable:$true] %s33
      %36 = dma.vmem_to_smem %s34, 16, [#allocation6], [#allocation7]
    $region13: #{tpu_custom_call.1} parent=1 // pred_fallthru
      _
    // Predicated region
    $region14: #{tpu_custom_call.1} parent=1 // pred_check
      _
    $region15: #{tpu_custom_call.1} parent=1 // pred_check_branch
      %38 = sbr.rel (0) target = $region17
    $region16: #{tpu_custom_call.1} parent=1 // pred_region
      %s40 = ssub.s32 16, 16
      %41 = vsyncadd [#allocation7], %s40
      %s43 = sshll.u32 %s3, 4
      %s44 = int_to_ptr.vmem [resolvable:$true] %s43
      %46 = dma.vmem_to_smem %s44, 16, [#allocation8], [#allocation7]
    $region17: #{tpu_custom_call.1} parent=1 // pred_fallthru
      _
    // Predicated region
    $region18: #{tpu_custom_call.1} parent=1 // pred_check
      _
    $region19: #{tpu_custom_call.1} parent=1 // pred_check_branch
      %48 = sbr.rel (0) target = $region21
    $region20: #{tpu_custom_call.1} parent=1 // pred_region
      _
    $region21: #{tpu_custom_call.1} parent=1 // pred_fallthru
      _
    // Predicated region
    $region22: #{tpu_custom_call.1} parent=1 // pred_check
      _
    $region23: #{tpu_custom_call.1} parent=1 // pred_check_branch
      %50 = sbr.rel (0) target = $region25
    $region24: #{tpu_custom_call.1} parent=1 // pred_region
      _
    $region25: #{tpu_custom_call.1} parent=1 // pred_fallthru
      _
    // Predicated region
    $region26: #{tpu_custom_call.1} parent=1 // pred_check
      _
    $region27: #{tpu_custom_call.1} parent=1 // pred_check_branch
      %52 = sbr.rel (0) target = $region29
    $region28: #{tpu_custom_call.1} parent=1 // pred_region
      %53 = dma.done [#allocation5], 64
    $region29: #{tpu_custom_call.1} parent=1 // pred_fallthru
      _
    // Predicated region
    $region30: #{tpu_custom_call.1} parent=1 // pred_check
      _
    $region31: #{tpu_custom_call.1} parent=1 // pred_check_branch
      %55 = sbr.rel (0) target = $region33
    $region32: #{tpu_custom_call.1} parent=1 // pred_region
      %56 = dma.done [#allocation7], 16
    $region33: #{tpu_custom_call.1} parent=1 // pred_fallthru
      _
    // Predicated region
    $region34: #{tpu_custom_call.1} parent=1 // pred_check
      _
    $region35: #{tpu_custom_call.1} parent=1 // pred_check_branch
      %58 = sbr.rel (0) target = $region37
    $region36: #{tpu_custom_call.1} parent=1 // pred_region
      %59 = dma.done [#allocation7], 16
    $region37: #{tpu_custom_call.1} parent=1 // pred_fallthru
      _
    %60 = sfence
    %v61 = vld [vmem:[%s0] sm:$0xff]
    %v62 = vld [vmem:[%s0 + $0x8] sm:$0xff]
    %v63 = vld [vmem:[%s0 + $0x10] sm:$0xff]
    %v64 = vld [vmem:[%s0 + $0x18] sm:$0xff]
    %v65 = vld [vmem:[%s0 + $0x20] sm:$0xff]
    %v66 = vld [vmem:[%s0 + $0x28] sm:$0xff]
    %v67 = vld [vmem:[%s0 + $0x30] sm:$0xff]
    %v68 = vld [vmem:[%s0 + $0x38] sm:$0xff]
    %s69 = sld [smem:[#allocation2]]
    %v70 = vstv %s69
    %v71 = vadd.f32 %v70, 0.0
    %s72 = sld [smem:[#allocation3]]
    %v73 = vstv %s72
    %v74 = vmul.f32 %v61, %v73
    %v75 = vmul.f32 %v62, %v73
    %s76 = sld [smem:[#allocation6]]
    %v77 = vstv %s76
    %v78 = vadd.f32 %v74, %v77
    %v79 = vadd.f32 %v75, %v77
    %s80 = sld [smem:[#allocation3 + $0x80]]
    %v81 = vstv %s80
    %v82 = vmul.f32 %v63, %v81
    %v83 = vmul.f32 %v64, %v81
    %v84 = vadd.f32 %v78, %v82
    %v85 = vadd.f32 %v79, %v83
    %s86 = sld [smem:[#allocation3 + $0x100]]
    %v87 = vstv %s86
    %v88 = vmul.f32 %v65, %v87
    %v89 = vmul.f32 %v66, %v87
    %v90 = vadd.f32 %v84, %v88
    %v91 = vadd.f32 %v85, %v89
    %s92 = sld [smem:[#allocation3 + $0x180]]
    %v93 = vstv %s92
    %v94 = vmul.f32 %v67, %v93
    %v95 = vmul.f32 %v68, %v93
    %v96 = vadd.f32 %v90, %v94
    %v97 = vadd.f32 %v91, %v95
    %v98 = vmax.f32 %v96, 0.0
    %v99 = vmax.f32 %v97, 0.0
    %s100 = sld [smem:[#allocation8]]
    %v101 = vstv %s100
    %v102 = vmul.f32 %v98, %v101
    %v103 = vmul.f32 %v99, %v101
    %v104 = vadd.f32 %v71, %v102
    %v105 = vadd.f32 %v71, %v103
    %s106 = sld [smem:[#allocation3 + $0x1]]
    %v107 = vstv %s106
    %v108 = vmul.f32 %v61, %v107
    %v109 = vmul.f32 %v62, %v107
    %s110 = sld [smem:[#allocation6 + $0x1]]
    %v111 = vstv %s110
    %v112 = vadd.f32 %v108, %v111
    %v113 = vadd.f32 %v109, %v111
    %s114 = sld [smem:[#allocation3 + $0x81]]
    %v115 = vstv %s114
    %v116 = vmul.f32 %v63, %v115
    %v117 = vmul.f32 %v64, %v115
    %v118 = vadd.f32 %v112, %v116
    %v119 = vadd.f32 %v113, %v117
    %s120 = sld [smem:[#allocation3 + $0x101]]
    %v121 = vstv %s120
    %v122 = vmul.f32 %v65, %v121
    %v123 = vmul.f32 %v66, %v121
    %v124 = vadd.f32 %v118, %v122
    %v125 = vadd.f32 %v119, %v123
    %s126 = sld [smem:[#allocation3 + $0x181]]
    %v127 = vstv %s126
    %v128 = vmul.f32 %v67, %v127
    %v129 = vmul.f32 %v68, %v127
    %v130 = vadd.f32 %v124, %v128
    %v131 = vadd.f32 %v125, %v129
    %v132 = vmax.f32 %v130, 0.0
    %v133 = vmax.f32 %v131, 0.0
    %s134 = sld [smem:[#allocation8 + $0x1]]
    %v135 = vstv %s134
    %v136 = vmul.f32 %v132, %v135
    %v137 = vmul.f32 %v133, %v135
    %v138 = vadd.f32 %v104, %v136
    %v139 = vadd.f32 %v105, %v137
    %s140 = sld [smem:[#allocation3 + $0x2]]
    %v141 = vstv %s140
    %v142 = vmul.f32 %v61, %v141
    %v143 = vmul.f32 %v62, %v141
    %s144 = sld [smem:[#allocation6 + $0x2]]
    %v145 = vstv %s144
    %v146 = vadd.f32 %v142, %v145
    %v147 = vadd.f32 %v143, %v145
    %s148 = sld [smem:[#allocation3 + $0x82]]
    %v149 = vstv %s148
    %v150 = vmul.f32 %v63, %v149
    %v151 = vmul.f32 %v64, %v149
    %v152 = vadd.f32 %v146, %v150
    %v153 = vadd.f32 %v147, %v151
    %s154 = sld [smem:[#allocation3 + $0x102]]
    %v155 = vstv %s154
    %v156 = vmul.f32 %v65, %v155
    %v157 = vmul.f32 %v66, %v155
    %v158 = vadd.f32 %v152, %v156
    %v159 = vadd.f32 %v153, %v157
    %s160 = sld [smem:[#allocation3 + $0x182]]
    %v161 = vstv %s160
    %v162 = vmul.f32 %v67, %v161
    %v163 = vmul.f32 %v68, %v161
    %v164 = vadd.f32 %v158, %v162
    %v165 = vadd.f32 %v159, %v163
    %v166 = vmax.f32 %v164, 0.0
    %v167 = vmax.f32 %v165, 0.0
    %s168 = sld [smem:[#allocation8 + $0x2]]
    %v169 = vstv %s168
    %v170 = vmul.f32 %v166, %v169
    %v171 = vmul.f32 %v167, %v169
    %v172 = vadd.f32 %v138, %v170
    %v173 = vadd.f32 %v139, %v171
    %s174 = sld [smem:[#allocation3 + $0x3]]
    %v175 = vstv %s174
    %v176 = vmul.f32 %v61, %v175
    %v177 = vmul.f32 %v62, %v175
    %s178 = sld [smem:[#allocation6 + $0x3]]
    %v179 = vstv %s178
    %v180 = vadd.f32 %v176, %v179
    %v181 = vadd.f32 %v177, %v179
    %s182 = sld [smem:[#allocation3 + $0x83]]
    %v183 = vstv %s182
    %v184 = vmul.f32 %v63, %v183
    %v185 = vmul.f32 %v64, %v183
    %v186 = vadd.f32 %v180, %v184
    %v187 = vadd.f32 %v181, %v185
    %s188 = sld [smem:[#allocation3 + $0x103]]
    %v189 = vstv %s188
    %v190 = vmul.f32 %v65, %v189
    %v191 = vmul.f32 %v66, %v189
    %v192 = vadd.f32 %v186, %v190
    %v193 = vadd.f32 %v187, %v191
    %s194 = sld [smem:[#allocation3 + $0x183]]
    %v195 = vstv %s194
    %v196 = vmul.f32 %v67, %v195
    %v197 = vmul.f32 %v68, %v195
    %v198 = vadd.f32 %v192, %v196
    %v199 = vadd.f32 %v193, %v197
    %v200 = vmax.f32 %v198, 0.0
    %v201 = vmax.f32 %v199, 0.0
    %s202 = sld [smem:[#allocation8 + $0x3]]
    %v203 = vstv %s202
    %v204 = vmul.f32 %v200, %v203
    %v205 = vmul.f32 %v201, %v203
    %v206 = vadd.f32 %v172, %v204
    %v207 = vadd.f32 %v173, %v205
    %s208 = sld [smem:[#allocation3 + $0x4]]
    %v209 = vstv %s208
    %v210 = vmul.f32 %v61, %v209
    %v211 = vmul.f32 %v62, %v209
    %s212 = sld [smem:[#allocation6 + $0x4]]
    %v213 = vstv %s212
    %v214 = vadd.f32 %v210, %v213
    %v215 = vadd.f32 %v211, %v213
    %s216 = sld [smem:[#allocation3 + $0x84]]
    %v217 = vstv %s216
    %v218 = vmul.f32 %v63, %v217
    %v219 = vmul.f32 %v64, %v217
    %v220 = vadd.f32 %v214, %v218
    %v221 = vadd.f32 %v215, %v219
    %s222 = sld [smem:[#allocation3 + $0x104]]
    %v223 = vstv %s222
    %v224 = vmul.f32 %v65, %v223
    %v225 = vmul.f32 %v66, %v223
    %v226 = vadd.f32 %v220, %v224
    %v227 = vadd.f32 %v221, %v225
    %s228 = sld [smem:[#allocation3 + $0x184]]
    %v229 = vstv %s228
    %v230 = vmul.f32 %v67, %v229
    %v231 = vmul.f32 %v68, %v229
    %v232 = vadd.f32 %v226, %v230
    %v233 = vadd.f32 %v227, %v231
    %v234 = vmax.f32 %v232, 0.0
    %v235 = vmax.f32 %v233, 0.0
    %s236 = sld [smem:[#allocation8 + $0x4]]
    %v237 = vstv %s236
    %v238 = vmul.f32 %v234, %v237
    %v239 = vmul.f32 %v235, %v237
    %v240 = vadd.f32 %v206, %v238
    %v241 = vadd.f32 %v207, %v239
    %s242 = sld [smem:[#allocation3 + $0x5]]
    %v243 = vstv %s242
    %v244 = vmul.f32 %v61, %v243
    %v245 = vmul.f32 %v62, %v243
    %s246 = sld [smem:[#allocation6 + $0x5]]
    %v247 = vstv %s246
    %v248 = vadd.f32 %v244, %v247
    %v249 = vadd.f32 %v245, %v247
    %s250 = sld [smem:[#allocation3 + $0x85]]
    %v251 = vstv %s250
    %v252 = vmul.f32 %v63, %v251
    %v253 = vmul.f32 %v64, %v251
    %v254 = vadd.f32 %v248, %v252
    %v255 = vadd.f32 %v249, %v253
    %s256 = sld [smem:[#allocation3 + $0x105]]
    %v257 = vstv %s256
    %v258 = vmul.f32 %v65, %v257
    %v259 = vmul.f32 %v66, %v257
    %v260 = vadd.f32 %v254, %v258
    %v261 = vadd.f32 %v255, %v259
    %s262 = sld [smem:[#allocation3 + $0x185]]
    %v263 = vstv %s262
    %v264 = vmul.f32 %v67, %v263
    %v265 = vmul.f32 %v68, %v263
    %v266 = vadd.f32 %v260, %v264
    %v267 = vadd.f32 %v261, %v265
    %v268 = vmax.f32 %v266, 0.0
    %v269 = vmax.f32 %v267, 0.0
    %s270 = sld [smem:[#allocation8 + $0x5]]
    %v271 = vstv %s270
    %v272 = vmul.f32 %v268, %v271
    %v273 = vmul.f32 %v269, %v271
    %v274 = vadd.f32 %v240, %v272
    %v275 = vadd.f32 %v241, %v273
    %s276 = sld [smem:[#allocation3 + $0x6]]
    %v277 = vstv %s276
    %v278 = vmul.f32 %v61, %v277
    %v279 = vmul.f32 %v62, %v277
    %s280 = sld [smem:[#allocation6 + $0x6]]
    %v281 = vstv %s280
    %v282 = vadd.f32 %v278, %v281
    %v283 = vadd.f32 %v279, %v281
    %s284 = sld [smem:[#allocation3 + $0x86]]
    %v285 = vstv %s284
    %v286 = vmul.f32 %v63, %v285
    %v287 = vmul.f32 %v64, %v285
    %v288 = vadd.f32 %v282, %v286
    %v289 = vadd.f32 %v283, %v287
    %s290 = sld [smem:[#allocation3 + $0x106]]
    %v291 = vstv %s290
    %v292 = vmul.f32 %v65, %v291
    %v293 = vmul.f32 %v66, %v291
    %v294 = vadd.f32 %v288, %v292
    %v295 = vadd.f32 %v289, %v293
    %s296 = sld [smem:[#allocation3 + $0x186]]
    %v297 = vstv %s296
    %v298 = vmul.f32 %v67, %v297
    %v299 = vmul.f32 %v68, %v297
    %v300 = vadd.f32 %v294, %v298
    %v301 = vadd.f32 %v295, %v299
    %v302 = vmax.f32 %v300, 0.0
    %v303 = vmax.f32 %v301, 0.0
    %s304 = sld [smem:[#allocation8 + $0x6]]
    %v305 = vstv %s304
    %v306 = vmul.f32 %v302, %v305
    %v307 = vmul.f32 %v303, %v305
    %v308 = vadd.f32 %v274, %v306
    %v309 = vadd.f32 %v275, %v307
    %s310 = sld [smem:[#allocation3 + $0x7]]
    %v311 = vstv %s310
    %v312 = vmul.f32 %v61, %v311
    %v313 = vmul.f32 %v62, %v311
    %s314 = sld [smem:[#allocation6 + $0x7]]
    %v315 = vstv %s314
    %v316 = vadd.f32 %v312, %v315
    %v317 = vadd.f32 %v313, %v315
    %s318 = sld [smem:[#allocation3 + $0x87]]
    %v319 = vstv %s318
    %v320 = vmul.f32 %v63, %v319
    %v321 = vmul.f32 %v64, %v319
    %v322 = vadd.f32 %v316, %v320
    %v323 = vadd.f32 %v317, %v321
    %s324 = sld [smem:[#allocation3 + $0x107]]
    %v325 = vstv %s324
    %v326 = vmul.f32 %v65, %v325
    %v327 = vmul.f32 %v66, %v325
    %v328 = vadd.f32 %v322, %v326
    %v329 = vadd.f32 %v323, %v327
    %s330 = sld [smem:[#allocation3 + $0x187]]
    %v331 = vstv %s330
    %v332 = vmul.f32 %v67, %v331
    %v333 = vmul.f32 %v68, %v331
    %v334 = vadd.f32 %v328, %v332
    %v335 = vadd.f32 %v329, %v333
    %v336 = vmax.f32 %v334, 0.0
    %v337 = vmax.f32 %v335, 0.0
    %s338 = sld [smem:[#allocation8 + $0x7]]
    %v339 = vstv %s338
    %v340 = vmul.f32 %v336, %v339
    %v341 = vmul.f32 %v337, %v339
    %v342 = vadd.f32 %v308, %v340
    %v343 = vadd.f32 %v309, %v341
    %s344 = sld [smem:[#allocation3 + $0x8]]
    %v345 = vstv %s344
    %v346 = vmul.f32 %v61, %v345
    %v347 = vmul.f32 %v62, %v345
    %s348 = sld [smem:[#allocation6 + $0x8]]
    %v349 = vstv %s348
    %v350 = vadd.f32 %v346, %v349
    %v351 = vadd.f32 %v347, %v349
    %s352 = sld [smem:[#allocation3 + $0x88]]
    %v353 = vstv %s352
    %v354 = vmul.f32 %v63, %v353
    %v355 = vmul.f32 %v64, %v353
    %v356 = vadd.f32 %v350, %v354
    %v357 = vadd.f32 %v351, %v355
    %s358 = sld [smem:[#allocation3 + $0x108]]
    %v359 = vstv %s358
    %v360 = vmul.f32 %v65, %v359
    %v361 = vmul.f32 %v66, %v359
    %v362 = vadd.f32 %v356, %v360
    %v363 = vadd.f32 %v357, %v361
    %s364 = sld [smem:[#allocation3 + $0x188]]
    %v365 = vstv %s364
    %v366 = vmul.f32 %v67, %v365
    %v367 = vmul.f32 %v68, %v365
    %v368 = vadd.f32 %v362, %v366
    %v369 = vadd.f32 %v363, %v367
    %v370 = vmax.f32 %v368, 0.0
    %v371 = vmax.f32 %v369, 0.0
    %s372 = sld [smem:[#allocation8 + $0x8]]
    %v373 = vstv %s372
    %v374 = vmul.f32 %v370, %v373
    %v375 = vmul.f32 %v371, %v373
    %v376 = vadd.f32 %v342, %v374
    %v377 = vadd.f32 %v343, %v375
    %s378 = sld [smem:[#allocation3 + $0x9]]
    %v379 = vstv %s378
    %v380 = vmul.f32 %v61, %v379
    %v381 = vmul.f32 %v62, %v379
    %s382 = sld [smem:[#allocation6 + $0x9]]
    %v383 = vstv %s382
    %v384 = vadd.f32 %v380, %v383
    %v385 = vadd.f32 %v381, %v383
    %s386 = sld [smem:[#allocation3 + $0x89]]
    %v387 = vstv %s386
    %v388 = vmul.f32 %v63, %v387
    %v389 = vmul.f32 %v64, %v387
    %v390 = vadd.f32 %v384, %v388
    %v391 = vadd.f32 %v385, %v389
    %s392 = sld [smem:[#allocation3 + $0x109]]
    %v393 = vstv %s392
    %v394 = vmul.f32 %v65, %v393
    %v395 = vmul.f32 %v66, %v393
    %v396 = vadd.f32 %v390, %v394
    %v397 = vadd.f32 %v391, %v395
    %s398 = sld [smem:[#allocation3 + $0x189]]
    %v399 = vstv %s398
    %v400 = vmul.f32 %v67, %v399
    %v401 = vmul.f32 %v68, %v399
    %v402 = vadd.f32 %v396, %v400
    %v403 = vadd.f32 %v397, %v401
    %v404 = vmax.f32 %v402, 0.0
    %v405 = vmax.f32 %v403, 0.0
    %s406 = sld [smem:[#allocation8 + $0x9]]
    %v407 = vstv %s406
    %v408 = vmul.f32 %v404, %v407
    %v409 = vmul.f32 %v405, %v407
    %v410 = vadd.f32 %v376, %v408
    %v411 = vadd.f32 %v377, %v409
    %s412 = sld [smem:[#allocation3 + $0xa]]
    %v413 = vstv %s412
    %v414 = vmul.f32 %v61, %v413
    %v415 = vmul.f32 %v62, %v413
    %s416 = sld [smem:[#allocation6 + $0xa]]
    %v417 = vstv %s416
    %v418 = vadd.f32 %v414, %v417
    %v419 = vadd.f32 %v415, %v417
    %s420 = sld [smem:[#allocation3 + $0x8a]]
    %v421 = vstv %s420
    %v422 = vmul.f32 %v63, %v421
    %v423 = vmul.f32 %v64, %v421
    %v424 = vadd.f32 %v418, %v422
    %v425 = vadd.f32 %v419, %v423
    %s426 = sld [smem:[#allocation3 + $0x10a]]
    %v427 = vstv %s426
    %v428 = vmul.f32 %v65, %v427
    %v429 = vmul.f32 %v66, %v427
    %v430 = vadd.f32 %v424, %v428
    %v431 = vadd.f32 %v425, %v429
    %s432 = sld [smem:[#allocation3 + $0x18a]]
    %v433 = vstv %s432
    %v434 = vmul.f32 %v67, %v433
    %v435 = vmul.f32 %v68, %v433
    %v436 = vadd.f32 %v430, %v434
    %v437 = vadd.f32 %v431, %v435
    %v438 = vmax.f32 %v436, 0.0
    %v439 = vmax.f32 %v437, 0.0
    %s440 = sld [smem:[#allocation8 + $0xa]]
    %v441 = vstv %s440
    %v442 = vmul.f32 %v438, %v441
    %v443 = vmul.f32 %v439, %v441
    %v444 = vadd.f32 %v410, %v442
    %v445 = vadd.f32 %v411, %v443
    %s446 = sld [smem:[#allocation3 + $0xb]]
    %v447 = vstv %s446
    %v448 = vmul.f32 %v61, %v447
    %v449 = vmul.f32 %v62, %v447
    %s450 = sld [smem:[#allocation6 + $0xb]]
    %v451 = vstv %s450
    %v452 = vadd.f32 %v448, %v451
    %v453 = vadd.f32 %v449, %v451
    %s454 = sld [smem:[#allocation3 + $0x8b]]
    %v455 = vstv %s454
    %v456 = vmul.f32 %v63, %v455
    %v457 = vmul.f32 %v64, %v455
    %v458 = vadd.f32 %v452, %v456
    %v459 = vadd.f32 %v453, %v457
    %s460 = sld [smem:[#allocation3 + $0x10b]]
    %v461 = vstv %s460
    %v462 = vmul.f32 %v65, %v461
    %v463 = vmul.f32 %v66, %v461
    %v464 = vadd.f32 %v458, %v462
    %v465 = vadd.f32 %v459, %v463
    %s466 = sld [smem:[#allocation3 + $0x18b]]
    %v467 = vstv %s466
    %v468 = vmul.f32 %v67, %v467
    %v469 = vmul.f32 %v68, %v467
    %v470 = vadd.f32 %v464, %v468
    %v471 = vadd.f32 %v465, %v469
    %v472 = vmax.f32 %v470, 0.0
    %v473 = vmax.f32 %v471, 0.0
    %s474 = sld [smem:[#allocation8 + $0xb]]
    %v475 = vstv %s474
    %v476 = vmul.f32 %v472, %v475
    %v477 = vmul.f32 %v473, %v475
    %v478 = vadd.f32 %v444, %v476
    %v479 = vadd.f32 %v445, %v477
    %s480 = sld [smem:[#allocation3 + $0xc]]
    %v481 = vstv %s480
    %v482 = vmul.f32 %v61, %v481
    %v483 = vmul.f32 %v62, %v481
    %s484 = sld [smem:[#allocation6 + $0xc]]
    %v485 = vstv %s484
    %v486 = vadd.f32 %v482, %v485
    %v487 = vadd.f32 %v483, %v485
    %s488 = sld [smem:[#allocation3 + $0x8c]]
    %v489 = vstv %s488
    %v490 = vmul.f32 %v63, %v489
    %v491 = vmul.f32 %v64, %v489
    %v492 = vadd.f32 %v486, %v490
    %v493 = vadd.f32 %v487, %v491
    %s494 = sld [smem:[#allocation3 + $0x10c]]
    %v495 = vstv %s494
    %v496 = vmul.f32 %v65, %v495
    %v497 = vmul.f32 %v66, %v495
    %v498 = vadd.f32 %v492, %v496
    %v499 = vadd.f32 %v493, %v497
    %s500 = sld [smem:[#allocation3 + $0x18c]]
    %v501 = vstv %s500
    %v502 = vmul.f32 %v67, %v501
    %v503 = vmul.f32 %v68, %v501
    %v504 = vadd.f32 %v498, %v502
    %v505 = vadd.f32 %v499, %v503
    %v506 = vmax.f32 %v504, 0.0
    %v507 = vmax.f32 %v505, 0.0
    %s508 = sld [smem:[#allocation8 + $0xc]]
    %v509 = vstv %s508
    %v510 = vmul.f32 %v506, %v509
    %v511 = vmul.f32 %v507, %v509
    %v512 = vadd.f32 %v478, %v510
    %v513 = vadd.f32 %v479, %v511
    %s514 = sld [smem:[#allocation3 + $0xd]]
    %v515 = vstv %s514
    %v516 = vmul.f32 %v61, %v515
    %v517 = vmul.f32 %v62, %v515
    %s518 = sld [smem:[#allocation6 + $0xd]]
    %v519 = vstv %s518
    %v520 = vadd.f32 %v516, %v519
    %v521 = vadd.f32 %v517, %v519
    %s522 = sld [smem:[#allocation3 + $0x8d]]
    %v523 = vstv %s522
    %v524 = vmul.f32 %v63, %v523
    %v525 = vmul.f32 %v64, %v523
    %v526 = vadd.f32 %v520, %v524
    %v527 = vadd.f32 %v521, %v525
    %s528 = sld [smem:[#allocation3 + $0x10d]]
    %v529 = vstv %s528
    %v530 = vmul.f32 %v65, %v529
    %v531 = vmul.f32 %v66, %v529
    %v532 = vadd.f32 %v526, %v530
    %v533 = vadd.f32 %v527, %v531
    %s534 = sld [smem:[#allocation3 + $0x18d]]
    %v535 = vstv %s534
    %v536 = vmul.f32 %v67, %v535
    %v537 = vmul.f32 %v68, %v535
    %v538 = vadd.f32 %v532, %v536
    %v539 = vadd.f32 %v533, %v537
    %v540 = vmax.f32 %v538, 0.0
    %v541 = vmax.f32 %v539, 0.0
    %s542 = sld [smem:[#allocation8 + $0xd]]
    %v543 = vstv %s542
    %v544 = vmul.f32 %v540, %v543
    %v545 = vmul.f32 %v541, %v543
    %v546 = vadd.f32 %v512, %v544
    %v547 = vadd.f32 %v513, %v545
    %s548 = sld [smem:[#allocation3 + $0xe]]
    %v549 = vstv %s548
    %v550 = vmul.f32 %v61, %v549
    %v551 = vmul.f32 %v62, %v549
    %s552 = sld [smem:[#allocation6 + $0xe]]
    %v553 = vstv %s552
    %v554 = vadd.f32 %v550, %v553
    %v555 = vadd.f32 %v551, %v553
    %s556 = sld [smem:[#allocation3 + $0x8e]]
    %v557 = vstv %s556
    %v558 = vmul.f32 %v63, %v557
    %v559 = vmul.f32 %v64, %v557
    %v560 = vadd.f32 %v554, %v558
    %v561 = vadd.f32 %v555, %v559
    %s562 = sld [smem:[#allocation3 + $0x10e]]
    %v563 = vstv %s562
    %v564 = vmul.f32 %v65, %v563
    %v565 = vmul.f32 %v66, %v563
    %v566 = vadd.f32 %v560, %v564
    %v567 = vadd.f32 %v561, %v565
    %s568 = sld [smem:[#allocation3 + $0x18e]]
    %v569 = vstv %s568
    %v570 = vmul.f32 %v67, %v569
    %v571 = vmul.f32 %v68, %v569
    %v572 = vadd.f32 %v566, %v570
    %v573 = vadd.f32 %v567, %v571
    %v574 = vmax.f32 %v572, 0.0
    %v575 = vmax.f32 %v573, 0.0
    %s576 = sld [smem:[#allocation8 + $0xe]]
    %v577 = vstv %s576
    %v578 = vmul.f32 %v574, %v577
    %v579 = vmul.f32 %v575, %v577
    %v580 = vadd.f32 %v546, %v578
    %v581 = vadd.f32 %v547, %v579
    %s582 = sld [smem:[#allocation3 + $0xf]]
    %v583 = vstv %s582
    %v584 = vmul.f32 %v61, %v583
    %v585 = vmul.f32 %v62, %v583
    %s586 = sld [smem:[#allocation6 + $0xf]]
    %v587 = vstv %s586
    %v588 = vadd.f32 %v584, %v587
    %v589 = vadd.f32 %v585, %v587
    %s590 = sld [smem:[#allocation3 + $0x8f]]
    %v591 = vstv %s590
    %v592 = vmul.f32 %v63, %v591
    %v593 = vmul.f32 %v64, %v591
    %v594 = vadd.f32 %v588, %v592
    %v595 = vadd.f32 %v589, %v593
    %s596 = sld [smem:[#allocation3 + $0x10f]]
    %v597 = vstv %s596
    %v598 = vmul.f32 %v65, %v597
    %v599 = vmul.f32 %v66, %v597
    %v600 = vadd.f32 %v594, %v598
    %v601 = vadd.f32 %v595, %v599
    %s602 = sld [smem:[#allocation3 + $0x18f]]
    %v603 = vstv %s602
    %v604 = vmul.f32 %v67, %v603
    %v605 = vmul.f32 %v68, %v603
    %v606 = vadd.f32 %v600, %v604
    %v607 = vadd.f32 %v601, %v605
    %v608 = vmax.f32 %v606, 0.0
    %v609 = vmax.f32 %v607, 0.0
    %s610 = sld [smem:[#allocation8 + $0xf]]
    %v611 = vstv %s610
    %v612 = vmul.f32 %v608, %v611
    %v613 = vmul.f32 %v609, %v611
    %v614 = vadd.f32 %v580, %v612
    %v615 = vadd.f32 %v581, %v613
    %s616 = sld [smem:[#allocation3 + $0x10]]
    %v617 = vstv %s616
    %v618 = vmul.f32 %v61, %v617
    %v619 = vmul.f32 %v62, %v617
    %s620 = sld [smem:[#allocation6 + $0x10]]
    %v621 = vstv %s620
    %v622 = vadd.f32 %v618, %v621
    %v623 = vadd.f32 %v619, %v621
    %s624 = sld [smem:[#allocation3 + $0x90]]
    %v625 = vstv %s624
    %v626 = vmul.f32 %v63, %v625
    %v627 = vmul.f32 %v64, %v625
    %v628 = vadd.f32 %v622, %v626
    %v629 = vadd.f32 %v623, %v627
    %s630 = sld [smem:[#allocation3 + $0x110]]
    %v631 = vstv %s630
    %v632 = vmul.f32 %v65, %v631
    %v633 = vmul.f32 %v66, %v631
    %v634 = vadd.f32 %v628, %v632
    %v635 = vadd.f32 %v629, %v633
    %s636 = sld [smem:[#allocation3 + $0x190]]
    %v637 = vstv %s636
    %v638 = vmul.f32 %v67, %v637
    %v639 = vmul.f32 %v68, %v637
    %v640 = vadd.f32 %v634, %v638
    %v641 = vadd.f32 %v635, %v639
    %v642 = vmax.f32 %v640, 0.0
    %v643 = vmax.f32 %v641, 0.0
    %s644 = sld [smem:[#allocation8 + $0x10]]
    %v645 = vstv %s644
    %v646 = vmul.f32 %v642, %v645
    %v647 = vmul.f32 %v643, %v645
    %v648 = vadd.f32 %v614, %v646
    %v649 = vadd.f32 %v615, %v647
    %s650 = sld [smem:[#allocation3 + $0x11]]
    %v651 = vstv %s650
    %v652 = vmul.f32 %v61, %v651
    %v653 = vmul.f32 %v62, %v651
    %s654 = sld [smem:[#allocation6 + $0x11]]
    %v655 = vstv %s654
    %v656 = vadd.f32 %v652, %v655
    %v657 = vadd.f32 %v653, %v655
    %s658 = sld [smem:[#allocation3 + $0x91]]
    %v659 = vstv %s658
    %v660 = vmul.f32 %v63, %v659
    %v661 = vmul.f32 %v64, %v659
    %v662 = vadd.f32 %v656, %v660
    %v663 = vadd.f32 %v657, %v661
    %s664 = sld [smem:[#allocation3 + $0x111]]
    %v665 = vstv %s664
    %v666 = vmul.f32 %v65, %v665
    %v667 = vmul.f32 %v66, %v665
    %v668 = vadd.f32 %v662, %v666
    %v669 = vadd.f32 %v663, %v667
    %s670 = sld [smem:[#allocation3 + $0x191]]
    %v671 = vstv %s670
    %v672 = vmul.f32 %v67, %v671
    %v673 = vmul.f32 %v68, %v671
    %v674 = vadd.f32 %v668, %v672
    %v675 = vadd.f32 %v669, %v673
    %v676 = vmax.f32 %v674, 0.0
    %v677 = vmax.f32 %v675, 0.0
    %s678 = sld [smem:[#allocation8 + $0x11]]
    %v679 = vstv %s678
    %v680 = vmul.f32 %v676, %v679
    %v681 = vmul.f32 %v677, %v679
    %v682 = vadd.f32 %v648, %v680
    %v683 = vadd.f32 %v649, %v681
    %s684 = sld [smem:[#allocation3 + $0x12]]
    %v685 = vstv %s684
    %v686 = vmul.f32 %v61, %v685
    %v687 = vmul.f32 %v62, %v685
    %s688 = sld [smem:[#allocation6 + $0x12]]
    %v689 = vstv %s688
    %v690 = vadd.f32 %v686, %v689
    %v691 = vadd.f32 %v687, %v689
    %s692 = sld [smem:[#allocation3 + $0x92]]
    %v693 = vstv %s692
    %v694 = vmul.f32 %v63, %v693
    %v695 = vmul.f32 %v64, %v693
    %v696 = vadd.f32 %v690, %v694
    %v697 = vadd.f32 %v691, %v695
    %s698 = sld [smem:[#allocation3 + $0x112]]
    %v699 = vstv %s698
    %v700 = vmul.f32 %v65, %v699
    %v701 = vmul.f32 %v66, %v699
    %v702 = vadd.f32 %v696, %v700
    %v703 = vadd.f32 %v697, %v701
    %s704 = sld [smem:[#allocation3 + $0x192]]
    %v705 = vstv %s704
    %v706 = vmul.f32 %v67, %v705
    %v707 = vmul.f32 %v68, %v705
    %v708 = vadd.f32 %v702, %v706
    %v709 = vadd.f32 %v703, %v707
    %v710 = vmax.f32 %v708, 0.0
    %v711 = vmax.f32 %v709, 0.0
    %s712 = sld [smem:[#allocation8 + $0x12]]
    %v713 = vstv %s712
    %v714 = vmul.f32 %v710, %v713
    %v715 = vmul.f32 %v711, %v713
    %v716 = vadd.f32 %v682, %v714
    %v717 = vadd.f32 %v683, %v715
    %s718 = sld [smem:[#allocation3 + $0x13]]
    %v719 = vstv %s718
    %v720 = vmul.f32 %v61, %v719
    %v721 = vmul.f32 %v62, %v719
    %s722 = sld [smem:[#allocation6 + $0x13]]
    %v723 = vstv %s722
    %v724 = vadd.f32 %v720, %v723
    %v725 = vadd.f32 %v721, %v723
    %s726 = sld [smem:[#allocation3 + $0x93]]
    %v727 = vstv %s726
    %v728 = vmul.f32 %v63, %v727
    %v729 = vmul.f32 %v64, %v727
    %v730 = vadd.f32 %v724, %v728
    %v731 = vadd.f32 %v725, %v729
    %s732 = sld [smem:[#allocation3 + $0x113]]
    %v733 = vstv %s732
    %v734 = vmul.f32 %v65, %v733
    %v735 = vmul.f32 %v66, %v733
    %v736 = vadd.f32 %v730, %v734
    %v737 = vadd.f32 %v731, %v735
    %s738 = sld [smem:[#allocation3 + $0x193]]
    %v739 = vstv %s738
    %v740 = vmul.f32 %v67, %v739
    %v741 = vmul.f32 %v68, %v739
    %v742 = vadd.f32 %v736, %v740
    %v743 = vadd.f32 %v737, %v741
    %v744 = vmax.f32 %v742, 0.0
    %v745 = vmax.f32 %v743, 0.0
    %s746 = sld [smem:[#allocation8 + $0x13]]
    %v747 = vstv %s746
    %v748 = vmul.f32 %v744, %v747
    %v749 = vmul.f32 %v745, %v747
    %v750 = vadd.f32 %v716, %v748
    %v751 = vadd.f32 %v717, %v749
    %s752 = sld [smem:[#allocation3 + $0x14]]
    %v753 = vstv %s752
    %v754 = vmul.f32 %v61, %v753
    %v755 = vmul.f32 %v62, %v753
    %s756 = sld [smem:[#allocation6 + $0x14]]
    %v757 = vstv %s756
    %v758 = vadd.f32 %v754, %v757
    %v759 = vadd.f32 %v755, %v757
    %s760 = sld [smem:[#allocation3 + $0x94]]
    %v761 = vstv %s760
    %v762 = vmul.f32 %v63, %v761
    %v763 = vmul.f32 %v64, %v761
    %v764 = vadd.f32 %v758, %v762
    %v765 = vadd.f32 %v759, %v763
    %s766 = sld [smem:[#allocation3 + $0x114]]
    %v767 = vstv %s766
    %v768 = vmul.f32 %v65, %v767
    %v769 = vmul.f32 %v66, %v767
    %v770 = vadd.f32 %v764, %v768
    %v771 = vadd.f32 %v765, %v769
    %s772 = sld [smem:[#allocation3 + $0x194]]
    %v773 = vstv %s772
    %v774 = vmul.f32 %v67, %v773
    %v775 = vmul.f32 %v68, %v773
    %v776 = vadd.f32 %v770, %v774
    %v777 = vadd.f32 %v771, %v775
    %v778 = vmax.f32 %v776, 0.0
    %v779 = vmax.f32 %v777, 0.0
    %s780 = sld [smem:[#allocation8 + $0x14]]
    %v781 = vstv %s780
    %v782 = vmul.f32 %v778, %v781
    %v783 = vmul.f32 %v779, %v781
    %v784 = vadd.f32 %v750, %v782
    %v785 = vadd.f32 %v751, %v783
    %s786 = sld [smem:[#allocation3 + $0x15]]
    %v787 = vstv %s786
    %v788 = vmul.f32 %v61, %v787
    %v789 = vmul.f32 %v62, %v787
    %s790 = sld [smem:[#allocation6 + $0x15]]
    %v791 = vstv %s790
    %v792 = vadd.f32 %v788, %v791
    %v793 = vadd.f32 %v789, %v791
    %s794 = sld [smem:[#allocation3 + $0x95]]
    %v795 = vstv %s794
    %v796 = vmul.f32 %v63, %v795
    %v797 = vmul.f32 %v64, %v795
    %v798 = vadd.f32 %v792, %v796
    %v799 = vadd.f32 %v793, %v797
    %s800 = sld [smem:[#allocation3 + $0x115]]
    %v801 = vstv %s800
    %v802 = vmul.f32 %v65, %v801
    %v803 = vmul.f32 %v66, %v801
    %v804 = vadd.f32 %v798, %v802
    %v805 = vadd.f32 %v799, %v803
    %s806 = sld [smem:[#allocation3 + $0x195]]
    %v807 = vstv %s806
    %v808 = vmul.f32 %v67, %v807
    %v809 = vmul.f32 %v68, %v807
    %v810 = vadd.f32 %v804, %v808
    %v811 = vadd.f32 %v805, %v809
    %v812 = vmax.f32 %v810, 0.0
    %v813 = vmax.f32 %v811, 0.0
    %s814 = sld [smem:[#allocation8 + $0x15]]
    %v815 = vstv %s814
    %v816 = vmul.f32 %v812, %v815
    %v817 = vmul.f32 %v813, %v815
    %v818 = vadd.f32 %v784, %v816
    %v819 = vadd.f32 %v785, %v817
    %s820 = sld [smem:[#allocation3 + $0x16]]
    %v821 = vstv %s820
    %v822 = vmul.f32 %v61, %v821
    %v823 = vmul.f32 %v62, %v821
    %s824 = sld [smem:[#allocation6 + $0x16]]
    %v825 = vstv %s824
    %v826 = vadd.f32 %v822, %v825
    %v827 = vadd.f32 %v823, %v825
    %s828 = sld [smem:[#allocation3 + $0x96]]
    %v829 = vstv %s828
    %v830 = vmul.f32 %v63, %v829
    %v831 = vmul.f32 %v64, %v829
    %v832 = vadd.f32 %v826, %v830
    %v833 = vadd.f32 %v827, %v831
    %s834 = sld [smem:[#allocation3 + $0x116]]
    %v835 = vstv %s834
    %v836 = vmul.f32 %v65, %v835
    %v837 = vmul.f32 %v66, %v835
    %v838 = vadd.f32 %v832, %v836
    %v839 = vadd.f32 %v833, %v837
    %s840 = sld [smem:[#allocation3 + $0x196]]
    %v841 = vstv %s840
    %v842 = vmul.f32 %v67, %v841
    %v843 = vmul.f32 %v68, %v841
    %v844 = vadd.f32 %v838, %v842
    %v845 = vadd.f32 %v839, %v843
    %v846 = vmax.f32 %v844, 0.0
    %v847 = vmax.f32 %v845, 0.0
    %s848 = sld [smem:[#allocation8 + $0x16]]
    %v849 = vstv %s848
    %v850 = vmul.f32 %v846, %v849
    %v851 = vmul.f32 %v847, %v849
    %v852 = vadd.f32 %v818, %v850
    %v853 = vadd.f32 %v819, %v851
    %s854 = sld [smem:[#allocation3 + $0x17]]
    %v855 = vstv %s854
    %v856 = vmul.f32 %v61, %v855
    %v857 = vmul.f32 %v62, %v855
    %s858 = sld [smem:[#allocation6 + $0x17]]
    %v859 = vstv %s858
    %v860 = vadd.f32 %v856, %v859
    %v861 = vadd.f32 %v857, %v859
    %s862 = sld [smem:[#allocation3 + $0x97]]
    %v863 = vstv %s862
    %v864 = vmul.f32 %v63, %v863
    %v865 = vmul.f32 %v64, %v863
    %v866 = vadd.f32 %v860, %v864
    %v867 = vadd.f32 %v861, %v865
    %s868 = sld [smem:[#allocation3 + $0x117]]
    %v869 = vstv %s868
    %v870 = vmul.f32 %v65, %v869
    %v871 = vmul.f32 %v66, %v869
    %v872 = vadd.f32 %v866, %v870
    %v873 = vadd.f32 %v867, %v871
    %s874 = sld [smem:[#allocation3 + $0x197]]
    %v875 = vstv %s874
    %v876 = vmul.f32 %v67, %v875
    %v877 = vmul.f32 %v68, %v875
    %v878 = vadd.f32 %v872, %v876
    %v879 = vadd.f32 %v873, %v877
    %v880 = vmax.f32 %v878, 0.0
    %v881 = vmax.f32 %v879, 0.0
    %s882 = sld [smem:[#allocation8 + $0x17]]
    %v883 = vstv %s882
    %v884 = vmul.f32 %v880, %v883
    %v885 = vmul.f32 %v881, %v883
    %v886 = vadd.f32 %v852, %v884
    %v887 = vadd.f32 %v853, %v885
    %s888 = sld [smem:[#allocation3 + $0x18]]
    %v889 = vstv %s888
    %v890 = vmul.f32 %v61, %v889
    %v891 = vmul.f32 %v62, %v889
    %s892 = sld [smem:[#allocation6 + $0x18]]
    %v893 = vstv %s892
    %v894 = vadd.f32 %v890, %v893
    %v895 = vadd.f32 %v891, %v893
    %s896 = sld [smem:[#allocation3 + $0x98]]
    %v897 = vstv %s896
    %v898 = vmul.f32 %v63, %v897
    %v899 = vmul.f32 %v64, %v897
    %v900 = vadd.f32 %v894, %v898
    %v901 = vadd.f32 %v895, %v899
    %s902 = sld [smem:[#allocation3 + $0x118]]
    %v903 = vstv %s902
    %v904 = vmul.f32 %v65, %v903
    %v905 = vmul.f32 %v66, %v903
    %v906 = vadd.f32 %v900, %v904
    %v907 = vadd.f32 %v901, %v905
    %s908 = sld [smem:[#allocation3 + $0x198]]
    %v909 = vstv %s908
    %v910 = vmul.f32 %v67, %v909
    %v911 = vmul.f32 %v68, %v909
    %v912 = vadd.f32 %v906, %v910
    %v913 = vadd.f32 %v907, %v911
    %v914 = vmax.f32 %v912, 0.0
    %v915 = vmax.f32 %v913, 0.0
    %s916 = sld [smem:[#allocation8 + $0x18]]
    %v917 = vstv %s916
    %v918 = vmul.f32 %v914, %v917
    %v919 = vmul.f32 %v915, %v917
    %v920 = vadd.f32 %v886, %v918
    %v921 = vadd.f32 %v887, %v919
    %s922 = sld [smem:[#allocation3 + $0x19]]
    %v923 = vstv %s922
    %v924 = vmul.f32 %v61, %v923
    %v925 = vmul.f32 %v62, %v923
    %s926 = sld [smem:[#allocation6 + $0x19]]
    %v927 = vstv %s926
    %v928 = vadd.f32 %v924, %v927
    %v929 = vadd.f32 %v925, %v927
    %s930 = sld [smem:[#allocation3 + $0x99]]
    %v931 = vstv %s930
    %v932 = vmul.f32 %v63, %v931
    %v933 = vmul.f32 %v64, %v931
    %v934 = vadd.f32 %v928, %v932
    %v935 = vadd.f32 %v929, %v933
    %s936 = sld [smem:[#allocation3 + $0x119]]
    %v937 = vstv %s936
    %v938 = vmul.f32 %v65, %v937
    %v939 = vmul.f32 %v66, %v937
    %v940 = vadd.f32 %v934, %v938
    %v941 = vadd.f32 %v935, %v939
    %s942 = sld [smem:[#allocation3 + $0x199]]
    %v943 = vstv %s942
    %v944 = vmul.f32 %v67, %v943
    %v945 = vmul.f32 %v68, %v943
    %v946 = vadd.f32 %v940, %v944
    %v947 = vadd.f32 %v941, %v945
    %v948 = vmax.f32 %v946, 0.0
    %v949 = vmax.f32 %v947, 0.0
    %s950 = sld [smem:[#allocation8 + $0x19]]
    %v951 = vstv %s950
    %v952 = vmul.f32 %v948, %v951
    %v953 = vmul.f32 %v949, %v951
    %v954 = vadd.f32 %v920, %v952
    %v955 = vadd.f32 %v921, %v953
    %s956 = sld [smem:[#allocation3 + $0x1a]]
    %v957 = vstv %s956
    %v958 = vmul.f32 %v61, %v957
    %v959 = vmul.f32 %v62, %v957
    %s960 = sld [smem:[#allocation6 + $0x1a]]
    %v961 = vstv %s960
    %v962 = vadd.f32 %v958, %v961
    %v963 = vadd.f32 %v959, %v961
    %s964 = sld [smem:[#allocation3 + $0x9a]]
    %v965 = vstv %s964
    %v966 = vmul.f32 %v63, %v965
    %v967 = vmul.f32 %v64, %v965
    %v968 = vadd.f32 %v962, %v966
    %v969 = vadd.f32 %v963, %v967
    %s970 = sld [smem:[#allocation3 + $0x11a]]
    %v971 = vstv %s970
    %v972 = vmul.f32 %v65, %v971
    %v973 = vmul.f32 %v66, %v971
    %v974 = vadd.f32 %v968, %v972
    %v975 = vadd.f32 %v969, %v973
    %s976 = sld [smem:[#allocation3 + $0x19a]]
    %v977 = vstv %s976
    %v978 = vmul.f32 %v67, %v977
    %v979 = vmul.f32 %v68, %v977
    %v980 = vadd.f32 %v974, %v978
    %v981 = vadd.f32 %v975, %v979
    %v982 = vmax.f32 %v980, 0.0
    %v983 = vmax.f32 %v981, 0.0
    %s984 = sld [smem:[#allocation8 + $0x1a]]
    %v985 = vstv %s984
    %v986 = vmul.f32 %v982, %v985
    %v987 = vmul.f32 %v983, %v985
    %v988 = vadd.f32 %v954, %v986
    %v989 = vadd.f32 %v955, %v987
    %s990 = sld [smem:[#allocation3 + $0x1b]]
    %v991 = vstv %s990
    %v992 = vmul.f32 %v61, %v991
    %v993 = vmul.f32 %v62, %v991
    %s994 = sld [smem:[#allocation6 + $0x1b]]
    %v995 = vstv %s994
    %v996 = vadd.f32 %v992, %v995
    %v997 = vadd.f32 %v993, %v995
    %s998 = sld [smem:[#allocation3 + $0x9b]]
    %v999 = vstv %s998
    %v1000 = vmul.f32 %v63, %v999
    %v1001 = vmul.f32 %v64, %v999
    %v1002 = vadd.f32 %v996, %v1000
    %v1003 = vadd.f32 %v997, %v1001
    %s1004 = sld [smem:[#allocation3 + $0x11b]]
    %v1005 = vstv %s1004
    %v1006 = vmul.f32 %v65, %v1005
    %v1007 = vmul.f32 %v66, %v1005
    %v1008 = vadd.f32 %v1002, %v1006
    %v1009 = vadd.f32 %v1003, %v1007
    %s1010 = sld [smem:[#allocation3 + $0x19b]]
    %v1011 = vstv %s1010
    %v1012 = vmul.f32 %v67, %v1011
    %v1013 = vmul.f32 %v68, %v1011
    %v1014 = vadd.f32 %v1008, %v1012
    %v1015 = vadd.f32 %v1009, %v1013
    %v1016 = vmax.f32 %v1014, 0.0
    %v1017 = vmax.f32 %v1015, 0.0
    %s1018 = sld [smem:[#allocation8 + $0x1b]]
    %v1019 = vstv %s1018
    %v1020 = vmul.f32 %v1016, %v1019
    %v1021 = vmul.f32 %v1017, %v1019
    %v1022 = vadd.f32 %v988, %v1020
    %v1023 = vadd.f32 %v989, %v1021
    %s1024 = sld [smem:[#allocation3 + $0x1c]]
    %v1025 = vstv %s1024
    %v1026 = vmul.f32 %v61, %v1025
    %v1027 = vmul.f32 %v62, %v1025
    %s1028 = sld [smem:[#allocation6 + $0x1c]]
    %v1029 = vstv %s1028
    %v1030 = vadd.f32 %v1026, %v1029
    %v1031 = vadd.f32 %v1027, %v1029
    %s1032 = sld [smem:[#allocation3 + $0x9c]]
    %v1033 = vstv %s1032
    %v1034 = vmul.f32 %v63, %v1033
    %v1035 = vmul.f32 %v64, %v1033
    %v1036 = vadd.f32 %v1030, %v1034
    %v1037 = vadd.f32 %v1031, %v1035
    %s1038 = sld [smem:[#allocation3 + $0x11c]]
    %v1039 = vstv %s1038
    %v1040 = vmul.f32 %v65, %v1039
    %v1041 = vmul.f32 %v66, %v1039
    %v1042 = vadd.f32 %v1036, %v1040
    %v1043 = vadd.f32 %v1037, %v1041
    %s1044 = sld [smem:[#allocation3 + $0x19c]]
    %v1045 = vstv %s1044
    %v1046 = vmul.f32 %v67, %v1045
    %v1047 = vmul.f32 %v68, %v1045
    %v1048 = vadd.f32 %v1042, %v1046
    %v1049 = vadd.f32 %v1043, %v1047
    %v1050 = vmax.f32 %v1048, 0.0
    %v1051 = vmax.f32 %v1049, 0.0
    %s1052 = sld [smem:[#allocation8 + $0x1c]]
    %v1053 = vstv %s1052
    %v1054 = vmul.f32 %v1050, %v1053
    %v1055 = vmul.f32 %v1051, %v1053
    %v1056 = vadd.f32 %v1022, %v1054
    %v1057 = vadd.f32 %v1023, %v1055
    %s1058 = sld [smem:[#allocation3 + $0x1d]]
    %v1059 = vstv %s1058
    %v1060 = vmul.f32 %v61, %v1059
    %v1061 = vmul.f32 %v62, %v1059
    %s1062 = sld [smem:[#allocation6 + $0x1d]]
    %v1063 = vstv %s1062
    %v1064 = vadd.f32 %v1060, %v1063
    %v1065 = vadd.f32 %v1061, %v1063
    %s1066 = sld [smem:[#allocation3 + $0x9d]]
    %v1067 = vstv %s1066
    %v1068 = vmul.f32 %v63, %v1067
    %v1069 = vmul.f32 %v64, %v1067
    %v1070 = vadd.f32 %v1064, %v1068
    %v1071 = vadd.f32 %v1065, %v1069
    %s1072 = sld [smem:[#allocation3 + $0x11d]]
    %v1073 = vstv %s1072
    %v1074 = vmul.f32 %v65, %v1073
    %v1075 = vmul.f32 %v66, %v1073
    %v1076 = vadd.f32 %v1070, %v1074
    %v1077 = vadd.f32 %v1071, %v1075
    %s1078 = sld [smem:[#allocation3 + $0x19d]]
    %v1079 = vstv %s1078
    %v1080 = vmul.f32 %v67, %v1079
    %v1081 = vmul.f32 %v68, %v1079
    %v1082 = vadd.f32 %v1076, %v1080
    %v1083 = vadd.f32 %v1077, %v1081
    %v1084 = vmax.f32 %v1082, 0.0
    %v1085 = vmax.f32 %v1083, 0.0
    %s1086 = sld [smem:[#allocation8 + $0x1d]]
    %v1087 = vstv %s1086
    %v1088 = vmul.f32 %v1084, %v1087
    %v1089 = vmul.f32 %v1085, %v1087
    %v1090 = vadd.f32 %v1056, %v1088
    %v1091 = vadd.f32 %v1057, %v1089
    %s1092 = sld [smem:[#allocation3 + $0x1e]]
    %v1093 = vstv %s1092
    %v1094 = vmul.f32 %v61, %v1093
    %v1095 = vmul.f32 %v62, %v1093
    %s1096 = sld [smem:[#allocation6 + $0x1e]]
    %v1097 = vstv %s1096
    %v1098 = vadd.f32 %v1094, %v1097
    %v1099 = vadd.f32 %v1095, %v1097
    %s1100 = sld [smem:[#allocation3 + $0x9e]]
    %v1101 = vstv %s1100
    %v1102 = vmul.f32 %v63, %v1101
    %v1103 = vmul.f32 %v64, %v1101
    %v1104 = vadd.f32 %v1098, %v1102
    %v1105 = vadd.f32 %v1099, %v1103
    %s1106 = sld [smem:[#allocation3 + $0x11e]]
    %v1107 = vstv %s1106
    %v1108 = vmul.f32 %v65, %v1107
    %v1109 = vmul.f32 %v66, %v1107
    %v1110 = vadd.f32 %v1104, %v1108
    %v1111 = vadd.f32 %v1105, %v1109
    %s1112 = sld [smem:[#allocation3 + $0x19e]]
    %v1113 = vstv %s1112
    %v1114 = vmul.f32 %v67, %v1113
    %v1115 = vmul.f32 %v68, %v1113
    %v1116 = vadd.f32 %v1110, %v1114
    %v1117 = vadd.f32 %v1111, %v1115
    %v1118 = vmax.f32 %v1116, 0.0
    %v1119 = vmax.f32 %v1117, 0.0
    %s1120 = sld [smem:[#allocation8 + $0x1e]]
    %v1121 = vstv %s1120
    %v1122 = vmul.f32 %v1118, %v1121
    %v1123 = vmul.f32 %v1119, %v1121
    %v1124 = vadd.f32 %v1090, %v1122
    %v1125 = vadd.f32 %v1091, %v1123
    %s1126 = sld [smem:[#allocation3 + $0x1f]]
    %v1127 = vstv %s1126
    %v1128 = vmul.f32 %v61, %v1127
    %v1129 = vmul.f32 %v62, %v1127
    %s1130 = sld [smem:[#allocation6 + $0x1f]]
    %v1131 = vstv %s1130
    %v1132 = vadd.f32 %v1128, %v1131
    %v1133 = vadd.f32 %v1129, %v1131
    %s1134 = sld [smem:[#allocation3 + $0x9f]]
    %v1135 = vstv %s1134
    %v1136 = vmul.f32 %v63, %v1135
    %v1137 = vmul.f32 %v64, %v1135
    %v1138 = vadd.f32 %v1132, %v1136
    %v1139 = vadd.f32 %v1133, %v1137
    %s1140 = sld [smem:[#allocation3 + $0x11f]]
    %v1141 = vstv %s1140
    %v1142 = vmul.f32 %v65, %v1141
    %v1143 = vmul.f32 %v66, %v1141
    %v1144 = vadd.f32 %v1138, %v1142
    %v1145 = vadd.f32 %v1139, %v1143
    %s1146 = sld [smem:[#allocation3 + $0x19f]]
    %v1147 = vstv %s1146
    %v1148 = vmul.f32 %v67, %v1147
    %v1149 = vmul.f32 %v68, %v1147
    %v1150 = vadd.f32 %v1144, %v1148
    %v1151 = vadd.f32 %v1145, %v1149
    %v1152 = vmax.f32 %v1150, 0.0
    %v1153 = vmax.f32 %v1151, 0.0
    %s1154 = sld [smem:[#allocation8 + $0x1f]]
    %v1155 = vstv %s1154
    %v1156 = vmul.f32 %v1152, %v1155
    %v1157 = vmul.f32 %v1153, %v1155
    %v1158 = vadd.f32 %v1124, %v1156
    %v1159 = vadd.f32 %v1125, %v1157
    %v1160 = vand.u32 2147483647, %v1158
    %v1161 = vand.u32 2147483647, %v1159
    %v1162 = vsub.f32 0.0, %v1160
    %v1163 = vsub.f32 0.0, %v1161
    %v1164 = vmul.f32 %v1162, 1.442695
    %v1165 = vpow.pop %v1164
    %v1166 = vmul.f32 %v1163, 1.442695
    %v1167 = vpow.pop %v1166
    %v1168 = vadd.f32 %v1165, 1.0
    %v1169 = vlog2.pop %v1168
    %v1170 = vmul.f32 %v1169, 0.6931472
    %v1171 = vmul.f32 -0.5, %v1165
    %v1172 = vadd.f32 %v1171, 1.0
    %v1173 = vmul.f32 %v1172, %v1165
    %v1174 = vand.u32 2147483647, %v1165
    %vm1175 = vcmp.lt.f32.partialorder %v1174, 0.0004427343
    %v1176 = vsel %vm1175, %v1173, %v1170
    %v1177 = vadd.f32 %v1167, 1.0
    %v1178 = vlog2.pop %v1177
    %v1179 = vmul.f32 %v1178, 0.6931472
    %v1180 = vmul.f32 -0.5, %v1167
    %v1181 = vadd.f32 %v1180, 1.0
    %v1182 = vmul.f32 %v1181, %v1167
    %v1183 = vand.u32 2147483647, %v1167
    %vm1184 = vcmp.lt.f32.partialorder %v1183, 0.0004427343
    %v1185 = vsel %vm1184, %v1182, %v1179
    %v1186 = vmax.f32 %v1158, 0.0
    %v1187 = vmax.f32 %v1159, 0.0
    %v1188 = vadd.f32 %v1176, %v1186
    %v1189 = vadd.f32 %v1185, %v1187
    %v1190 = vld [vmem:[%s5] sm:$0xff]
    %vm1191 = vcmask 64512
    %v1193 = vsel %vm1191, %v1188, 0
    %v1196 = vsel %vm1191, %v1189, 0
    %1198 = vmatprep.subr.mxu0 0.0
    %1199 = vmatpush1.msra.mxu0 %v1190
    %1200 = vmatprep.subr.mxu0 0.0
    %1201 = vmatpush1.msra.mxu0 0.0
    %1202 = vmatprep.subr.mxu0 0.0
    %1203 = vmatpush1.msra.mxu0 0.0
    %1204 = vmatprep.subr.mxu0 0.0
    %1205 = vmatpush1.msra.mxu0 0.0
    %1206 = vmatprep.subr.mxu0 0.0
    %1207 = vmatpush1.msra.mxu0 0.0
    %1208 = vmatprep.subr.mxu0 0.0
    %1209 = vmatpush1.msra.mxu0 0.0
    %1210 = vmatprep.subr.mxu0 0.0
    %1211 = vmatpush1.msra.mxu0 0.0
    %1212 = vmatprep.subr.mxu0 0.0
    %1213 = vmatpush1.msra.mxu0 0.0
    %1214 = vmatprep.subr.mxu0 0.0
    %1215 = vmatpush1.msra.mxu0 0.0
    %1216 = vmatprep.subr.mxu0 0.0
    %1217 = vmatpush1.msra.mxu0 0.0
    %1218 = vmatprep.subr.mxu0 0.0
    %1219 = vmatpush1.msra.mxu0 0.0
    %1220 = vmatprep.subr.mxu0 0.0
    %1221 = vmatpush1.msra.mxu0 0.0
    %1222 = vmatprep.subr.mxu0 0.0
    %1223 = vmatpush1.msra.mxu0 0.0
    %1224 = vmatprep.subr.mxu0 0.0
    %1225 = vmatpush1.msra.mxu0 0.0
    %1226 = vmatprep.subr.mxu0 0.0
    %1227 = vmatpush1.msra.mxu0 0.0
    %1228 = vmatprep.subr.mxu0 0.0
    %1229 = vmatpush1.msra.mxu0 0.0
    %1230 = vmatprep.subr.mxu0 0.0
    %1231 = vmatpush1.msra.mxu0 0.0
    %1232 = vmatprep.subr.mxu0 0.0
    %1233 = vmatpush1.msra.mxu0 0.0
    %1234 = vmatprep.subr.mxu0 0.0
    %1235 = vmatpush1.msra.mxu0 0.0
    %1236 = vmatprep.subr.mxu0 0.0
    %1237 = vmatpush1.msra.mxu0 0.0
    %1238 = vmatprep.subr.mxu0 0.0
    %1239 = vmatpush1.msra.mxu0 0.0
    %1240 = vmatprep.subr.mxu0 0.0
    %1241 = vmatpush1.msra.mxu0 0.0
    %1242 = vmatprep.subr.mxu0 0.0
    %1243 = vmatpush1.msra.mxu0 0.0
    %1244 = vmatprep.subr.mxu0 0.0
    %1245 = vmatpush1.msra.mxu0 0.0
    %1246 = vmatprep.subr.mxu0 0.0
    %1247 = vmatpush1.msra.mxu0 0.0
    %1248 = vmatprep.subr.mxu0 0.0
    %1249 = vmatpush1.msra.mxu0 0.0
    %1250 = vmatprep.subr.mxu0 0.0
    %1251 = vmatpush1.msra.mxu0 0.0
    %1252 = vmatprep.subr.mxu0 0.0
    %1253 = vmatpush1.msra.mxu0 0.0
    %1254 = vmatprep.subr.mxu0 0.0
    %1255 = vmatpush1.msra.mxu0 0.0
    %1256 = vmatprep.subr.mxu0 0.0
    %1257 = vmatpush1.msra.mxu0 0.0
    %1258 = vmatprep.subr.mxu0 0.0
    %1259 = vmatpush1.msra.mxu0 0.0
    %1260 = vmatprep.subr.mxu0 0.0
    %1261 = vmatpush1.msra.mxu0 0.0
    %1262 = vmatprep.mubr.f32.mxu0 0.0
    %1263 = vmatmul.mubr.f32.gmra.mrb[0].mxu0 %v1193
    %v1264 = vpop.f32.mrb[0].mxu0
    %v1265 = vadd.f32 0.0, %v1264
    %v1266 = vpop.f32.mrb[0].mxu0
    %1267 = vmatprep.mubr.f32.mxu0 0.0
    %1268 = vmatmul.mubr.f32.gmra.mrb[0].mxu0 %v1196
    %v1269 = vpop.f32.mrb[0].mxu0
    %v1270 = vadd.f32 0.0, %v1269
    %v1271 = vpop.f32.mrb[0].mxu0
    %1272 = vdwg.mxu0
    %vm1273 = vcmask 130048
    %1274 = vst.msk [vmem:[#allocation9] sm:$0xff] %vm1273, %v1265
    %1275 = vst.msk [vmem:[#allocation9 + $0x8] sm:$0xff] %vm1273, %v1270
    // Predicated region
    $region38: #{tpu_custom_call.1} parent=1 // pred_check
      _
    $region39: #{tpu_custom_call.1} parent=1 // pred_check_branch
      %1277 = sbr.rel (0) target = $region41
    $region40: #{tpu_custom_call.1} parent=1 // pred_region
      %s1279 = ssub.s32 256, 256
      %1280 = vsyncadd [#allocation4], %s1279
      %s1281 = sshll.u32 [#allocation9], 4
      %s1282 = int_to_ptr.vmem [resolvable:$true] %s1281
      %1287 = dma.vmem_to_hbm [thread:$0]  %s1282, 256, %s6, [#allocation4], 128, 128, 8
    $region41: #{tpu_custom_call.1} parent=1 // pred_fallthru
      _
    // Predicated region
    $region42: #{tpu_custom_call.1} parent=1 // pred_check
      _
    $region43: #{tpu_custom_call.1} parent=1 // pred_check_branch
      %1289 = sbr.rel (0) target = $region45
    $region44: #{tpu_custom_call.1} parent=1 // pred_region
      %1290 = dma.done [#allocation4], 256
    $region45: #{tpu_custom_call.1} parent=1 // pred_fallthru
      _
    %1291 = vsyncpa [#allocation4], 1
    %1292 = vsyncpa [#allocation5], 1
    %1293 = vsyncpa [#allocation7], 1

</llo_original>
